<compile_context>
chip_gen: v7x
topology: tpu7x:2x2x1
jax: 0.10.0
libtpu: 0.0.40
codegen_flags: <defaults>
</compile_context>

<pallas_src>
import math
import functools

import jax
import jax.numpy as jnp
from jax.experimental import pallas as pl
from jax.experimental.pallas import tpu as pltpu


def _gca_kernel(num_heads, head_dim,
                local_ref, global_ref, maskb_ref,       # (1,Tq,E) f32, (1,S,E) bf16, (1,1,S) f32
                wq_ref, wkv_ref, wo_ref, vecs_ref,       # (E,E) (E,2E) (E,E) bf16; (6,E) f32
                out_ref, attn_ref,                       # (1,Tq,E) f32, (1,H,Tq,S) bf16
                kh_ref, vh_ref):                         # scratch: (H,S,hd) bf16 each
    H, hd = num_heads, head_dim
    E = H * hd
    tq = local_ref.shape[1]
    S = global_ref.shape[1]

    vecs = vecs_ref[...]                     # (6, E) f32
    bq    = vecs[0:1, :]                     # softmax scale already folded in
    bk    = vecs[1:2, :]
    bv    = vecs[2:3, :]
    bo    = vecs[3:4, :]
    gamma = vecs[4:5, :]
    beta  = vecs[5:6, :]

    # --- K/V projection: computed once per batch (first q tile), cached in VMEM ---
    @pl.when(pl.program_id(1) == 0)
    def _():
        x_g = global_ref[0]                                                # (S, E) bf16
        KV = jnp.dot(x_g, wkv_ref[...], preferred_element_type=jnp.float32)  # (S, 2E)
        K = KV[:, :E] + bk
        V = KV[:, E:] + bv
        kh_ref[...] = jnp.swapaxes(K.reshape(S, H, hd), 0, 1).astype(jnp.bfloat16)
        vh_ref[...] = jnp.swapaxes(V.reshape(S, H, hd), 0, 1).astype(jnp.bfloat16)

    # --- Q projection for this query tile ---
    x_l = local_ref[0]                                                     # (Tq, E) f32
    Q = jnp.dot(x_l.astype(jnp.bfloat16), wq_ref[...],
                preferred_element_type=jnp.float32) + bq                   # (Tq, E), pre-scaled
    Qh = jnp.swapaxes(Q.reshape(tq, H, hd), 0, 1).astype(jnp.bfloat16)     # (H, Tq, hd)

    # --- Head-batched attention ---
    scores = jnp.einsum('hqd,hkd->hqk', Qh, kh_ref[...],
                        preferred_element_type=jnp.float32)                # (H, Tq, S) f32
    scores = scores + maskb_ref[0]                                         # additive 0 / -1e9 bias

    m = jnp.max(scores, axis=-1, keepdims=True)
    e = jnp.exp(scores - m)
    denom = jnp.sum(e, axis=-1, keepdims=True)
    attn_bf = (e * pl.reciprocal(denom, approx=True)).astype(jnp.bfloat16)  # single bf16 attn
    # TODO(synk): dropout on attn weights / projected output omitted (eval-mode semantics, p -> 0)
    attn_ref[0] = attn_bf

    ctx = jnp.einsum('hqk,hkd->qhd', attn_bf, vh_ref[...],
                     preferred_element_type=jnp.float32)                   # (Tq, H, hd)
    context = ctx.reshape(tq, E)

    proj = jnp.dot(context.astype(jnp.bfloat16), wo_ref[...],
                   preferred_element_type=jnp.float32) + bo                # (Tq, E)

    # --- Residual + LayerNorm (f32, eps=1e-5, biased variance like PyTorch) ---
    y = x_l + proj
    mean = jnp.mean(y, axis=-1, keepdims=True)
    var = jnp.mean((y - mean) ** 2, axis=-1, keepdims=True)
    normed = (y - mean) * jax.lax.rsqrt(var + jnp.float32(1e-5))
    out_ref[0] = (normed * gamma + beta).astype(out_ref.dtype)


def global_context_attention(global_repr, local_repr, params, mask=None,
                             num_heads=8, q_block=None):
    B, S, E = global_repr.shape
    H = num_heads
    head_dim = E // num_heads
    assert head_dim * num_heads == E

    # ----- generation-aware VMEM budget (v5e/v6e: 128 MiB -> ~96 MiB; v7x: 64 MiB -> 48 MiB)
    try:
        vmem_cap = int(pltpu.get_tpu_info().vmem_capacity_bytes)
    except Exception:
        vmem_cap = 64 * 1024 * 1024
    vmem_limit = min((vmem_cap * 3) // 4, 112 * 1024 * 1024)
    vmem_limit = max(vmem_limit, 32 * 1024 * 1024)

    def step_vmem_bytes(tq):
        io = 2 * tq * E * 4 * 2                    # local in + out (f32, double-buffered)
        attn_o = 2 * H * tq * S * 2                # attn out (bf16, double-buffered)
        glob = 2 * S * E * 2                       # global_repr (bf16, double-buffered)
        kv = 2 * H * S * head_dim * 2              # K/V scratch (bf16, single)
        w = 8 * E * E + 6 * E * 4                  # single-buffered bf16 weights + f32 vecs
        tmp = 3 * H * tq * S * 4 + 6 * tq * E * 4  # live softmax / projection intermediates
        return io + attn_o + glob + kv + w + tmp

    # ----- VMEM-aware query-tile size
    if q_block is None:
        for cand in (512, 256, 128):
            if S % cand == 0 and S > cand and step_vmem_bytes(cand) <= int(vmem_limit * 0.9):
                q_block = cand
                break
        if q_block is None:
            divs = [c for c in (128, 256, 512) if S % c == 0 and S > c]
            q_block = divs[0] if divs else S
    assert S % q_block == 0 and (q_block == S or q_block % 8 == 0)
    n_q = S // q_block

    # ----- additive mask bias (exact masked_fill(-1e9) semantics for binary masks)
    if mask is None:
        mask_bias = jnp.zeros((B, 1, S), jnp.float32)
    else:
        mask_f = mask.astype(jnp.float32).reshape(B, 1, S)
        mask_bias = jnp.where(mask_f == 0.0, jnp.float32(-1.0e9), jnp.float32(0.0))

    # ----- weights: fold softmax scale into Q projection, fuse K|V, cast to bf16
    scale = 1.0 / (jnp.sqrt(jnp.float32(head_dim)) * params["temperature"].astype(jnp.float32)[0])
    wq = (params["wq"].T * scale).astype(jnp.bfloat16)                                    # (E, E)
    wkv = jnp.concatenate([params["wk"].T, params["wv"].T], axis=1).astype(jnp.bfloat16)  # (E, 2E)
    wo = params["wo"].T.astype(jnp.bfloat16)                                              # (E, E)
    vecs = jnp.stack([params["bq"].astype(jnp.float32) * scale,
                      params["bk"].astype(jnp.float32),
                      params["bv"].astype(jnp.float32),
                      params["bo"].astype(jnp.float32),
                      params["gamma"].astype(jnp.float32),
                      params["beta"].astype(jnp.float32)], axis=0)                        # (6, E)

    kernel = functools.partial(_gca_kernel, num_heads, head_dim)

    const2 = lambda b, q: (0, 0)

    def const_spec(shape):
        # Constant-index inputs: single pipeline buffer (second buffer is dead VMEM).
        try:
            return pl.BlockSpec(shape, const2, pipeline_mode=pl.Buffered(1))
        except Exception:
            return pl.BlockSpec(shape, const2)

    in_specs = [
        pl.BlockSpec((1, q_block, E), lambda b, q: (b, q, 0)),   # local_repr (query side, f32)
        pl.BlockSpec((1, S, E), lambda b, q: (b, 0, 0)),         # global_repr (key/value side, bf16)
        pl.BlockSpec((1, 1, S), lambda b, q: (b, 0, 0)),         # mask bias (f32)
        const_spec((E, E)),                                      # wq (scale folded, bf16)
        const_spec((E, 2 * E)),                                  # wk|wv fused (bf16)
        const_spec((E, E)),                                      # wo (bf16)
        const_spec((6, E)),                                      # bq,bk,bv,bo,gamma,beta (f32)
    ]
    out_specs = (
        pl.BlockSpec((1, q_block, E), lambda b, q: (b, q, 0)),
        pl.BlockSpec((1, num_heads, q_block, S), lambda b, q: (b, 0, q, 0)),
    )
    out_shapes = (
        jax.ShapeDtypeStruct((B, S, E), jnp.float32),
        jax.ShapeDtypeStruct((B, num_heads, S, S), jnp.bfloat16),   # attn weights in bf16
    )

    cost = pl.CostEstimate(
        flops=int(8 * B * S * E * E + 4 * B * S * S * E),
        transcendentals=int(B * H * S * S),
        bytes_accessed=int(B * S * E * 4 + B * S * E * 2 + 8 * E * E + 6 * E * 4
                           + B * S * E * 4 + B * H * S * S * 2),
    )

    return pl.pallas_call(
        kernel,
        out_shape=out_shapes,
        grid=(B, n_q),
        in_specs=in_specs,
        out_specs=out_specs,
        scratch_shapes=[pltpu.VMEM((H, S, head_dim), jnp.bfloat16),   # cached K heads
                        pltpu.VMEM((H, S, head_dim), jnp.bfloat16)],  # cached V heads
        compiler_params=pltpu.CompilerParams(
            # q axis carries the K/V-scratch state -> "arbitrary"; batch carries
            # the cross-core (megacore / v7x dual-TC) parallelism.
            dimension_semantics=("parallel", "arbitrary"),
            vmem_limit_bytes=int(vmem_limit)),
        cost_estimate=cost,
    )(local_repr.astype(jnp.float32), global_repr.astype(jnp.bfloat16),
      mask_bias, wq, wkv, wo, vecs)


def _reference(global_repr, local_repr, params, mask, num_heads):
    """Pure-JAX f32 reference mirroring the PyTorch forward (eval mode)."""
    B, S, E = global_repr.shape
    hd = E // num_heads
    lin = lambda x, w, b: x @ w.T + b
    Q = lin(local_repr, params["wq"], params["bq"]).reshape(B, S, num_heads, hd).transpose(0, 2, 1, 3)
    K = lin(global_repr, params["wk"], params["bk"]).reshape(B, S, num_heads, hd).transpose(0, 2, 1, 3)
    V = lin(global_repr, params["wv"], params["bv"]).reshape(B, S, num_heads, hd).transpose(0, 2, 1, 3)
    scores = jnp.einsum('bhqd,bhkd->bhqk', Q, K) / (math.sqrt(hd) * params["temperature"][0])
    scores = jnp.where(mask[:, None, None, :] == 0, -1.0e9, scores)
    attn = jax.nn.softmax(scores, axis=-1)
    ctx = jnp.einsum('bhqk,bhkd->bhqd', attn, V).transpose(0, 2, 1, 3).reshape(B, S, E)
    out = lin(ctx, params["wo"], params["bo"])
    y = local_repr + out
    mean = y.mean(-1, keepdims=True)
    var = ((y - mean) ** 2).mean(-1, keepdims=True)
    out = (y - mean) / jnp.sqrt(var + 1e-5) * params["gamma"] + params["beta"]
    return out, attn


if __name__ == "__main__":
    B, S, E, H = 2, 8, 32, 8  # batch, seq_len, embedding_dim, num_heads
    # NOTE: demo shapes are tiny (single partially-masked vreg); benchmark only at
    # lane-dense production shapes (E, S multiples of 128).

    key = jax.random.PRNGKey(0)
    keys = jax.random.split(key, 12)

    def w_init(k):
        return jax.random.normal(k, (E, E), jnp.float32) * 0.02  # PyTorch (out, in) layout

    params = {
        "wq": w_init(keys[0]), "bq": jax.random.normal(keys[1], (E,), jnp.float32) * 0.01,
        "wk": w_init(keys[2]), "bk": jax.random.normal(keys[3], (E,), jnp.float32) * 0.01,
        "wv": w_init(keys[4]), "bv": jax.random.normal(keys[5], (E,), jnp.float32) * 0.01,
        "wo": w_init(keys[6]), "bo": jax.random.normal(keys[7], (E,), jnp.float32) * 0.01,
        "gamma": jnp.ones((E,), jnp.float32),
        "beta": jnp.zeros((E,), jnp.float32),
        "temperature": jnp.ones((1,), jnp.float32) * 0.1,
    }

    global_repr = jax.random.normal(keys[8], (B, S, E), jnp.float32)
    local_repr = jax.random.normal(keys[9], (B, S, E), jnp.float32)
    # deterministic 0/1 mask (last position of batch 1 masked out)
    mask = jnp.ones((B, S), jnp.float32).at[1, -1].set(0.0)

    out, attn = global_context_attention(global_repr, local_repr, params, mask=mask, num_heads=H)
    out = jax.block_until_ready(out)
    attn = jax.block_until_ready(attn)

    ref_out, ref_attn = _reference(global_repr, local_repr, params, mask, H)
    assert out.shape == (B, S, E) and attn.shape == (B, H, S, S)
    # bf16 MXU operands / bf16 attn storage / approx reciprocal -> loosened tolerances.
    assert jnp.allclose(out, ref_out, atol=3e-2, rtol=3e-2)
    assert jnp.allclose(attn.astype(jnp.float32), ref_attn, atol=2e-2, rtol=2e-2)

    print("KERNEL_OK")
</pallas_src>

<mosaic_0001>
module attributes {stable_mosaic.version = 11 : i64} {
  func.func @_gca_kernel(%arg0: i32, %arg1: i32, %arg2: memref<1x8x32xf32, #tpu.memory_space<vmem>>, %arg3: memref<1x8x32xbf16, #tpu.memory_space<vmem>>, %arg4: memref<1x1x8xf32, #tpu.memory_space<vmem>>, %arg5: memref<32x32xbf16, #tpu.memory_space<vmem>>, %arg6: memref<32x64xbf16, #tpu.memory_space<vmem>>, %arg7: memref<32x32xbf16, #tpu.memory_space<vmem>>, %arg8: memref<6x32xf32, #tpu.memory_space<vmem>>, %arg9: memref<1x8x32xf32, #tpu.memory_space<vmem>>, %arg10: memref<1x8x8x8xbf16, #tpu.memory_space<vmem>>, %arg11: memref<8x8x4xbf16, #tpu.memory_space<vmem>>, %arg12: memref<8x8x4xbf16, #tpu.memory_space<vmem>>) attributes {dimension_semantics = [#tpu.dimension_semantics<parallel>, #tpu.dimension_semantics<arbitrary>], iteration_bounds = array<i64: 2, 1>, scalar_prefetch = 0 : i64, scratch_operands = 2 : i64, tpu.core_type = #tpu.core_type<tc>, window_params = [{transform_indices = @transform_0, window_bounds = array<i64: 1, 8, 32>}, {transform_indices = @transform_1, window_bounds = array<i64: 1, 8, 32>}, {transform_indices = @transform_2, window_bounds = array<i64: 1, 1, 8>}, {pipeline_mode = #tpu.pipeline_mode<synchronous>, transform_indices = @transform_3, window_bounds = array<i64: 32, 32>}, {pipeline_mode = #tpu.pipeline_mode<synchronous>, transform_indices = @transform_4, window_bounds = array<i64: 32, 64>}, {pipeline_mode = #tpu.pipeline_mode<synchronous>, transform_indices = @transform_5, window_bounds = array<i64: 32, 32>}, {pipeline_mode = #tpu.pipeline_mode<synchronous>, transform_indices = @transform_6, window_bounds = array<i64: 6, 32>}, {transform_indices = @transform_7, window_bounds = array<i64: 1, 8, 32>}, {transform_indices = @transform_8, window_bounds = array<i64: 1, 8, 8, 8>}]} {
    %c0 = arith.constant 0 : index
    %c0_0 = arith.constant 0 : index
    %0 = vector.load %arg8[%c0, %c0_0] : memref<6x32xf32, #tpu.memory_space<vmem>>, vector<6x32xf32>
    %1 = vector.extract_strided_slice %0 {offsets = [0, 0], sizes = [1, 32], strides = [1, 1]} : vector<6x32xf32> to vector<1x32xf32>
    %2 = vector.extract_strided_slice %0 {offsets = [1, 0], sizes = [1, 32], strides = [1, 1]} : vector<6x32xf32> to vector<1x32xf32>
    %3 = vector.extract_strided_slice %0 {offsets = [2, 0], sizes = [1, 32], strides = [1, 1]} : vector<6x32xf32> to vector<1x32xf32>
    %4 = vector.extract_strided_slice %0 {offsets = [3, 0], sizes = [1, 32], strides = [1, 1]} : vector<6x32xf32> to vector<1x32xf32>
    %5 = vector.extract_strided_slice %0 {offsets = [4, 0], sizes = [1, 32], strides = [1, 1]} : vector<6x32xf32> to vector<1x32xf32>
    %6 = vector.extract_strided_slice %0 {offsets = [5, 0], sizes = [1, 32], strides = [1, 1]} : vector<6x32xf32> to vector<1x32xf32>
    %c0_i32 = arith.constant 0 : i32
    %7 = arith.cmpi eq, %arg1, %c0_i32 : i32
    %8 = arith.extui %7 : i1 to i32
    %c0_i32_1 = arith.constant 0 : i32
    %9 = arith.cmpi ne, %8, %c0_i32_1 : i32
    scf.if %9 {
      %c0_35 = arith.constant 0 : index
      %c0_36 = arith.constant 0 : index
      %c0_37 = arith.constant 0 : index
      %76 = vector.load %arg3[%c0_35, %c0_36, %c0_37] : memref<1x8x32xbf16, #tpu.memory_space<vmem>>, vector<1x8x32xbf16>
      %77 = vector.shape_cast %76 : vector<1x8x32xbf16> to vector<8x32xbf16>
      %c0_38 = arith.constant 0 : index
      %c0_39 = arith.constant 0 : index
      %78 = vector.load %arg6[%c0_38, %c0_39] : memref<32x64xbf16, #tpu.memory_space<vmem>>, vector<32x64xbf16>
      %cst_40 = arith.constant dense<0.000000e+00> : vector<8x64xf32>
      %79 = tpu.matmul %77, %78, %cst_40 {dimension_numbers = #tpu.dot_dimension_numbers<[1], [0], [0], [1], [0, 0, 1, 1], [], []>} : vector<8x32xbf16>, vector<32x64xbf16>, vector<8x64xf32> -> vector<8x64xf32>
      %80 = vector.extract_strided_slice %79 {offsets = [0, 0], sizes = [8, 32], strides = [1, 1]} : vector<8x64xf32> to vector<8x32xf32>
      %81 = vector.broadcast %2 : vector<1x32xf32> to vector<8x32xf32>
      %82 = arith.addf %80, %81 : vector<8x32xf32>
      %83 = vector.extract_strided_slice %79 {offsets = [0, 32], sizes = [8, 32], strides = [1, 1]} : vector<8x64xf32> to vector<8x32xf32>
      %84 = vector.broadcast %3 : vector<1x32xf32> to vector<8x32xf32>
      %85 = arith.addf %83, %84 : vector<8x32xf32>
      %86 = vector.shape_cast %82 : vector<8x32xf32> to vector<8x8x4xf32>
      %87 = tpu.transpose %86, [1, 0, 2] : vector<8x8x4xf32> -> vector<8x8x4xf32>
      %88 = arith.truncf %87 : vector<8x8x4xf32> to vector<8x8x4xbf16>
      %c0_41 = arith.constant 0 : index
      %c0_42 = arith.constant 0 : index
      %c0_43 = arith.constant 0 : index
      %89 = vector.load %arg11[%c0_41, %c0_42, %c0_43] : memref<8x8x4xbf16, #tpu.memory_space<vmem>>, vector<8x8x4xbf16>
      tpu.vector_store %arg11[%c0_41, %c0_42, %c0_43], %88 {strides = array<i32>} : memref<8x8x4xbf16, #tpu.memory_space<vmem>>, vector<8x8x4xbf16>,
      %90 = vector.shape_cast %85 : vector<8x32xf32> to vector<8x8x4xf32>
      %91 = tpu.transpose %90, [1, 0, 2] : vector<8x8x4xf32> -> vector<8x8x4xf32>
      %92 = arith.truncf %91 : vector<8x8x4xf32> to vector<8x8x4xbf16>
      %c0_44 = arith.constant 0 : index
      %c0_45 = arith.constant 0 : index
      %c0_46 = arith.constant 0 : index
      %93 = vector.load %arg12[%c0_44, %c0_45, %c0_46] : memref<8x8x4xbf16, #tpu.memory_space<vmem>>, vector<8x8x4xbf16>
      tpu.vector_store %arg12[%c0_44, %c0_45, %c0_46], %92 {strides = array<i32>} : memref<8x8x4xbf16, #tpu.memory_space<vmem>>, vector<8x8x4xbf16>,
    } else {
    }
    %c0_2 = arith.constant 0 : index
    %c0_3 = arith.constant 0 : index
    %c0_4 = arith.constant 0 : index
    %10 = vector.load %arg2[%c0_2, %c0_3, %c0_4] : memref<1x8x32xf32, #tpu.memory_space<vmem>>, vector<1x8x32xf32>
    %11 = vector.shape_cast %10 : vector<1x8x32xf32> to vector<8x32xf32>
    %12 = arith.truncf %11 : vector<8x32xf32> to vector<8x32xbf16>
    %c0_5 = arith.constant 0 : index
    %c0_6 = arith.constant 0 : index
    %13 = vector.load %arg5[%c0_5, %c0_6] : memref<32x32xbf16, #tpu.memory_space<vmem>>, vector<32x32xbf16>
    %cst = arith.constant dense<0.000000e+00> : vector<8x32xf32>
    %14 = tpu.matmul %12, %13, %cst {dimension_numbers = #tpu.dot_dimension_numbers<[1], [0], [0], [1], [0, 0, 1, 1], [], []>} : vector<8x32xbf16>, vector<32x32xbf16>, vector<8x32xf32> -> vector<8x32xf32>
    %15 = vector.broadcast %1 : vector<1x32xf32> to vector<8x32xf32>
    %16 = arith.addf %14, %15 : vector<8x32xf32>
    %17 = vector.shape_cast %16 : vector<8x32xf32> to vector<8x8x4xf32>
    %18 = tpu.transpose %17, [1, 0, 2] : vector<8x8x4xf32> -> vector<8x8x4xf32>
    %19 = arith.truncf %18 : vector<8x8x4xf32> to vector<8x8x4xbf16>
    %c0_7 = arith.constant 0 : index
    %c0_8 = arith.constant 0 : index
    %c0_9 = arith.constant 0 : index
    %20 = vector.load %arg11[%c0_7, %c0_8, %c0_9] : memref<8x8x4xbf16, #tpu.memory_space<vmem>>, vector<8x8x4xbf16>
    "tpu.trace_start"() <{level = 10 : i32, message = "hqd,hkd->hqk"}> : () -> ()
    %cst_10 = arith.constant dense<0.000000e+00> : vector<8x8x8xf32>
    %21 = tpu.matmul %19, %20, %cst_10 {dimension_numbers = #tpu.dot_dimension_numbers<[2], [2], [1], [1], [0, 0, 0, 1, 1, 1], [0], [0]>} : vector<8x8x4xbf16>, vector<8x8x4xbf16>, vector<8x8x8xf32> -> vector<8x8x8xf32>
    "tpu.trace_stop"() : () -> ()
    %c0_11 = arith.constant 0 : index
    %c0_12 = arith.constant 0 : index
    %c0_13 = arith.constant 0 : index
    %22 = vector.load %arg4[%c0_11, %c0_12, %c0_13] : memref<1x1x8xf32, #tpu.memory_space<vmem>>, vector<1x1x8xf32>
    %23 = vector.shape_cast %22 : vector<1x1x8xf32> to vector<1x8xf32>
    %24 = vector.shape_cast %23 : vector<1x8xf32> to vector<1x1x8xf32>
    %25 = vector.broadcast %24 : vector<1x1x8xf32> to vector<8x8x8xf32>
    %26 = arith.addf %21, %25 : vector<8x8x8xf32>
    %cst_14 = arith.constant dense<0xFF800000> : vector<8x8xf32>
    %27 = vector.multi_reduction <maximumf>, %26, %cst_14 [2] : vector<8x8x8xf32> to vector<8x8xf32>
    %28 = vector.shape_cast %27 : vector<8x8xf32> to vector<8x8x1xf32>
    %29 = vector.broadcast %28 : vector<8x8x1xf32> to vector<8x8x8xf32>
    %30 = arith.subf %26, %29 : vector<8x8x8xf32>
    %31 = math.exp %30 : vector<8x8x8xf32>
    %cst_15 = arith.constant dense<0.000000e+00> : vector<8x8xf32>
    %32 = vector.multi_reduction <add>, %31, %cst_15 [2] : vector<8x8x8xf32> to vector<8x8xf32>
    %33 = vector.shape_cast %32 : vector<8x8xf32> to vector<8x8x1xf32>
    %34 = tpu.reciprocal %33 {approx = true} : vector<8x8x1xf32> -> vector<8x8x1xf32>
    %35 = vector.broadcast %34 : vector<8x8x1xf32> to vector<8x8x8xf32>
    %36 = arith.mulf %31, %35 : vector<8x8x8xf32>
    %37 = arith.truncf %36 : vector<8x8x8xf32> to vector<8x8x8xbf16>
    %c0_16 = arith.constant 0 : index
    %c0_17 = arith.constant 0 : index
    %c0_18 = arith.constant 0 : index
    %c0_19 = arith.constant 0 : index
    %38 = vector.load %arg10[%c0_16, %c0_17, %c0_18, %c0_19] : memref<1x8x8x8xbf16, #tpu.memory_space<vmem>>, vector<1x8x8x8xbf16>
    %39 = vector.shape_cast %38 : vector<1x8x8x8xbf16> to vector<8x8x8xbf16>
    %40 = vector.shape_cast %37 : vector<8x8x8xbf16> to vector<1x8x8x8xbf16>
    tpu.vector_store %arg10[%c0_16, %c0_17, %c0_18, %c0_19], %40 {strides = array<i32>} : memref<1x8x8x8xbf16, #tpu.memory_space<vmem>>, vector<1x8x8x8xbf16>,
    %c0_20 = arith.constant 0 : index
    %c0_21 = arith.constant 0 : index
    %c0_22 = arith.constant 0 : index
    %41 = vector.load %arg12[%c0_20, %c0_21, %c0_22] : memref<8x8x4xbf16, #tpu.memory_space<vmem>>, vector<8x8x4xbf16>
    "tpu.trace_start"() <{level = 10 : i32, message = "hqk,hkd->qhd"}> : () -> ()
    %cst_23 = arith.constant dense<0.000000e+00> : vector<8x4x8xf32>
    %42 = tpu.matmul %41, %37, %cst_23 {dimension_numbers = #tpu.dot_dimension_numbers<[1], [2], [2], [1], [0, 0, 0, 2, 1, 1], [0], [0]>} : vector<8x8x4xbf16>, vector<8x8x8xbf16>, vector<8x4x8xf32> -> vector<8x4x8xf32>
    %43 = tpu.transpose %42, [2, 0, 1] : vector<8x4x8xf32> -> vector<8x8x4xf32>
    "tpu.trace_stop"() : () -> ()
    %44 = vector.shape_cast %43 : vector<8x8x4xf32> to vector<8x32xf32>
    %45 = arith.truncf %44 : vector<8x32xf32> to vector<8x32xbf16>
    %c0_24 = arith.constant 0 : index
    %c0_25 = arith.constant 0 : index
    %46 = vector.load %arg7[%c0_24, %c0_25] : memref<32x32xbf16, #tpu.memory_space<vmem>>, vector<32x32xbf16>
    %cst_26 = arith.constant dense<0.000000e+00> : vector<8x32xf32>
    %47 = tpu.matmul %45, %46, %cst_26 {dimension_numbers = #tpu.dot_dimension_numbers<[1], [0], [0], [1], [0, 0, 1, 1], [], []>} : vector<8x32xbf16>, vector<32x32xbf16>, vector<8x32xf32> -> vector<8x32xf32>
    %48 = vector.broadcast %4 : vector<1x32xf32> to vector<8x32xf32>
    %49 = arith.addf %47, %48 : vector<8x32xf32>
    %50 = arith.addf %11, %49 : vector<8x32xf32>
    %cst_27 = arith.constant dense<0.000000e+00> : vector<8xf32>
    %51 = vector.multi_reduction <add>, %50, %cst_27 [1] : vector<8x32xf32> to vector<8xf32>
    %52 = vector.shape_cast %51 : vector<8xf32> to vector<8x1xf32>
    %cst_28 = arith.constant 3.200000e+01 : f32
    %53 = vector.broadcast %cst_28 : f32 to vector<8x1xf32>
    %54 = arith.divf %52, %53 : vector<8x1xf32>
    %55 = vector.broadcast %54 : vector<8x1xf32> to vector<8x32xf32>
    %56 = arith.subf %50, %55 : vector<8x32xf32>
    %57 = arith.mulf %56, %56 : vector<8x32xf32>
    %cst_29 = arith.constant dense<0.000000e+00> : vector<8xf32>
    %58 = vector.multi_reduction <add>, %57, %cst_29 [1] : vector<8x32xf32> to vector<8xf32>
    %59 = vector.shape_cast %58 : vector<8xf32> to vector<8x1xf32>
    %cst_30 = arith.constant 3.200000e+01 : f32
    %60 = vector.broadcast %cst_30 : f32 to vector<8x1xf32>
    %61 = arith.divf %59, %60 : vector<8x1xf32>
    %62 = vector.broadcast %54 : vector<8x1xf32> to vector<8x32xf32>
    %63 = arith.subf %50, %62 : vector<8x32xf32>
    %cst_31 = arith.constant 9.99999974E-6 : f32
    %64 = vector.broadcast %cst_31 : f32 to vector<8x1xf32>
    %65 = arith.addf %61, %64 : vector<8x1xf32>
    %66 = math.rsqrt %65 : vector<8x1xf32>
    %67 = vector.broadcast %66 : vector<8x1xf32> to vector<8x32xf32>
    %68 = arith.mulf %63, %67 : vector<8x32xf32>
    %69 = vector.broadcast %5 : vector<1x32xf32> to vector<8x32xf32>
    %70 = arith.mulf %68, %69 : vector<8x32xf32>
    %71 = vector.broadcast %6 : vector<1x32xf32> to vector<8x32xf32>
    %72 = arith.addf %70, %71 : vector<8x32xf32>
    %c0_32 = arith.constant 0 : index
    %c0_33 = arith.constant 0 : index
    %c0_34 = arith.constant 0 : index
    %73 = vector.load %arg9[%c0_32, %c0_33, %c0_34] : memref<1x8x32xf32, #tpu.memory_space<vmem>>, vector<1x8x32xf32>
    %74 = vector.shape_cast %73 : vector<1x8x32xf32> to vector<8x32xf32>
    %75 = vector.shape_cast %72 : vector<8x32xf32> to vector<1x8x32xf32>
    tpu.vector_store %arg9[%c0_32, %c0_33, %c0_34], %75 {strides = array<i32>} : memref<1x8x32xf32, #tpu.memory_space<vmem>>, vector<1x8x32xf32>,
    return
  }
  func.func @transform_0(%arg0: i32, %arg1: i32) -> (i32, i32, i32) {
    %c0_i32 = arith.constant 0 : i32
    %c0_i32_0 = arith.constant 0 : i32
    return %arg0, %arg1, %c0_i32 : i32, i32, i32
  }
  func.func @transform_1(%arg0: i32, %arg1: i32) -> (i32, i32, i32) {
    %c0_i32 = arith.constant 0 : i32
    %c0_i32_0 = arith.constant 0 : i32
    %c0_i32_1 = arith.constant 0 : i32
    return %arg0, %c0_i32, %c0_i32_0 : i32, i32, i32
  }
  func.func @transform_2(%arg0: i32, %arg1: i32) -> (i32, i32, i32) {
    %c0_i32 = arith.constant 0 : i32
    %c0_i32_0 = arith.constant 0 : i32
    %c0_i32_1 = arith.constant 0 : i32
    return %arg0, %c0_i32, %c0_i32_0 : i32, i32, i32
  }
  func.func @transform_3(%arg0: i32, %arg1: i32) -> (i32, i32) {
    %c0_i32 = arith.constant 0 : i32
    %c0_i32_0 = arith.constant 0 : i32
    %c0_i32_1 = arith.constant 0 : i32
    return %c0_i32, %c0_i32_0 : i32, i32
  }
  func.func @transform_4(%arg0: i32, %arg1: i32) -> (i32, i32) {
    %c0_i32 = arith.constant 0 : i32
    %c0_i32_0 = arith.constant 0 : i32
    %c0_i32_1 = arith.constant 0 : i32
    return %c0_i32, %c0_i32_0 : i32, i32
  }
  func.func @transform_5(%arg0: i32, %arg1: i32) -> (i32, i32) {
    %c0_i32 = arith.constant 0 : i32
    %c0_i32_0 = arith.constant 0 : i32
    %c0_i32_1 = arith.constant 0 : i32
    return %c0_i32, %c0_i32_0 : i32, i32
  }
  func.func @transform_6(%arg0: i32, %arg1: i32) -> (i32, i32) {
    %c0_i32 = arith.constant 0 : i32
    %c0_i32_0 = arith.constant 0 : i32
    %c0_i32_1 = arith.constant 0 : i32
    return %c0_i32, %c0_i32_0 : i32, i32
  }
  func.func @transform_7(%arg0: i32, %arg1: i32) -> (i32, i32, i32) {
    %c0_i32 = arith.constant 0 : i32
    %c0_i32_0 = arith.constant 0 : i32
    return %arg0, %arg1, %c0_i32 : i32, i32, i32
  }
  func.func @transform_8(%arg0: i32, %arg1: i32) -> (i32, i32, i32, i32) {
    %c0_i32 = arith.constant 0 : i32
    %c0_i32_0 = arith.constant 0 : i32
    %c0_i32_1 = arith.constant 0 : i32
    return %arg0, %c0_i32, %arg1, %c0_i32_0 : i32, i32, i32, i32
  }
}

</mosaic_0001>

<llo_original>
// kernel: tpu_custom_call.1
$region0: #{tpu_custom_call.1}
  #allocation0 [shape = 'u32[]', space=smem, size = 0x4, offset = 0x4, fixed_abs, tag = 'smem constant byte address 0x4 - core index']
  #allocation1 [shape = 'u32[144,128]{1,0:T(1,128)}', space=vmem, size = 0x12000, scoped, tag = 'internal scratch']
  #allocation2 [shape = 'bf16[8,8,4]{2,1,0:T(8,128)(2,1)}', space=vmem, size = 0x4000, scoped, tag = 'scratch operand']
  #allocation3 [shape = 'bf16[8,8,4]{2,1,0:T(8,128)(2,1)}', space=vmem, size = 0x4000, scoped, tag = 'scratch operand']
  %s0 = inlined_call_operand.hbm [shape: f32[2,8,32], index: 0, kind: input, shape index: {}]
  %s1 = inlined_call_operand.hbm [shape: bf16[2,8,32], index: 1, kind: input, shape index: {}]
  %s2 = inlined_call_operand.vmem [shape: f32[2,1,8], index: 2, kind: input, shape index: {}]
  %s3 = inlined_call_operand.hbm [shape: bf16[32,32], index: 3, kind: input, shape index: {}]
  %s4 = inlined_call_operand.hbm [shape: bf16[32,64], index: 4, kind: input, shape index: {}]
  %s5 = inlined_call_operand.vmem [shape: bf16[32,32], index: 5, kind: input, shape index: {}]
  %s6 = inlined_call_operand.hbm [shape: f32[6,32], index: 6, kind: input, shape index: {}]
  %s7 = inlined_call_operand.hbm [shape: f32[2,8,32], index: 7, kind: output, shape index: {0}]
  %s8 = inlined_call_operand.hbm [shape: bf16[2,8,8,8], index: 8, kind: output, shape index: {1}]
  %9 = xla_tuple %s7, %s8
  %s10 = sld [smem:[#allocation0]]
  $region93: #{tpu_custom_call.1} parent=0
    _
  %s12 = ssub.s32 1, %s10
  %s13 = scalar_select 0, %s12, %s10
  $region1: #{tpu_custom_call.1} parent=0
    #allocation4 [shape = 'u8[8192]{0}', space=vmem, size = 0x2000, scoped, tag = 'input window, operand 0']
    #allocation5 [shape = 's32[2]{0}', space=sflag, size = 0x8, scoped, tag = 'scoped memory for tpu_custom_call.1']
    #allocation6 [shape = 's32[2]{0}', space=sflag, size = 0x8, scoped, tag = 'scoped memory for tpu_custom_call.1']
    #allocation7 [shape = 'u8[4096]{0}', space=vmem, size = 0x1000, scoped, tag = 'input window, operand 1']
    #allocation8 [shape = 's32[2]{0}', space=sflag, size = 0x8, scoped, tag = 'scoped memory for tpu_custom_call.1']
    #allocation9 [shape = 'u8[8192]{0}', space=vmem, size = 0x2000, scoped, tag = 'input window, operand 3, single buffered']
    #allocation10 [shape = 'u8[8192]{0}', space=vmem, size = 0x2000, scoped, tag = 'input window, operand 4, single buffered']
    #allocation11 [shape = 's32[1]{0}', space=sflag, size = 0x4, scoped, tag = 'scoped memory for tpu_custom_call.1']
    #allocation12 [shape = 'u8[4096]{0}', space=vmem, size = 0x1000, scoped, tag = 'input window, operand 6, single buffered']
    #allocation13 [shape = 'u8[8192]{0}', space=vmem, size = 0x2000, scoped, tag = 'output window, operand 0']
    #allocation14 [shape = 'u8[32768]{0}', space=vmem, size = 0x8000, scoped, tag = 'output window, operand 1']
    #allocation15 [shape = 's32[2]{0}', space=sflag, size = 0x8, scoped, tag = 'scoped memory for tpu_custom_call.1']
    %14 = vsyncpa [#allocation5], 0
    %s15 = scalar_lea.sflag [#allocation5], 1
    %16 = vsyncpa %s15, 0
    %17 = vsyncpa [#allocation8], 0
    %s18 = scalar_lea.sflag [#allocation8], 1
    %19 = vsyncpa %s18, 0
    %20 = vsyncpa [#allocation11], 0
    %21 = vsyncpa [#allocation6], 0
    %s22 = scalar_lea.sflag [#allocation6], 1
    %23 = vsyncpa %s22, 0
    %24 = vsyncpa [#allocation15], 0
    %s25 = scalar_lea.sflag [#allocation15], 1
    %26 = vsyncpa %s25, 0
    loop: start=0, step=1, limit=4
    $region2: #{tpu_custom_call.1} parent=1 // loop_pre_header
      _
    $region3: #{tpu_custom_call.1} parent=1 // loop_header
      %s28 = sphi 0, %s32
      %p29 = scmp.ge.s32.totalorder %s28, 4
      %s35 = sphi 0, %s47
      %s36 = sphi 0, %s43
      %s37 = sphi 0, %s35
      %s38 = sphi 0, %s36
      %s39 = sphi 0, %s37
      %s40 = sphi 0, %s38
      %s52 = sphi 0, %s54
      %s55 = sphi 0, %s52
      %s56 = sphi 0, %s55
      %s72 = sphi 0, %s56
      %s78 = sphi 0, %s80
      %s81 = sphi 0, %s78
      %s82 = sphi 0, %s81
      %s98 = sphi 0, %s82
      %s104 = sphi 0, %s106
      %s107 = sphi 0, %s104
      %s108 = sphi 0, %s107
      %s124 = sphi 0, %s108
      %s128 = sphi 0, %s128
      %s130 = sphi 0, %s128
      %s131 = sphi 0, %s130
      %s145 = sphi 0, %s131
      %s149 = sphi 0, %s149
      %s151 = sphi 0, %s149
      %s152 = sphi 0, %s151
      %s166 = sphi 0, %s152
      %s170 = sphi 0, %s170
      %s172 = sphi 0, %s170
      %s173 = sphi 0, %s172
      %s187 = sphi 0, %s173
      %s191 = sphi 0, %s191
      %s193 = sphi 0, %s191
      %s194 = sphi 0, %s193
      %s208 = sphi 0, %s194
      %s216 = sphi 0, %s218
      %s219 = sphi 0, %s216
      %s220 = sphi 0, %s219
      %s236 = sphi 0, %s220
      %s244 = sphi 0, %s246
      %s247 = sphi 0, %s244
      %s248 = sphi 0, %s247
      %s264 = sphi 0, %s248
    $region4: #{tpu_custom_call.1} parent=1 // loop_header_branch
      %31 = sbr.rel (%p29) target = $region8
    $region5: #{tpu_custom_call.1} parent=1 // loop_body
      %s33 = ssub.s32 %s28, 1
      %s34 = ssub.s32 %s28, 2
      %s41 = sadd.s32 1, %s36
      %p42 = scmp.ge.s32.totalorder %s41, 1
      %s43 = scalar_select %p42, 0, %s41
      %s44 = sadd.s32 1, %s35
      %s45 = scalar_select %p42, %s44, %s35
      %p46 = scmp.ge.s32.totalorder %s45, 2
      %s47 = scalar_select %p46, 0, %s45
      %s48 = ssub.s32 %s35, %s47
      %s49 = ssub.s32 %s36, %s43
      %s50 = sor.u32 %s48, %s49
      %p51 = scmp.eq.s32.totalorder %s50, 0
      %s53 = sadd.s32 %s52, 1
      %s54 = scalar_select %p51, %s52, %s53
      %p57 = pneg %p51
      %p58 = scmp.eq.s32.totalorder %s28, 1
      %p59 = por %p57, %p58
      %p60 = scmp.ne.s32.totalorder %s52, %s55
      %p61 = scmp.eq.s32.totalorder %s28, 0
      %p62 = por %p60, %p61
      %p63 = scmp.ne.s32.totalorder %s52, %s55
      %p64 = scmp.eq.s32.totalorder %s33, 1
      %p65 = por %p63, %p64
      %p66 = scmp.ne.s32.totalorder %s55, %s56
      %p67 = scmp.eq.s32.totalorder %s33, 0
      %p68 = por %p66, %p67
      %p69 = scmp.ne.s32.totalorder %s55, %s56
      %p70 = scmp.eq.s32.totalorder %s34, 1
      %p71 = por %p69, %p70
      %p73 = scmp.ne.s32.totalorder %s56, %s72
      %p74 = scmp.eq.s32.totalorder %s34, 0
      %p75 = por %p73, %p74
      %s76 = ssub.s32 %s35, %s47
      %p77 = scmp.eq.s32.totalorder %s76, 0
      %s79 = sadd.s32 %s78, 1
      %s80 = scalar_select %p77, %s78, %s79
      %p83 = pneg %p77
      %p84 = scmp.eq.s32.totalorder %s28, 1
      %p85 = por %p83, %p84
      %p86 = scmp.ne.s32.totalorder %s78, %s81
      %p87 = scmp.eq.s32.totalorder %s28, 0
      %p88 = por %p86, %p87
      %p89 = scmp.ne.s32.totalorder %s78, %s81
      %p90 = scmp.eq.s32.totalorder %s33, 1
      %p91 = por %p89, %p90
      %p92 = scmp.ne.s32.totalorder %s81, %s82
      %p93 = scmp.eq.s32.totalorder %s33, 0
      %p94 = por %p92, %p93
      %p95 = scmp.ne.s32.totalorder %s81, %s82
      %p96 = scmp.eq.s32.totalorder %s34, 1
      %p97 = por %p95, %p96
      %p99 = scmp.ne.s32.totalorder %s82, %s98
      %p100 = scmp.eq.s32.totalorder %s34, 0
      %p101 = por %p99, %p100
      %s102 = ssub.s32 %s35, %s47
      %p103 = scmp.eq.s32.totalorder %s102, 0
      %s105 = sadd.s32 %s104, 1
      %s106 = scalar_select %p103, %s104, %s105
      %p109 = pneg %p103
      %p110 = scmp.eq.s32.totalorder %s28, 1
      %p111 = por %p109, %p110
      %p112 = scmp.ne.s32.totalorder %s104, %s107
      %p113 = scmp.eq.s32.totalorder %s28, 0
      %p114 = por %p112, %p113
      %p115 = scmp.ne.s32.totalorder %s104, %s107
      %p116 = scmp.eq.s32.totalorder %s33, 1
      %p117 = por %p115, %p116
      %p118 = scmp.ne.s32.totalorder %s107, %s108
      %p119 = scmp.eq.s32.totalorder %s33, 0
      %p120 = por %p118, %p119
      %p121 = scmp.ne.s32.totalorder %s107, %s108
      %p122 = scmp.eq.s32.totalorder %s34, 1
      %p123 = por %p121, %p122
      %p125 = scmp.ne.s32.totalorder %s108, %s124
      %p126 = scmp.eq.s32.totalorder %s34, 0
      %p127 = por %p125, %p126
      %s129 = sadd.s32 %s128, 1
      %p132 = scmp.eq.s32.totalorder %s28, 1
      %p133 = scmp.ne.s32.totalorder %s128, %s130
      %p134 = scmp.eq.s32.totalorder %s28, 0
      %p135 = por %p133, %p134
      %p136 = scmp.ne.s32.totalorder %s128, %s130
      %p137 = scmp.eq.s32.totalorder %s33, 1
      %p138 = por %p136, %p137
      %p139 = scmp.ne.s32.totalorder %s130, %s131
      %p140 = scmp.eq.s32.totalorder %s33, 0
      %p141 = por %p139, %p140
      %p142 = scmp.ne.s32.totalorder %s130, %s131
      %p143 = scmp.eq.s32.totalorder %s34, 1
      %p144 = por %p142, %p143
      %p146 = scmp.ne.s32.totalorder %s131, %s145
      %p147 = scmp.eq.s32.totalorder %s34, 0
      %p148 = por %p146, %p147
      %s150 = sadd.s32 %s149, 1
      %p153 = scmp.eq.s32.totalorder %s28, 1
      %p154 = scmp.ne.s32.totalorder %s149, %s151
      %p155 = scmp.eq.s32.totalorder %s28, 0
      %p156 = por %p154, %p155
      %p157 = scmp.ne.s32.totalorder %s149, %s151
      %p158 = scmp.eq.s32.totalorder %s33, 1
      %p159 = por %p157, %p158
      %p160 = scmp.ne.s32.totalorder %s151, %s152
      %p161 = scmp.eq.s32.totalorder %s33, 0
      %p162 = por %p160, %p161
      %p163 = scmp.ne.s32.totalorder %s151, %s152
      %p164 = scmp.eq.s32.totalorder %s34, 1
      %p165 = por %p163, %p164
      %p167 = scmp.ne.s32.totalorder %s152, %s166
      %p168 = scmp.eq.s32.totalorder %s34, 0
      %p169 = por %p167, %p168
      %s171 = sadd.s32 %s170, 1
      %p174 = scmp.eq.s32.totalorder %s28, 1
      %p175 = scmp.ne.s32.totalorder %s170, %s172
      %p176 = scmp.eq.s32.totalorder %s28, 0
      %p177 = por %p175, %p176
      %p178 = scmp.ne.s32.totalorder %s170, %s172
      %p179 = scmp.eq.s32.totalorder %s33, 1
      %p180 = por %p178, %p179
      %p181 = scmp.ne.s32.totalorder %s172, %s173
      %p182 = scmp.eq.s32.totalorder %s33, 0
      %p183 = por %p181, %p182
      %p184 = scmp.ne.s32.totalorder %s172, %s173
      %p185 = scmp.eq.s32.totalorder %s34, 1
      %p186 = por %p184, %p185
      %p188 = scmp.ne.s32.totalorder %s173, %s187
      %p189 = scmp.eq.s32.totalorder %s34, 0
      %p190 = por %p188, %p189
      %s192 = sadd.s32 %s191, 1
      %p195 = scmp.eq.s32.totalorder %s28, 1
      %p196 = scmp.ne.s32.totalorder %s191, %s193
      %p197 = scmp.eq.s32.totalorder %s28, 0
      %p198 = por %p196, %p197
      %p199 = scmp.ne.s32.totalorder %s191, %s193
      %p200 = scmp.eq.s32.totalorder %s33, 1
      %p201 = por %p199, %p200
      %p202 = scmp.ne.s32.totalorder %s193, %s194
      %p203 = scmp.eq.s32.totalorder %s33, 0
      %p204 = por %p202, %p203
      %p205 = scmp.ne.s32.totalorder %s193, %s194
      %p206 = scmp.eq.s32.totalorder %s34, 1
      %p207 = por %p205, %p206
      %p209 = scmp.ne.s32.totalorder %s194, %s208
      %p210 = scmp.eq.s32.totalorder %s34, 0
      %p211 = por %p209, %p210
      %s212 = ssub.s32 %s35, %s47
      %s213 = ssub.s32 %s36, %s43
      %s214 = sor.u32 %s212, %s213
      %p215 = scmp.eq.s32.totalorder %s214, 0
      %s217 = sadd.s32 %s216, 1
      %s218 = scalar_select %p215, %s216, %s217
      %p221 = pneg %p215
      %p222 = scmp.eq.s32.totalorder %s28, 1
      %p223 = por %p221, %p222
      %p224 = scmp.ne.s32.totalorder %s216, %s219
      %p225 = scmp.eq.s32.totalorder %s28, 0
      %p226 = por %p224, %p225
      %p227 = scmp.ne.s32.totalorder %s216, %s219
      %p228 = scmp.eq.s32.totalorder %s33, 1
      %p229 = por %p227, %p228
      %p230 = scmp.ne.s32.totalorder %s219, %s220
      %p231 = scmp.eq.s32.totalorder %s33, 0
      %p232 = por %p230, %p231
      %p233 = scmp.ne.s32.totalorder %s219, %s220
      %p234 = scmp.eq.s32.totalorder %s34, 1
      %p235 = por %p233, %p234
      %p237 = scmp.ne.s32.totalorder %s220, %s236
      %p238 = scmp.eq.s32.totalorder %s34, 0
      %p239 = por %p237, %p238
      %s240 = ssub.s32 %s35, %s47
      %s241 = ssub.s32 %s36, %s43
      %s242 = sor.u32 %s240, %s241
      %p243 = scmp.eq.s32.totalorder %s242, 0
      %s245 = sadd.s32 %s244, 1
      %s246 = scalar_select %p243, %s244, %s245
      %p249 = pneg %p243
      %p250 = scmp.eq.s32.totalorder %s28, 1
      %p251 = por %p249, %p250
      %p252 = scmp.ne.s32.totalorder %s244, %s247
      %p253 = scmp.eq.s32.totalorder %s28, 0
      %p254 = por %p252, %p253
      %p255 = scmp.ne.s32.totalorder %s244, %s247
      %p256 = scmp.eq.s32.totalorder %s33, 1
      %p257 = por %p255, %p256
      %p258 = scmp.ne.s32.totalorder %s247, %s248
      %p259 = scmp.eq.s32.totalorder %s33, 0
      %p260 = por %p258, %p259
      %p261 = scmp.ne.s32.totalorder %s247, %s248
      %p262 = scmp.eq.s32.totalorder %s34, 1
      %p263 = por %p261, %p262
      %p265 = scmp.ne.s32.totalorder %s248, %s264
      %p266 = scmp.eq.s32.totalorder %s34, 0
      %p267 = por %p265, %p266
      %p268 = scmp.le.s32.totalorder 1, %s28
      %p269 = scmp.lt.s32.totalorder %s28, 3
      %p270 = pnand %p268, %p269
      %p271 = pneg %p270
      // Predicated region
      $region9: #{tpu_custom_call.1} parent=5 // pred_check
        _
      $region10: #{tpu_custom_call.1} parent=5 // pred_check_branch
        %273 = sbr.rel (%p270) target = $region12
      $region11: #{tpu_custom_call.1} parent=5 // pred_region
        %s274 = ssub.s32 %s28, 1
        // Predicated region
        $region13: #{tpu_custom_call.1} parent=11 // pred_check
          %p275 = pneg %p141
        $region14: #{tpu_custom_call.1} parent=11 // pred_check_branch
          %277 = sbr.rel (%p275) target = $region16
        $region15: #{tpu_custom_call.1} parent=11 // pred_region
          %s279 = ssub.s32 256, 256
          %280 = vsyncadd [#allocation8], %s279
          %s281 = sshll.u32 [#allocation9], 4
          %s282 = int_to_ptr.vmem [resolvable:$true] %s281
          %287 = dma.hbm_to_vmem [thread:$0]  %s3, 256, %s282, [#allocation8], 64, 64, 4
        $region16: #{tpu_custom_call.1} parent=11 // pred_fallthru
          _
        // Predicated region
        $region17: #{tpu_custom_call.1} parent=11 // pred_check
          %p288 = pneg %p162
        $region18: #{tpu_custom_call.1} parent=11 // pred_check_branch
          %290 = sbr.rel (%p288) target = $region20
        $region19: #{tpu_custom_call.1} parent=11 // pred_region
          %s292 = ssub.s32 256, 256
          %293 = vsyncadd [#allocation11], %s292
          %s294 = sshll.u32 [#allocation10], 4
          %s295 = int_to_ptr.vmem [resolvable:$true] %s294
          %300 = dma.hbm_to_vmem [thread:$0]  %s4, 256, %s295, [#allocation11], 64, 64, 4
        $region20: #{tpu_custom_call.1} parent=11 // pred_fallthru
          _
        // Predicated region
        $region21: #{tpu_custom_call.1} parent=11 // pred_check
          %p301 = pneg %p183
        $region22: #{tpu_custom_call.1} parent=11 // pred_check_branch
          %303 = sbr.rel (%p301) target = $region24
        $region23: #{tpu_custom_call.1} parent=11 // pred_region
          _
        $region24: #{tpu_custom_call.1} parent=11 // pred_fallthru
          _
        // Predicated region
        $region25: #{tpu_custom_call.1} parent=11 // pred_check
          %p304 = pneg %p204
        $region26: #{tpu_custom_call.1} parent=11 // pred_check_branch
          %306 = sbr.rel (%p304) target = $region28
        $region27: #{tpu_custom_call.1} parent=11 // pred_region
          %s308 = ssub.s32 128, 128
          %309 = vsyncadd [#allocation11], %s308
          %s311 = sshll.u32 [#allocation12], 4
          %s312 = int_to_ptr.vmem [resolvable:$true] %s311
          %314 = dma.hbm_to_vmem [thread:$0]  %s6, 128, %s312, [#allocation11]
        $region28: #{tpu_custom_call.1} parent=11 // pred_fallthru
          _
      $region12: #{tpu_custom_call.1} parent=5 // pred_fallthru
        _
      %p315 = scmp.lt.s32.totalorder %s28, 2
      // Predicated region
      $region29: #{tpu_custom_call.1} parent=5 // pred_check
        %p316 = pneg %p315
      $region30: #{tpu_custom_call.1} parent=5 // pred_check_branch
        %318 = sbr.rel (%p316) target = $region32
      $region31: #{tpu_custom_call.1} parent=5 // pred_region
        // Predicated region
        $region33: #{tpu_custom_call.1} parent=31 // pred_check
          %p319 = pneg %p62
        $region34: #{tpu_custom_call.1} parent=31 // pred_check_branch
          %321 = sbr.rel (%p319) target = $region36
        $region35: #{tpu_custom_call.1} parent=31 // pred_region
          %s322 = sand.u32 %s52, 1
          %s323 = scalar_lea.sflag [#allocation5], %s322
          %s324 = sand.u32 %s52, 1
          %s325 = smul.addr %s324, 8
          %s326 = scalar_lea.vmem [#allocation4], %s325
          %s328 = ssub.s32 128, 128
          %329 = vsyncadd %s323, %s328
          %s330 = sadd.s32 %s36, %s35
          %s331 = smul.addr %s330, 128
          %s332 = scalar_lea.hbm %s0, %s331
          %s334 = sshll.u32 %s326, 4
          %s335 = int_to_ptr.vmem [resolvable:$true] %s334
          %337 = dma.hbm_to_vmem [thread:$0]  %s332, 128, %s335, %s323
        $region36: #{tpu_custom_call.1} parent=31 // pred_fallthru
          _
        // Predicated region
        $region37: #{tpu_custom_call.1} parent=31 // pred_check
          %p338 = pneg %p88
        $region38: #{tpu_custom_call.1} parent=31 // pred_check_branch
          %340 = sbr.rel (%p338) target = $region40
        $region39: #{tpu_custom_call.1} parent=31 // pred_region
          %s341 = sand.u32 %s28, 1
          %s342 = scalar_lea.sflag [#allocation8], %s341
          %s343 = sand.u32 %s78, 1
          %s344 = smul.addr %s343, 4
          %s345 = scalar_lea.vmem [#allocation7], %s344
          %s347 = ssub.s32 64, 64
          %348 = vsyncadd %s342, %s347
          %s349 = smul.addr %s35, 64
          %s350 = scalar_lea.hbm %s1, %s349
          %s352 = sshll.u32 %s345, 4
          %s353 = int_to_ptr.vmem [resolvable:$true] %s352
          %355 = dma.hbm_to_vmem [thread:$0]  %s350, 64, %s353, %s342
        $region40: #{tpu_custom_call.1} parent=31 // pred_fallthru
          _
        // Predicated region
        $region41: #{tpu_custom_call.1} parent=31 // pred_check
          %p356 = pneg %p114
        $region42: #{tpu_custom_call.1} parent=31 // pred_check_branch
          %358 = sbr.rel (%p356) target = $region44
        $region43: #{tpu_custom_call.1} parent=31 // pred_region
          %p359 = scmp.lt.s32.totalorder %s35, 1
          %s360 = scalar_select %p359, %s35, 1
          %s361 = scalar_lea.vmem %s2, %s360
        $region44: #{tpu_custom_call.1} parent=31 // pred_fallthru
          _
      $region32: #{tpu_custom_call.1} parent=5 // pred_fallthru
        _
      %p362 = scmp.le.s32.totalorder 1, %s28
      %p363 = scmp.lt.s32.totalorder %s28, 3
      %p364 = pnand %p362, %p363
      %p365 = pneg %p364
      // Predicated region
      $region45: #{tpu_custom_call.1} parent=5 // pred_check
        _
      $region46: #{tpu_custom_call.1} parent=5 // pred_check_branch
        %367 = sbr.rel (%p364) target = $region48
      $region47: #{tpu_custom_call.1} parent=5 // pred_region
        %s368 = ssub.s32 %s28, 1
        %s369 = sand.u32 %s55, 1
        %s370 = scalar_lea.sflag [#allocation5], %s369
        %s371 = sand.u32 %s55, 1
        %s372 = smul.addr %s371, 8
        %s373 = scalar_lea.vmem [#allocation4], %s372
        // Predicated region
        $region49: #{tpu_custom_call.1} parent=47 // pred_check
          %p374 = pneg %p68
        $region50: #{tpu_custom_call.1} parent=47 // pred_check_branch
          %376 = sbr.rel (%p374) target = $region52
        $region51: #{tpu_custom_call.1} parent=47 // pred_region
          %377 = dma.done %s370, 128
        $region52: #{tpu_custom_call.1} parent=47 // pred_fallthru
          _
        %s378 = sand.u32 %s33, 1
        %s379 = scalar_lea.sflag [#allocation8], %s378
        %s380 = sand.u32 %s81, 1
        %s381 = smul.addr %s380, 4
        %s382 = scalar_lea.vmem [#allocation7], %s381
        // Predicated region
        $region53: #{tpu_custom_call.1} parent=47 // pred_check
          %p383 = pneg %p94
        $region54: #{tpu_custom_call.1} parent=47 // pred_check_branch
          %385 = sbr.rel (%p383) target = $region56
        $region55: #{tpu_custom_call.1} parent=47 // pred_region
          %386 = dma.done %s379, 64
        $region56: #{tpu_custom_call.1} parent=47 // pred_fallthru
          _
        // Predicated region
        $region57: #{tpu_custom_call.1} parent=47 // pred_check
          %p387 = pneg %p141
        $region58: #{tpu_custom_call.1} parent=47 // pred_check_branch
          %389 = sbr.rel (%p387) target = $region60
        $region59: #{tpu_custom_call.1} parent=47 // pred_region
          %390 = dma.done [#allocation8], 256
        $region60: #{tpu_custom_call.1} parent=47 // pred_fallthru
          _
        // Predicated region
        $region61: #{tpu_custom_call.1} parent=47 // pred_check
          %p391 = pneg %p162
        $region62: #{tpu_custom_call.1} parent=47 // pred_check_branch
          %393 = sbr.rel (%p391) target = $region64
        $region63: #{tpu_custom_call.1} parent=47 // pred_region
          %394 = dma.done [#allocation11], 256
        $region64: #{tpu_custom_call.1} parent=47 // pred_fallthru
          _
        // Predicated region
        $region65: #{tpu_custom_call.1} parent=47 // pred_check
          %p395 = pneg %p204
        $region66: #{tpu_custom_call.1} parent=47 // pred_check_branch
          %397 = sbr.rel (%p395) target = $region68
        $region67: #{tpu_custom_call.1} parent=47 // pred_region
          %398 = dma.done [#allocation11], 128
        $region68: #{tpu_custom_call.1} parent=47 // pred_fallthru
          _
        %s399 = sand.u32 %s55, 1
        %s400 = scalar_lea.sflag [#allocation5], %s399
        %s401 = sand.u32 %s55, 1
        %s402 = smul.addr %s401, 8
        %s403 = scalar_lea.vmem [#allocation4], %s402
        %p404 = pneg %p68
        %p405 = pneg %p65
        %s406 = sand.u32 %s33, 1
        %s407 = scalar_lea.sflag [#allocation8], %s406
        %s408 = sand.u32 %s81, 1
        %s409 = smul.addr %s408, 4
        %s410 = scalar_lea.vmem [#allocation7], %s409
        %p411 = pneg %p94
        %p412 = pneg %p91
        %p413 = scmp.lt.s32.totalorder %s37, 1
        %s414 = scalar_select %p413, %s37, 1
        %s415 = scalar_lea.vmem %s2, %s414
        %p416 = pneg %p120
        %p417 = pneg %p117
        %p418 = pneg %p141
        %p419 = pneg %p138
        %p420 = pneg %p162
        %p421 = pneg %p159
        %p422 = pneg %p183
        %p423 = pneg %p180
        %p424 = pneg %p204
        %p425 = pneg %p201
        %p426 = pneg %p232
        %p427 = pneg %p229
        %s428 = sand.u32 %s219, 1
        %s429 = scalar_lea.sflag [#allocation6], %s428
        %s430 = sand.u32 %s219, 1
        %s431 = smul.addr %s430, 8
        %s432 = scalar_lea.vmem [#allocation13], %s431
        %p433 = pneg %p260
        %p434 = pneg %p257
        %s435 = sand.u32 %s247, 1
        %s436 = scalar_lea.sflag [#allocation15], %s435
        %s437 = sand.u32 %s247, 1
        %s438 = smul.addr %s437, 32
        %s439 = scalar_lea.vmem [#allocation14], %s438
        %p440 = scmp.lt.s32.totalorder %s37, 1
        %s441 = scalar_select %p440, %s37, 1
        %s442 = scalar_lea.vmem %s2, %s441
        %v444 = vld [vmem:[#allocation12] sm:$0x3f]
        %p445 = scmp.eq.s32.totalorder %s38, 0
        // Predicated region
        $region69: #{tpu_custom_call.1} parent=47 // pred_check
          %p446 = pneg %p445
        $region70: #{tpu_custom_call.1} parent=47 // pred_check_branch
          %448 = sbr.rel (%p446) target = $region72
        $region71: #{tpu_custom_call.1} parent=47 // pred_region
          %v449 = vld [vmem:[%s382] sm:$0xf]
          %v450 = vld [vmem:[#allocation10] sm:$0xf]
          %v451 = vld [vmem:[#allocation10 + $0x4] sm:$0xf]
          %v452 = vld [vmem:[#allocation10 + $0x8] sm:$0xf]
          %v453 = vld [vmem:[#allocation10 + $0xc] sm:$0xf]
          %v458 = vunpack.c.l.b16 %v450
          %v459 = vunpack.c.l.b16 %v451
          %v460 = vunpack.c.l.b16 %v452
          %v461 = vunpack.c.l.b16 %v453
          %v462 = vpack.c.b16 %v459, %v458
          %v463 = vpack.c.b16 %v461, %v460
          %vm466 = vcmask 261120
          %v468 = vsel %vm466, %v449, 0
          %470 = vmatprep.subr.bf16.mxu0 0
          %471 = vmatpush1.bf16.msra.mxu0 %v462
          %472 = vmatprep.subr.bf16.mxu0 0
          %473 = vmatpush1.bf16.msra.mxu0 %v463
          %474 = vmatprep.subr.bf16.mxu0 0
          %475 = vmatpush1.bf16.msra.mxu0 0
          %476 = vmatprep.subr.bf16.mxu0 0
          %477 = vmatpush1.bf16.msra.mxu0 0
          %478 = vmatprep.subr.bf16.mxu0 0
          %479 = vmatpush1.bf16.msra.mxu0 0
          %480 = vmatprep.subr.bf16.mxu0 0
          %481 = vmatpush1.bf16.msra.mxu0 0
          %482 = vmatprep.subr.bf16.mxu0 0
          %483 = vmatpush1.bf16.msra.mxu0 0
          %484 = vmatprep.subr.bf16.mxu0 0
          %485 = vmatpush1.bf16.msra.mxu0 0
          %486 = vmatprep.subr.bf16.mxu0 0
          %487 = vmatpush1.bf16.msra.mxu0 0
          %488 = vmatprep.subr.bf16.mxu0 0
          %489 = vmatpush1.bf16.msra.mxu0 0
          %490 = vmatprep.subr.bf16.mxu0 0
          %491 = vmatpush1.bf16.msra.mxu0 0
          %492 = vmatprep.subr.bf16.mxu0 0
          %493 = vmatpush1.bf16.msra.mxu0 0
          %494 = vmatprep.subr.bf16.mxu0 0
          %495 = vmatpush1.bf16.msra.mxu0 0
          %496 = vmatprep.subr.bf16.mxu0 0
          %497 = vmatpush1.bf16.msra.mxu0 0
          %498 = vmatprep.subr.bf16.mxu0 0
          %499 = vmatpush1.bf16.msra.mxu0 0
          %500 = vmatprep.subr.bf16.mxu0 0
          %501 = vmatpush1.bf16.msra.mxu0 0
          %502 = vmatprep.mubr.bf16.mxu0 0
          %503 = vmatmul.mubr.bf16.gmra.mrb[0].mxu0 %v468
          %v504 = vpop.f32.mrb[0].mxu0
          %v505 = vadd.f32 0.0, %v504
          %v506 = vpop.f32.mrb[0].mxu0
          %v507 = vpop.f32.mrb[0].mxu0
          %v508 = vpop.f32.mrb[0].mxu0
          %509 = vdwg.mxu0
          %v510 = vlaneseq
          %v511 = vshrl.u32 %v510, 7
          %v512 = vsub.s32 1, %v511
          %v513 = vrot.slane %v444, %v512
          %v514 = vadd.f32 %v505, %v513
          %v515 = vlaneseq
          %v516 = vshrl.u32 %v515, 7
          %v517 = vsub.s32 2, %v516
          %v518 = vrot.slane %v444, %v517
          %520 = vrot.lane.b32.xlu0 %v518, 32
          %v521 = vpop.permute.xlu0 %520
          %v523 = vadd.f32 %v505, %v521
          %525 = vrot.lane.b32.xlu0 %v514, 124
          %v526 = vpop.permute.xlu0 %525
          %528 = vrot.lane.b32.xlu0 %v514, 120
          %v529 = vpop.permute.xlu0 %528
          %531 = vrot.lane.b32.xlu0 %v514, 116
          %v532 = vpop.permute.xlu0 %531
          %534 = vrot.lane.b32.xlu0 %v514, 112
          %v535 = vpop.permute.xlu0 %534
          %537 = vrot.lane.b32.xlu0 %v514, 108
          %v538 = vpop.permute.xlu0 %537
          %540 = vrot.lane.b32.xlu0 %v514, 104
          %v541 = vpop.permute.xlu0 %540
          %543 = vrot.lane.b32.xlu0 %v514, 100
          %v544 = vpop.permute.xlu0 %543
          %v546 = vcombine.low %v514, %v529
          %v547 = vcombine.high %v514, %v529
          %v549 = vunpack.c.l.s4 1983009808
          %v550 = vunpack.c.0.s8 %v549
          %v551 = vlaneseq
          %v552 = vshrl.u32 %v551, 7
          %v553 = vsub.s32 %v550, %v552
          %v554 = vrot.slane %v546, %v553
          %v556 = vunpack.c.l.s4 1983009808
          %v557 = vunpack.c.0.s8 %v556
          %v558 = vlaneseq
          %v559 = vshrl.u32 %v558, 7
          %v560 = vsub.s32 %v557, %v559
          %v561 = vrot.slane %v547, %v560
          %v562 = vcombine.low %v526, %v532
          %v563 = vcombine.high %v526, %v532
          %v565 = vunpack.c.l.s4 1983009808
          %v566 = vunpack.c.0.s8 %v565
          %v567 = vlaneseq
          %v568 = vshrl.u32 %v567, 7
          %v569 = vsub.s32 %v566, %v568
          %v570 = vrot.slane %v562, %v569
          %v572 = vunpack.c.l.s4 1983009808
          %v573 = vunpack.c.0.s8 %v572
          %v574 = vlaneseq
          %v575 = vshrl.u32 %v574, 7
          %v576 = vsub.s32 %v573, %v575
          %v577 = vrot.slane %v563, %v576
          %v578 = vcombine.low %v535, %v541
          %v579 = vcombine.high %v535, %v541
          %v581 = vunpack.c.l.s4 1983009808
          %v582 = vunpack.c.0.s8 %v581
          %v583 = vlaneseq
          %v584 = vshrl.u32 %v583, 7
          %v585 = vsub.s32 %v582, %v584
          %v586 = vrot.slane %v578, %v585
          %v588 = vunpack.c.l.s4 1983009808
          %v589 = vunpack.c.0.s8 %v588
          %v590 = vlaneseq
          %v591 = vshrl.u32 %v590, 7
          %v592 = vsub.s32 %v589, %v591
          %v593 = vrot.slane %v579, %v592
          %v594 = vcombine.low %v538, %v544
          %v595 = vcombine.high %v538, %v544
          %v597 = vunpack.c.l.s4 1983009808
          %v598 = vunpack.c.0.s8 %v597
          %v599 = vlaneseq
          %v600 = vshrl.u32 %v599, 7
          %v601 = vsub.s32 %v598, %v600
          %v602 = vrot.slane %v594, %v601
          %v604 = vunpack.c.l.s4 1983009808
          %v605 = vunpack.c.0.s8 %v604
          %v606 = vlaneseq
          %v607 = vshrl.u32 %v606, 7
          %v608 = vsub.s32 %v605, %v607
          %v609 = vrot.slane %v595, %v608
          %v610 = vcombine.low %v554, %v570
          %v611 = vcombine.high %v554, %v570
          %v613 = vunpack.c.l.s4 1934713408
          %v614 = vunpack.c.0.s8 %v613
          %v615 = vlaneseq
          %v616 = vshrl.u32 %v615, 7
          %v617 = vsub.s32 %v614, %v616
          %v618 = vrot.slane %v610, %v617
          %v620 = vunpack.c.l.s4 1934713408
          %v621 = vunpack.c.0.s8 %v620
          %v622 = vlaneseq
          %v623 = vshrl.u32 %v622, 7
          %v624 = vsub.s32 %v621, %v623
          %v625 = vrot.slane %v611, %v624
          %v626 = vcombine.low %v561, %v577
          %v627 = vcombine.high %v561, %v577
          %v629 = vunpack.c.l.s4 1934713408
          %v630 = vunpack.c.0.s8 %v629
          %v631 = vlaneseq
          %v632 = vshrl.u32 %v631, 7
          %v633 = vsub.s32 %v630, %v632
          %v634 = vrot.slane %v626, %v633
          %v636 = vunpack.c.l.s4 1934713408
          %v637 = vunpack.c.0.s8 %v636
          %v638 = vlaneseq
          %v639 = vshrl.u32 %v638, 7
          %v640 = vsub.s32 %v637, %v639
          %v641 = vrot.slane %v627, %v640
          %v642 = vcombine.low %v586, %v602
          %v643 = vcombine.high %v586, %v602
          %v645 = vunpack.c.l.s4 1934713408
          %v646 = vunpack.c.0.s8 %v645
          %v647 = vlaneseq
          %v648 = vshrl.u32 %v647, 7
          %v649 = vsub.s32 %v646, %v648
          %v650 = vrot.slane %v642, %v649
          %v652 = vunpack.c.l.s4 1934713408
          %v653 = vunpack.c.0.s8 %v652
          %v654 = vlaneseq
          %v655 = vshrl.u32 %v654, 7
          %v656 = vsub.s32 %v653, %v655
          %v657 = vrot.slane %v643, %v656
          %v658 = vcombine.low %v593, %v609
          %v659 = vcombine.high %v593, %v609
          %v661 = vunpack.c.l.s4 1934713408
          %v662 = vunpack.c.0.s8 %v661
          %v663 = vlaneseq
          %v664 = vshrl.u32 %v663, 7
          %v665 = vsub.s32 %v662, %v664
          %v666 = vrot.slane %v658, %v665
          %v668 = vunpack.c.l.s4 1934713408
          %v669 = vunpack.c.0.s8 %v668
          %v670 = vlaneseq
          %v671 = vshrl.u32 %v670, 7
          %v672 = vsub.s32 %v669, %v671
          %v673 = vrot.slane %v659, %v672
          %v674 = vcombine.low %v618, %v650
          %v675 = vcombine.high %v618, %v650
          %v676 = vcombine.low %v625, %v657
          %v677 = vcombine.high %v625, %v657
          %v678 = vcombine.low %v634, %v666
          %v679 = vcombine.high %v634, %v666
          %v680 = vcombine.low %v641, %v673
          %v681 = vcombine.high %v641, %v673
          %v682 = vcombine.low %v674, %v676
          %v683 = vcombine.high %v674, %v676
          %v685 = vunpack.c.l.s4 1983009808
          %v686 = vunpack.c.0.s8 %v685
          %v687 = vlaneseq
          %v688 = vshrl.u32 %v687, 7
          %v689 = vsub.s32 %v686, %v688
          %v690 = vrot.slane %v682, %v689
          %v692 = vunpack.c.l.s4 1983009808
          %v693 = vunpack.c.0.s8 %v692
          %v694 = vlaneseq
          %v695 = vshrl.u32 %v694, 7
          %v696 = vsub.s32 %v693, %v695
          %v697 = vrot.slane %v683, %v696
          %v698 = vcombine.low %v675, %v677
          %v699 = vcombine.high %v675, %v677
          %v701 = vunpack.c.l.s4 1983009808
          %v702 = vunpack.c.0.s8 %v701
          %v703 = vlaneseq
          %v704 = vshrl.u32 %v703, 7
          %v705 = vsub.s32 %v702, %v704
          %v706 = vrot.slane %v698, %v705
          %v708 = vunpack.c.l.s4 1983009808
          %v709 = vunpack.c.0.s8 %v708
          %v710 = vlaneseq
          %v711 = vshrl.u32 %v710, 7
          %v712 = vsub.s32 %v709, %v711
          %v713 = vrot.slane %v699, %v712
          %v714 = vcombine.low %v678, %v680
          %v715 = vcombine.high %v678, %v680
          %v717 = vunpack.c.l.s4 1983009808
          %v718 = vunpack.c.0.s8 %v717
          %v719 = vlaneseq
          %v720 = vshrl.u32 %v719, 7
          %v721 = vsub.s32 %v718, %v720
          %v722 = vrot.slane %v714, %v721
          %v724 = vunpack.c.l.s4 1983009808
          %v725 = vunpack.c.0.s8 %v724
          %v726 = vlaneseq
          %v727 = vshrl.u32 %v726, 7
          %v728 = vsub.s32 %v725, %v727
          %v729 = vrot.slane %v715, %v728
          %v730 = vcombine.low %v679, %v681
          %v731 = vcombine.high %v679, %v681
          %v733 = vunpack.c.l.s4 1983009808
          %v734 = vunpack.c.0.s8 %v733
          %v735 = vlaneseq
          %v736 = vshrl.u32 %v735, 7
          %v737 = vsub.s32 %v734, %v736
          %v738 = vrot.slane %v730, %v737
          %v740 = vunpack.c.l.s4 1983009808
          %v741 = vunpack.c.0.s8 %v740
          %v742 = vlaneseq
          %v743 = vshrl.u32 %v742, 7
          %v744 = vsub.s32 %v741, %v743
          %v745 = vrot.slane %v731, %v744
          %v746 = vcombine.low %v690, %v706
          %v747 = vcombine.high %v690, %v706
          %v749 = vunpack.c.l.s4 1934713408
          %v750 = vunpack.c.0.s8 %v749
          %v751 = vlaneseq
          %v752 = vshrl.u32 %v751, 7
          %v753 = vsub.s32 %v750, %v752
          %v754 = vrot.slane %v746, %v753
          %v756 = vunpack.c.l.s4 1934713408
          %v757 = vunpack.c.0.s8 %v756
          %v758 = vlaneseq
          %v759 = vshrl.u32 %v758, 7
          %v760 = vsub.s32 %v757, %v759
          %v761 = vrot.slane %v747, %v760
          %v762 = vcombine.low %v697, %v713
          %v763 = vcombine.high %v697, %v713
          %v765 = vunpack.c.l.s4 1934713408
          %v766 = vunpack.c.0.s8 %v765
          %v767 = vlaneseq
          %v768 = vshrl.u32 %v767, 7
          %v769 = vsub.s32 %v766, %v768
          %v770 = vrot.slane %v762, %v769
          %v772 = vunpack.c.l.s4 1934713408
          %v773 = vunpack.c.0.s8 %v772
          %v774 = vlaneseq
          %v775 = vshrl.u32 %v774, 7
          %v776 = vsub.s32 %v773, %v775
          %v777 = vrot.slane %v763, %v776
          %v778 = vcombine.low %v722, %v738
          %v779 = vcombine.high %v722, %v738
          %v781 = vunpack.c.l.s4 1934713408
          %v782 = vunpack.c.0.s8 %v781
          %v783 = vlaneseq
          %v784 = vshrl.u32 %v783, 7
          %v785 = vsub.s32 %v782, %v784
          %v786 = vrot.slane %v778, %v785
          %v788 = vunpack.c.l.s4 1934713408
          %v789 = vunpack.c.0.s8 %v788
          %v790 = vlaneseq
          %v791 = vshrl.u32 %v790, 7
          %v792 = vsub.s32 %v789, %v791
          %v793 = vrot.slane %v779, %v792
          %v794 = vcombine.low %v729, %v745
          %v795 = vcombine.high %v729, %v745
          %v797 = vunpack.c.l.s4 1934713408
          %v798 = vunpack.c.0.s8 %v797
          %v799 = vlaneseq
          %v800 = vshrl.u32 %v799, 7
          %v801 = vsub.s32 %v798, %v800
          %v802 = vrot.slane %v794, %v801
          %v804 = vunpack.c.l.s4 1934713408
          %v805 = vunpack.c.0.s8 %v804
          %v806 = vlaneseq
          %v807 = vshrl.u32 %v806, 7
          %v808 = vsub.s32 %v805, %v807
          %v809 = vrot.slane %v795, %v808
          %v810 = vcombine.low %v754, %v786
          %v811 = vcombine.high %v754, %v786
          %v812 = vcombine.low %v761, %v793
          %v813 = vcombine.high %v761, %v793
          %v814 = vcombine.low %v770, %v802
          %v815 = vcombine.high %v770, %v802
          %v816 = vcombine.low %v777, %v809
          %v817 = vcombine.high %v777, %v809
          %v818 = vpack.c.bf16 %v810, %v810
          %v819 = vpack.c.bf16 %v811, %v811
          %v820 = vpack.c.bf16 %v812, %v812
          %v821 = vpack.c.bf16 %v813, %v813
          %v822 = vpack.c.bf16 %v814, %v814
          %v823 = vpack.c.bf16 %v815, %v815
          %v824 = vpack.c.bf16 %v816, %v816
          %v825 = vpack.c.bf16 %v817, %v817
          %vm826 = vcmask 27648
          %827 = vst.msk [vmem:[#allocation2] sm:$0xf] %vm826, %v818
          %828 = vst.msk [vmem:[#allocation2 + $0x4] sm:$0xf] %vm826, %v819
          %829 = vst.msk [vmem:[#allocation2 + $0x8] sm:$0xf] %vm826, %v820
          %830 = vst.msk [vmem:[#allocation2 + $0xc] sm:$0xf] %vm826, %v821
          %831 = vst.msk [vmem:[#allocation2 + $0x10] sm:$0xf] %vm826, %v822
          %832 = vst.msk [vmem:[#allocation2 + $0x14] sm:$0xf] %vm826, %v823
          %833 = vst.msk [vmem:[#allocation2 + $0x18] sm:$0xf] %vm826, %v824
          %834 = vst.msk [vmem:[#allocation2 + $0x1c] sm:$0xf] %vm826, %v825
          %836 = vrot.lane.b32.xlu0 %v523, 124
          %v837 = vpop.permute.xlu0 %836
          %838 = vrot.lane.b32.xlu0 %v523, 120
          %v839 = vpop.permute.xlu0 %838
          %840 = vrot.lane.b32.xlu0 %v523, 116
          %v841 = vpop.permute.xlu0 %840
          %842 = vrot.lane.b32.xlu0 %v523, 112
          %v843 = vpop.permute.xlu0 %842
          %844 = vrot.lane.b32.xlu0 %v523, 108
          %v845 = vpop.permute.xlu0 %844
          %846 = vrot.lane.b32.xlu0 %v523, 104
          %v847 = vpop.permute.xlu0 %846
          %848 = vrot.lane.b32.xlu0 %v523, 100
          %v849 = vpop.permute.xlu0 %848
          %850 = vrot.lane.b32.xlu0 %v523, 96
          %v851 = vpop.permute.xlu0 %850
          %852 = vrot.lane.b32.xlu0 %v837, 96
          %v853 = vpop.permute.xlu0 %852
          %854 = vrot.lane.b32.xlu0 %v839, 96
          %v855 = vpop.permute.xlu0 %854
          %856 = vrot.lane.b32.xlu0 %v841, 96
          %v857 = vpop.permute.xlu0 %856
          %858 = vrot.lane.b32.xlu0 %v843, 96
          %v859 = vpop.permute.xlu0 %858
          %860 = vrot.lane.b32.xlu0 %v845, 96
          %v861 = vpop.permute.xlu0 %860
          %862 = vrot.lane.b32.xlu0 %v847, 96
          %v863 = vpop.permute.xlu0 %862
          %864 = vrot.lane.b32.xlu0 %v849, 96
          %v865 = vpop.permute.xlu0 %864
          %v874 = vcombine.low %v851, %v855
          %v875 = vcombine.high %v851, %v855
          %v877 = vunpack.c.l.s4 1983009808
          %v878 = vunpack.c.0.s8 %v877
          %v879 = vlaneseq
          %v880 = vshrl.u32 %v879, 7
          %v881 = vsub.s32 %v878, %v880
          %v882 = vrot.slane %v874, %v881
          %v884 = vunpack.c.l.s4 1983009808
          %v885 = vunpack.c.0.s8 %v884
          %v886 = vlaneseq
          %v887 = vshrl.u32 %v886, 7
          %v888 = vsub.s32 %v885, %v887
          %v889 = vrot.slane %v875, %v888
          %v890 = vcombine.low %v853, %v857
          %v891 = vcombine.high %v853, %v857
          %v893 = vunpack.c.l.s4 1983009808
          %v894 = vunpack.c.0.s8 %v893
          %v895 = vlaneseq
          %v896 = vshrl.u32 %v895, 7
          %v897 = vsub.s32 %v894, %v896
          %v898 = vrot.slane %v890, %v897
          %v900 = vunpack.c.l.s4 1983009808
          %v901 = vunpack.c.0.s8 %v900
          %v902 = vlaneseq
          %v903 = vshrl.u32 %v902, 7
          %v904 = vsub.s32 %v901, %v903
          %v905 = vrot.slane %v891, %v904
          %v906 = vcombine.low %v859, %v863
          %v907 = vcombine.high %v859, %v863
          %v909 = vunpack.c.l.s4 1983009808
          %v910 = vunpack.c.0.s8 %v909
          %v911 = vlaneseq
          %v912 = vshrl.u32 %v911, 7
          %v913 = vsub.s32 %v910, %v912
          %v914 = vrot.slane %v906, %v913
          %v916 = vunpack.c.l.s4 1983009808
          %v917 = vunpack.c.0.s8 %v916
          %v918 = vlaneseq
          %v919 = vshrl.u32 %v918, 7
          %v920 = vsub.s32 %v917, %v919
          %v921 = vrot.slane %v907, %v920
          %v922 = vcombine.low %v861, %v865
          %v923 = vcombine.high %v861, %v865
          %v925 = vunpack.c.l.s4 1983009808
          %v926 = vunpack.c.0.s8 %v925
          %v927 = vlaneseq
          %v928 = vshrl.u32 %v927, 7
          %v929 = vsub.s32 %v926, %v928
          %v930 = vrot.slane %v922, %v929
          %v932 = vunpack.c.l.s4 1983009808
          %v933 = vunpack.c.0.s8 %v932
          %v934 = vlaneseq
          %v935 = vshrl.u32 %v934, 7
          %v936 = vsub.s32 %v933, %v935
          %v937 = vrot.slane %v923, %v936
          %v938 = vcombine.low %v882, %v898
          %v939 = vcombine.high %v882, %v898
          %v941 = vunpack.c.l.s4 1934713408
          %v942 = vunpack.c.0.s8 %v941
          %v943 = vlaneseq
          %v944 = vshrl.u32 %v943, 7
          %v945 = vsub.s32 %v942, %v944
          %v946 = vrot.slane %v938, %v945
          %v948 = vunpack.c.l.s4 1934713408
          %v949 = vunpack.c.0.s8 %v948
          %v950 = vlaneseq
          %v951 = vshrl.u32 %v950, 7
          %v952 = vsub.s32 %v949, %v951
          %v953 = vrot.slane %v939, %v952
          %v954 = vcombine.low %v889, %v905
          %v955 = vcombine.high %v889, %v905
          %v957 = vunpack.c.l.s4 1934713408
          %v958 = vunpack.c.0.s8 %v957
          %v959 = vlaneseq
          %v960 = vshrl.u32 %v959, 7
          %v961 = vsub.s32 %v958, %v960
          %v962 = vrot.slane %v954, %v961
          %v964 = vunpack.c.l.s4 1934713408
          %v965 = vunpack.c.0.s8 %v964
          %v966 = vlaneseq
          %v967 = vshrl.u32 %v966, 7
          %v968 = vsub.s32 %v965, %v967
          %v969 = vrot.slane %v955, %v968
          %v970 = vcombine.low %v914, %v930
          %v971 = vcombine.high %v914, %v930
          %v973 = vunpack.c.l.s4 1934713408
          %v974 = vunpack.c.0.s8 %v973
          %v975 = vlaneseq
          %v976 = vshrl.u32 %v975, 7
          %v977 = vsub.s32 %v974, %v976
          %v978 = vrot.slane %v970, %v977
          %v980 = vunpack.c.l.s4 1934713408
          %v981 = vunpack.c.0.s8 %v980
          %v982 = vlaneseq
          %v983 = vshrl.u32 %v982, 7
          %v984 = vsub.s32 %v981, %v983
          %v985 = vrot.slane %v971, %v984
          %v986 = vcombine.low %v921, %v937
          %v987 = vcombine.high %v921, %v937
          %v989 = vunpack.c.l.s4 1934713408
          %v990 = vunpack.c.0.s8 %v989
          %v991 = vlaneseq
          %v992 = vshrl.u32 %v991, 7
          %v993 = vsub.s32 %v990, %v992
          %v994 = vrot.slane %v986, %v993
          %v996 = vunpack.c.l.s4 1934713408
          %v997 = vunpack.c.0.s8 %v996
          %v998 = vlaneseq
          %v999 = vshrl.u32 %v998, 7
          %v1000 = vsub.s32 %v997, %v999
          %v1001 = vrot.slane %v987, %v1000
          %v1002 = vcombine.low %v946, %v978
          %v1003 = vcombine.high %v946, %v978
          %v1004 = vcombine.low %v953, %v985
          %v1005 = vcombine.high %v953, %v985
          %v1006 = vcombine.low %v962, %v994
          %v1007 = vcombine.high %v962, %v994
          %v1008 = vcombine.low %v969, %v1001
          %v1009 = vcombine.high %v969, %v1001
          %v1010 = vcombine.low %v1002, %v1004
          %v1011 = vcombine.high %v1002, %v1004
          %v1013 = vunpack.c.l.s4 1983009808
          %v1014 = vunpack.c.0.s8 %v1013
          %v1015 = vlaneseq
          %v1016 = vshrl.u32 %v1015, 7
          %v1017 = vsub.s32 %v1014, %v1016
          %v1018 = vrot.slane %v1010, %v1017
          %v1020 = vunpack.c.l.s4 1983009808
          %v1021 = vunpack.c.0.s8 %v1020
          %v1022 = vlaneseq
          %v1023 = vshrl.u32 %v1022, 7
          %v1024 = vsub.s32 %v1021, %v1023
          %v1025 = vrot.slane %v1011, %v1024
          %v1026 = vcombine.low %v1003, %v1005
          %v1027 = vcombine.high %v1003, %v1005
          %v1029 = vunpack.c.l.s4 1983009808
          %v1030 = vunpack.c.0.s8 %v1029
          %v1031 = vlaneseq
          %v1032 = vshrl.u32 %v1031, 7
          %v1033 = vsub.s32 %v1030, %v1032
          %v1034 = vrot.slane %v1026, %v1033
          %v1036 = vunpack.c.l.s4 1983009808
          %v1037 = vunpack.c.0.s8 %v1036
          %v1038 = vlaneseq
          %v1039 = vshrl.u32 %v1038, 7
          %v1040 = vsub.s32 %v1037, %v1039
          %v1041 = vrot.slane %v1027, %v1040
          %v1042 = vcombine.low %v1006, %v1008
          %v1043 = vcombine.high %v1006, %v1008
          %v1045 = vunpack.c.l.s4 1983009808
          %v1046 = vunpack.c.0.s8 %v1045
          %v1047 = vlaneseq
          %v1048 = vshrl.u32 %v1047, 7
          %v1049 = vsub.s32 %v1046, %v1048
          %v1050 = vrot.slane %v1042, %v1049
          %v1052 = vunpack.c.l.s4 1983009808
          %v1053 = vunpack.c.0.s8 %v1052
          %v1054 = vlaneseq
          %v1055 = vshrl.u32 %v1054, 7
          %v1056 = vsub.s32 %v1053, %v1055
          %v1057 = vrot.slane %v1043, %v1056
          %v1058 = vcombine.low %v1007, %v1009
          %v1059 = vcombine.high %v1007, %v1009
          %v1061 = vunpack.c.l.s4 1983009808
          %v1062 = vunpack.c.0.s8 %v1061
          %v1063 = vlaneseq
          %v1064 = vshrl.u32 %v1063, 7
          %v1065 = vsub.s32 %v1062, %v1064
          %v1066 = vrot.slane %v1058, %v1065
          %v1068 = vunpack.c.l.s4 1983009808
          %v1069 = vunpack.c.0.s8 %v1068
          %v1070 = vlaneseq
          %v1071 = vshrl.u32 %v1070, 7
          %v1072 = vsub.s32 %v1069, %v1071
          %v1073 = vrot.slane %v1059, %v1072
          %v1074 = vcombine.low %v1018, %v1034
          %v1075 = vcombine.high %v1018, %v1034
          %v1077 = vunpack.c.l.s4 1934713408
          %v1078 = vunpack.c.0.s8 %v1077
          %v1079 = vlaneseq
          %v1080 = vshrl.u32 %v1079, 7
          %v1081 = vsub.s32 %v1078, %v1080
          %v1082 = vrot.slane %v1074, %v1081
          %v1084 = vunpack.c.l.s4 1934713408
          %v1085 = vunpack.c.0.s8 %v1084
          %v1086 = vlaneseq
          %v1087 = vshrl.u32 %v1086, 7
          %v1088 = vsub.s32 %v1085, %v1087
          %v1089 = vrot.slane %v1075, %v1088
          %v1090 = vcombine.low %v1025, %v1041
          %v1091 = vcombine.high %v1025, %v1041
          %v1093 = vunpack.c.l.s4 1934713408
          %v1094 = vunpack.c.0.s8 %v1093
          %v1095 = vlaneseq
          %v1096 = vshrl.u32 %v1095, 7
          %v1097 = vsub.s32 %v1094, %v1096
          %v1098 = vrot.slane %v1090, %v1097
          %v1100 = vunpack.c.l.s4 1934713408
          %v1101 = vunpack.c.0.s8 %v1100
          %v1102 = vlaneseq
          %v1103 = vshrl.u32 %v1102, 7
          %v1104 = vsub.s32 %v1101, %v1103
          %v1105 = vrot.slane %v1091, %v1104
          %v1106 = vcombine.low %v1050, %v1066
          %v1107 = vcombine.high %v1050, %v1066
          %v1109 = vunpack.c.l.s4 1934713408
          %v1110 = vunpack.c.0.s8 %v1109
          %v1111 = vlaneseq
          %v1112 = vshrl.u32 %v1111, 7
          %v1113 = vsub.s32 %v1110, %v1112
          %v1114 = vrot.slane %v1106, %v1113
          %v1116 = vunpack.c.l.s4 1934713408
          %v1117 = vunpack.c.0.s8 %v1116
          %v1118 = vlaneseq
          %v1119 = vshrl.u32 %v1118, 7
          %v1120 = vsub.s32 %v1117, %v1119
          %v1121 = vrot.slane %v1107, %v1120
          %v1122 = vcombine.low %v1057, %v1073
          %v1123 = vcombine.high %v1057, %v1073
          %v1125 = vunpack.c.l.s4 1934713408
          %v1126 = vunpack.c.0.s8 %v1125
          %v1127 = vlaneseq
          %v1128 = vshrl.u32 %v1127, 7
          %v1129 = vsub.s32 %v1126, %v1128
          %v1130 = vrot.slane %v1122, %v1129
          %v1132 = vunpack.c.l.s4 1934713408
          %v1133 = vunpack.c.0.s8 %v1132
          %v1134 = vlaneseq
          %v1135 = vshrl.u32 %v1134, 7
          %v1136 = vsub.s32 %v1133, %v1135
          %v1137 = vrot.slane %v1123, %v1136
          %v1138 = vcombine.low %v1082, %v1114
          %v1139 = vcombine.high %v1082, %v1114
          %v1140 = vcombine.low %v1089, %v1121
          %v1141 = vcombine.high %v1089, %v1121
          %v1142 = vcombine.low %v1098, %v1130
          %v1143 = vcombine.high %v1098, %v1130
          %v1144 = vcombine.low %v1105, %v1137
          %v1145 = vcombine.high %v1105, %v1137
          %v1146 = vpack.c.bf16 %v1138, %v1138
          %v1147 = vpack.c.bf16 %v1139, %v1139
          %v1148 = vpack.c.bf16 %v1140, %v1140
          %v1149 = vpack.c.bf16 %v1141, %v1141
          %v1150 = vpack.c.bf16 %v1142, %v1142
          %v1151 = vpack.c.bf16 %v1143, %v1143
          %v1152 = vpack.c.bf16 %v1144, %v1144
          %v1153 = vpack.c.bf16 %v1145, %v1145
          %1154 = vst.msk [vmem:[#allocation3] sm:$0xf] %vm826, %v1146
          %1155 = vst.msk [vmem:[#allocation3 + $0x4] sm:$0xf] %vm826, %v1147
          %1156 = vst.msk [vmem:[#allocation3 + $0x8] sm:$0xf] %vm826, %v1148
          %1157 = vst.msk [vmem:[#allocation3 + $0xc] sm:$0xf] %vm826, %v1149
          %1158 = vst.msk [vmem:[#allocation3 + $0x10] sm:$0xf] %vm826, %v1150
          %1159 = vst.msk [vmem:[#allocation3 + $0x14] sm:$0xf] %vm826, %v1151
          %1160 = vst.msk [vmem:[#allocation3 + $0x18] sm:$0xf] %vm826, %v1152
          %1161 = vst.msk [vmem:[#allocation3 + $0x1c] sm:$0xf] %vm826, %v1153
        $region72: #{tpu_custom_call.1} parent=47 // pred_fallthru
          _
        %v1162 = vld [vmem:[%s373] sm:$0xff]
        %v1163 = vpack.c.bf16 %v1162, %v1162
        %v1164 = vld [vmem:[#allocation9] sm:$0xf]
        %v1165 = vld [vmem:[#allocation9 + $0x4] sm:$0xf]
        %v1166 = vld [vmem:[#allocation9 + $0x8] sm:$0xf]
        %v1167 = vld [vmem:[#allocation9 + $0xc] sm:$0xf]
        %v1168 = vlaneseq
        %v1169 = vshrl.u32 %v1168, 7
        %v1170 = vsub.s32 0, %v1169
        %v1171 = vrot.slane %v444, %v1170
        %v1176 = vunpack.c.l.b16 %v1164
        %v1177 = vunpack.c.l.b16 %v1165
        %v1178 = vunpack.c.l.b16 %v1166
        %v1179 = vunpack.c.l.b16 %v1167
        %v1180 = vpack.c.b16 %v1177, %v1176
        %v1181 = vpack.c.b16 %v1179, %v1178
        %vm1184 = vcmask 261120
        %v1186 = vsel %vm1184, %v1163, 0
        %1188 = vmatprep.subr.bf16.mxu0 0
        %1189 = vmatpush1.bf16.msra.mxu0 %v1180
        %1190 = vmatprep.subr.bf16.mxu0 0
        %1191 = vmatpush1.bf16.msra.mxu0 %v1181
        %1192 = vmatprep.subr.bf16.mxu0 0
        %1193 = vmatpush1.bf16.msra.mxu0 0
        %1194 = vmatprep.subr.bf16.mxu0 0
        %1195 = vmatpush1.bf16.msra.mxu0 0
        %1196 = vmatprep.subr.bf16.mxu0 0
        %1197 = vmatpush1.bf16.msra.mxu0 0
        %1198 = vmatprep.subr.bf16.mxu0 0
        %1199 = vmatpush1.bf16.msra.mxu0 0
        %1200 = vmatprep.subr.bf16.mxu0 0
        %1201 = vmatpush1.bf16.msra.mxu0 0
        %1202 = vmatprep.subr.bf16.mxu0 0
        %1203 = vmatpush1.bf16.msra.mxu0 0
        %1204 = vmatprep.subr.bf16.mxu0 0
        %1205 = vmatpush1.bf16.msra.mxu0 0
        %1206 = vmatprep.subr.bf16.mxu0 0
        %1207 = vmatpush1.bf16.msra.mxu0 0
        %1208 = vmatprep.subr.bf16.mxu0 0
        %1209 = vmatpush1.bf16.msra.mxu0 0
        %1210 = vmatprep.subr.bf16.mxu0 0
        %1211 = vmatpush1.bf16.msra.mxu0 0
        %1212 = vmatprep.subr.bf16.mxu0 0
        %1213 = vmatpush1.bf16.msra.mxu0 0
        %1214 = vmatprep.subr.bf16.mxu0 0
        %1215 = vmatpush1.bf16.msra.mxu0 0
        %1216 = vmatprep.subr.bf16.mxu0 0
        %1217 = vmatpush1.bf16.msra.mxu0 0
        %1218 = vmatprep.subr.bf16.mxu0 0
        %1219 = vmatpush1.bf16.msra.mxu0 0
        %1220 = vmatprep.mubr.bf16.mxu0 0
        %1221 = vmatmul.mubr.bf16.gmra.mrb[0].mxu0 %v1186
        %v1222 = vpop.f32.mrb[0].mxu0
        %v1223 = vadd.f32 %v1171, %v1222
        %v1224 = vpop.f32.mrb[0].mxu0
        %v1225 = vpop.f32.mrb[0].mxu0
        %v1226 = vpop.f32.mrb[0].mxu0
        %1227 = vdwg.mxu0
        %1229 = vrot.lane.b32.xlu0 %v1223, 124
        %v1230 = vpop.permute.xlu0 %1229
        %1232 = vrot.lane.b32.xlu0 %v1223, 120
        %v1233 = vpop.permute.xlu0 %1232
        %1235 = vrot.lane.b32.xlu0 %v1223, 116
        %v1236 = vpop.permute.xlu0 %1235
        %1238 = vrot.lane.b32.xlu0 %v1223, 112
        %v1239 = vpop.permute.xlu0 %1238
        %1241 = vrot.lane.b32.xlu0 %v1223, 108
        %v1242 = vpop.permute.xlu0 %1241
        %1244 = vrot.lane.b32.xlu0 %v1223, 104
        %v1245 = vpop.permute.xlu0 %1244
        %1247 = vrot.lane.b32.xlu0 %v1223, 100
        %v1248 = vpop.permute.xlu0 %1247
        %v1250 = vcombine.low %v1223, %v1233
        %v1251 = vcombine.high %v1223, %v1233
        %v1253 = vunpack.c.l.s4 1983009808
        %v1254 = vunpack.c.0.s8 %v1253
        %v1255 = vlaneseq
        %v1256 = vshrl.u32 %v1255, 7
        %v1257 = vsub.s32 %v1254, %v1256
        %v1258 = vrot.slane %v1250, %v1257
        %v1260 = vunpack.c.l.s4 1983009808
        %v1261 = vunpack.c.0.s8 %v1260
        %v1262 = vlaneseq
        %v1263 = vshrl.u32 %v1262, 7
        %v1264 = vsub.s32 %v1261, %v1263
        %v1265 = vrot.slane %v1251, %v1264
        %v1266 = vcombine.low %v1230, %v1236
        %v1267 = vcombine.high %v1230, %v1236
        %v1269 = vunpack.c.l.s4 1983009808
        %v1270 = vunpack.c.0.s8 %v1269
        %v1271 = vlaneseq
        %v1272 = vshrl.u32 %v1271, 7
        %v1273 = vsub.s32 %v1270, %v1272
        %v1274 = vrot.slane %v1266, %v1273
        %v1276 = vunpack.c.l.s4 1983009808
        %v1277 = vunpack.c.0.s8 %v1276
        %v1278 = vlaneseq
        %v1279 = vshrl.u32 %v1278, 7
        %v1280 = vsub.s32 %v1277, %v1279
        %v1281 = vrot.slane %v1267, %v1280
        %v1282 = vcombine.low %v1239, %v1245
        %v1283 = vcombine.high %v1239, %v1245
        %v1285 = vunpack.c.l.s4 1983009808
        %v1286 = vunpack.c.0.s8 %v1285
        %v1287 = vlaneseq
        %v1288 = vshrl.u32 %v1287, 7
        %v1289 = vsub.s32 %v1286, %v1288
        %v1290 = vrot.slane %v1282, %v1289
        %v1292 = vunpack.c.l.s4 1983009808
        %v1293 = vunpack.c.0.s8 %v1292
        %v1294 = vlaneseq
        %v1295 = vshrl.u32 %v1294, 7
        %v1296 = vsub.s32 %v1293, %v1295
        %v1297 = vrot.slane %v1283, %v1296
        %v1298 = vcombine.low %v1242, %v1248
        %v1299 = vcombine.high %v1242, %v1248
        %v1301 = vunpack.c.l.s4 1983009808
        %v1302 = vunpack.c.0.s8 %v1301
        %v1303 = vlaneseq
        %v1304 = vshrl.u32 %v1303, 7
        %v1305 = vsub.s32 %v1302, %v1304
        %v1306 = vrot.slane %v1298, %v1305
        %v1308 = vunpack.c.l.s4 1983009808
        %v1309 = vunpack.c.0.s8 %v1308
        %v1310 = vlaneseq
        %v1311 = vshrl.u32 %v1310, 7
        %v1312 = vsub.s32 %v1309, %v1311
        %v1313 = vrot.slane %v1299, %v1312
        %v1314 = vcombine.low %v1258, %v1274
        %v1315 = vcombine.high %v1258, %v1274
        %v1317 = vunpack.c.l.s4 1934713408
        %v1318 = vunpack.c.0.s8 %v1317
        %v1319 = vlaneseq
        %v1320 = vshrl.u32 %v1319, 7
        %v1321 = vsub.s32 %v1318, %v1320
        %v1322 = vrot.slane %v1314, %v1321
        %v1324 = vunpack.c.l.s4 1934713408
        %v1325 = vunpack.c.0.s8 %v1324
        %v1326 = vlaneseq
        %v1327 = vshrl.u32 %v1326, 7
        %v1328 = vsub.s32 %v1325, %v1327
        %v1329 = vrot.slane %v1315, %v1328
        %v1330 = vcombine.low %v1265, %v1281
        %v1331 = vcombine.high %v1265, %v1281
        %v1333 = vunpack.c.l.s4 1934713408
        %v1334 = vunpack.c.0.s8 %v1333
        %v1335 = vlaneseq
        %v1336 = vshrl.u32 %v1335, 7
        %v1337 = vsub.s32 %v1334, %v1336
        %v1338 = vrot.slane %v1330, %v1337
        %v1340 = vunpack.c.l.s4 1934713408
        %v1341 = vunpack.c.0.s8 %v1340
        %v1342 = vlaneseq
        %v1343 = vshrl.u32 %v1342, 7
        %v1344 = vsub.s32 %v1341, %v1343
        %v1345 = vrot.slane %v1331, %v1344
        %v1346 = vcombine.low %v1290, %v1306
        %v1347 = vcombine.high %v1290, %v1306
        %v1349 = vunpack.c.l.s4 1934713408
        %v1350 = vunpack.c.0.s8 %v1349
        %v1351 = vlaneseq
        %v1352 = vshrl.u32 %v1351, 7
        %v1353 = vsub.s32 %v1350, %v1352
        %v1354 = vrot.slane %v1346, %v1353
        %v1356 = vunpack.c.l.s4 1934713408
        %v1357 = vunpack.c.0.s8 %v1356
        %v1358 = vlaneseq
        %v1359 = vshrl.u32 %v1358, 7
        %v1360 = vsub.s32 %v1357, %v1359
        %v1361 = vrot.slane %v1347, %v1360
        %v1362 = vcombine.low %v1297, %v1313
        %v1363 = vcombine.high %v1297, %v1313
        %v1365 = vunpack.c.l.s4 1934713408
        %v1366 = vunpack.c.0.s8 %v1365
        %v1367 = vlaneseq
        %v1368 = vshrl.u32 %v1367, 7
        %v1369 = vsub.s32 %v1366, %v1368
        %v1370 = vrot.slane %v1362, %v1369
        %v1372 = vunpack.c.l.s4 1934713408
        %v1373 = vunpack.c.0.s8 %v1372
        %v1374 = vlaneseq
        %v1375 = vshrl.u32 %v1374, 7
        %v1376 = vsub.s32 %v1373, %v1375
        %v1377 = vrot.slane %v1363, %v1376
        %v1378 = vcombine.low %v1322, %v1354
        %v1379 = vcombine.high %v1322, %v1354
        %v1380 = vcombine.low %v1329, %v1361
        %v1381 = vcombine.high %v1329, %v1361
        %v1382 = vcombine.low %v1338, %v1370
        %v1383 = vcombine.high %v1338, %v1370
        %v1384 = vcombine.low %v1345, %v1377
        %v1385 = vcombine.high %v1345, %v1377
        %v1386 = vcombine.low %v1378, %v1380
        %v1387 = vcombine.high %v1378, %v1380
        %v1389 = vunpack.c.l.s4 1983009808
        %v1390 = vunpack.c.0.s8 %v1389
        %v1391 = vlaneseq
        %v1392 = vshrl.u32 %v1391, 7
        %v1393 = vsub.s32 %v1390, %v1392
        %v1394 = vrot.slane %v1386, %v1393
        %v1396 = vunpack.c.l.s4 1983009808
        %v1397 = vunpack.c.0.s8 %v1396
        %v1398 = vlaneseq
        %v1399 = vshrl.u32 %v1398, 7
        %v1400 = vsub.s32 %v1397, %v1399
        %v1401 = vrot.slane %v1387, %v1400
        %v1402 = vcombine.low %v1379, %v1381
        %v1403 = vcombine.high %v1379, %v1381
        %v1405 = vunpack.c.l.s4 1983009808
        %v1406 = vunpack.c.0.s8 %v1405
        %v1407 = vlaneseq
        %v1408 = vshrl.u32 %v1407, 7
        %v1409 = vsub.s32 %v1406, %v1408
        %v1410 = vrot.slane %v1402, %v1409
        %v1412 = vunpack.c.l.s4 1983009808
        %v1413 = vunpack.c.0.s8 %v1412
        %v1414 = vlaneseq
        %v1415 = vshrl.u32 %v1414, 7
        %v1416 = vsub.s32 %v1413, %v1415
        %v1417 = vrot.slane %v1403, %v1416
        %v1418 = vcombine.low %v1382, %v1384
        %v1419 = vcombine.high %v1382, %v1384
        %v1421 = vunpack.c.l.s4 1983009808
        %v1422 = vunpack.c.0.s8 %v1421
        %v1423 = vlaneseq
        %v1424 = vshrl.u32 %v1423, 7
        %v1425 = vsub.s32 %v1422, %v1424
        %v1426 = vrot.slane %v1418, %v1425
        %v1428 = vunpack.c.l.s4 1983009808
        %v1429 = vunpack.c.0.s8 %v1428
        %v1430 = vlaneseq
        %v1431 = vshrl.u32 %v1430, 7
        %v1432 = vsub.s32 %v1429, %v1431
        %v1433 = vrot.slane %v1419, %v1432
        %v1434 = vcombine.low %v1383, %v1385
        %v1435 = vcombine.high %v1383, %v1385
        %v1437 = vunpack.c.l.s4 1983009808
        %v1438 = vunpack.c.0.s8 %v1437
        %v1439 = vlaneseq
        %v1440 = vshrl.u32 %v1439, 7
        %v1441 = vsub.s32 %v1438, %v1440
        %v1442 = vrot.slane %v1434, %v1441
        %v1444 = vunpack.c.l.s4 1983009808
        %v1445 = vunpack.c.0.s8 %v1444
        %v1446 = vlaneseq
        %v1447 = vshrl.u32 %v1446, 7
        %v1448 = vsub.s32 %v1445, %v1447
        %v1449 = vrot.slane %v1435, %v1448
        %v1450 = vcombine.low %v1394, %v1410
        %v1451 = vcombine.high %v1394, %v1410
        %v1453 = vunpack.c.l.s4 1934713408
        %v1454 = vunpack.c.0.s8 %v1453
        %v1455 = vlaneseq
        %v1456 = vshrl.u32 %v1455, 7
        %v1457 = vsub.s32 %v1454, %v1456
        %v1458 = vrot.slane %v1450, %v1457
        %v1460 = vunpack.c.l.s4 1934713408
        %v1461 = vunpack.c.0.s8 %v1460
        %v1462 = vlaneseq
        %v1463 = vshrl.u32 %v1462, 7
        %v1464 = vsub.s32 %v1461, %v1463
        %v1465 = vrot.slane %v1451, %v1464
        %v1466 = vcombine.low %v1401, %v1417
        %v1467 = vcombine.high %v1401, %v1417
        %v1469 = vunpack.c.l.s4 1934713408
        %v1470 = vunpack.c.0.s8 %v1469
        %v1471 = vlaneseq
        %v1472 = vshrl.u32 %v1471, 7
        %v1473 = vsub.s32 %v1470, %v1472
        %v1474 = vrot.slane %v1466, %v1473
        %v1476 = vunpack.c.l.s4 1934713408
        %v1477 = vunpack.c.0.s8 %v1476
        %v1478 = vlaneseq
        %v1479 = vshrl.u32 %v1478, 7
        %v1480 = vsub.s32 %v1477, %v1479
        %v1481 = vrot.slane %v1467, %v1480
        %v1482 = vcombine.low %v1426, %v1442
        %v1483 = vcombine.high %v1426, %v1442
        %v1485 = vunpack.c.l.s4 1934713408
        %v1486 = vunpack.c.0.s8 %v1485
        %v1487 = vlaneseq
        %v1488 = vshrl.u32 %v1487, 7
        %v1489 = vsub.s32 %v1486, %v1488
        %v1490 = vrot.slane %v1482, %v1489
        %v1492 = vunpack.c.l.s4 1934713408
        %v1493 = vunpack.c.0.s8 %v1492
        %v1494 = vlaneseq
        %v1495 = vshrl.u32 %v1494, 7
        %v1496 = vsub.s32 %v1493, %v1495
        %v1497 = vrot.slane %v1483, %v1496
        %v1498 = vcombine.low %v1433, %v1449
        %v1499 = vcombine.high %v1433, %v1449
        %v1501 = vunpack.c.l.s4 1934713408
        %v1502 = vunpack.c.0.s8 %v1501
        %v1503 = vlaneseq
        %v1504 = vshrl.u32 %v1503, 7
        %v1505 = vsub.s32 %v1502, %v1504
        %v1506 = vrot.slane %v1498, %v1505
        %v1508 = vunpack.c.l.s4 1934713408
        %v1509 = vunpack.c.0.s8 %v1508
        %v1510 = vlaneseq
        %v1511 = vshrl.u32 %v1510, 7
        %v1512 = vsub.s32 %v1509, %v1511
        %v1513 = vrot.slane %v1499, %v1512
        %v1514 = vcombine.low %v1458, %v1490
        %v1515 = vcombine.high %v1458, %v1490
        %v1516 = vcombine.low %v1465, %v1497
        %v1517 = vcombine.high %v1465, %v1497
        %v1518 = vcombine.low %v1474, %v1506
        %v1519 = vcombine.high %v1474, %v1506
        %v1520 = vcombine.low %v1481, %v1513
        %v1521 = vcombine.high %v1481, %v1513
        %v1522 = vpack.c.bf16 %v1514, %v1514
        %v1523 = vpack.c.bf16 %v1515, %v1515
        %v1524 = vpack.c.bf16 %v1516, %v1516
        %v1525 = vpack.c.bf16 %v1517, %v1517
        %v1526 = vpack.c.bf16 %v1518, %v1518
        %v1527 = vpack.c.bf16 %v1519, %v1519
        %v1528 = vpack.c.bf16 %v1520, %v1520
        %v1529 = vpack.c.bf16 %v1521, %v1521
        %v1530 = vld [vmem:[#allocation2] sm:$0xf]
        %v1531 = vld [vmem:[#allocation2 + $0x4] sm:$0xf]
        %v1532 = vld [vmem:[#allocation2 + $0x8] sm:$0xf]
        %v1533 = vld [vmem:[#allocation2 + $0xc] sm:$0xf]
        %v1534 = vld [vmem:[#allocation2 + $0x10] sm:$0xf]
        %v1535 = vld [vmem:[#allocation2 + $0x14] sm:$0xf]
        %v1536 = vld [vmem:[#allocation2 + $0x18] sm:$0xf]
        %v1537 = vld [vmem:[#allocation2 + $0x1c] sm:$0xf]
        %v1538 = vld [vmem:[%s442] sm:$0x1]
        %v1540 = vlaneseq
        %v1541 = vshrl.u32 %v1540, 7
        %v1542 = vsub.s32 0, %v1541
        %v1543 = vrot.slane %v1538, %v1542
        %vm1545 = vcmask 31744
        %v1547 = vsel %vm1545, %v1522, 0
        %v1550 = vsel %vm1545, %v1530, 0
        %1552 = vmatprep.subr.bf16.mxu0 0
        %1553 = vmatpush1.bf16.xpose.msra.mxu0 %v1550
        %1554 = vmatprep.subr.bf16.mxu0 0
        %1555 = vmatpush1.bf16.xpose.msra.mxu0 0
        %1556 = vmatprep.subr.bf16.mxu0 0
        %1557 = vmatpush1.bf16.xpose.msra.mxu0 0
        %1558 = vmatprep.subr.bf16.mxu0 0
        %1559 = vmatpush1.bf16.xpose.msra.mxu0 0
        %1560 = vmatprep.subr.bf16.mxu0 0
        %1561 = vmatpush1.bf16.xpose.msra.mxu0 0
        %1562 = vmatprep.subr.bf16.mxu0 0
        %1563 = vmatpush1.bf16.xpose.msra.mxu0 0
        %1564 = vmatprep.subr.bf16.mxu0 0
        %1565 = vmatpush1.bf16.xpose.msra.mxu0 0
        %1566 = vmatprep.subr.bf16.mxu0 0
        %1567 = vmatpush1.bf16.xpose.msra.mxu0 0
        %1568 = vmatprep.subr.bf16.mxu0 0
        %1569 = vmatpush1.bf16.xpose.msra.mxu0 0
        %1570 = vmatprep.subr.bf16.mxu0 0
        %1571 = vmatpush1.bf16.xpose.msra.mxu0 0
        %1572 = vmatprep.subr.bf16.mxu0 0
        %1573 = vmatpush1.bf16.xpose.msra.mxu0 0
        %1574 = vmatprep.subr.bf16.mxu0 0
        %1575 = vmatpush1.bf16.xpose.msra.mxu0 0
        %1576 = vmatprep.subr.bf16.mxu0 0
        %1577 = vmatpush1.bf16.xpose.msra.mxu0 0
        %1578 = vmatprep.subr.bf16.mxu0 0
        %1579 = vmatpush1.bf16.xpose.msra.mxu0 0
        %1580 = vmatprep.subr.bf16.mxu0 0
        %1581 = vmatpush1.bf16.xpose.msra.mxu0 0
        %1582 = vmatprep.subr.bf16.mxu0 0
        %1583 = vmatpush1.bf16.xpose.msra.mxu0 0
        %1584 = vmatprep.mubr.bf16.mxu0 0
        %1585 = vmatmul.mubr.bf16.gmra.mrb[0].mxu0 %v1547
        %v1586 = vpop.f32.mrb[0].mxu0
        %v1587 = vadd.f32 %v1543, %v1586
        %v1588 = vpop.f32.mrb[0].mxu0
        %v1589 = vpop.f32.mrb[0].mxu0
        %v1590 = vpop.f32.mrb[0].mxu0
        %1591 = vdwg.mxu0
        %v1593 = vsel %vm1545, %v1523, 0
        %v1596 = vsel %vm1545, %v1531, 0
        %1598 = vmatprep.subr.bf16.mxu0 0
        %1599 = vmatpush1.bf16.xpose.msra.mxu0 %v1596
        %1600 = vmatprep.subr.bf16.mxu0 0
        %1601 = vmatpush1.bf16.xpose.msra.mxu0 0
        %1602 = vmatprep.subr.bf16.mxu0 0
        %1603 = vmatpush1.bf16.xpose.msra.mxu0 0
        %1604 = vmatprep.subr.bf16.mxu0 0
        %1605 = vmatpush1.bf16.xpose.msra.mxu0 0
        %1606 = vmatprep.subr.bf16.mxu0 0
        %1607 = vmatpush1.bf16.xpose.msra.mxu0 0
        %1608 = vmatprep.subr.bf16.mxu0 0
        %1609 = vmatpush1.bf16.xpose.msra.mxu0 0
        %1610 = vmatprep.subr.bf16.mxu0 0
        %1611 = vmatpush1.bf16.xpose.msra.mxu0 0
        %1612 = vmatprep.subr.bf16.mxu0 0
        %1613 = vmatpush1.bf16.xpose.msra.mxu0 0
        %1614 = vmatprep.subr.bf16.mxu0 0
        %1615 = vmatpush1.bf16.xpose.msra.mxu0 0
        %1616 = vmatprep.subr.bf16.mxu0 0
        %1617 = vmatpush1.bf16.xpose.msra.mxu0 0
        %1618 = vmatprep.subr.bf16.mxu0 0
        %1619 = vmatpush1.bf16.xpose.msra.mxu0 0
        %1620 = vmatprep.subr.bf16.mxu0 0
        %1621 = vmatpush1.bf16.xpose.msra.mxu0 0
        %1622 = vmatprep.subr.bf16.mxu0 0
        %1623 = vmatpush1.bf16.xpose.msra.mxu0 0
        %1624 = vmatprep.subr.bf16.mxu0 0
        %1625 = vmatpush1.bf16.xpose.msra.mxu0 0
        %1626 = vmatprep.subr.bf16.mxu0 0
        %1627 = vmatpush1.bf16.xpose.msra.mxu0 0
        %1628 = vmatprep.subr.bf16.mxu0 0
        %1629 = vmatpush1.bf16.xpose.msra.mxu0 0
        %1630 = vmatprep.mubr.bf16.mxu0 0
        %1631 = vmatmul.mubr.bf16.gmra.mrb[0].mxu0 %v1593
        %v1632 = vpop.f32.mrb[0].mxu0
        %v1633 = vadd.f32 %v1543, %v1632
        %v1634 = vpop.f32.mrb[0].mxu0
        %v1635 = vpop.f32.mrb[0].mxu0
        %v1636 = vpop.f32.mrb[0].mxu0
        %1637 = vdwg.mxu0
        %v1639 = vsel %vm1545, %v1524, 0
        %v1642 = vsel %vm1545, %v1532, 0
        %1644 = vmatprep.subr.bf16.mxu0 0
        %1645 = vmatpush1.bf16.xpose.msra.mxu0 %v1642
        %1646 = vmatprep.subr.bf16.mxu0 0
        %1647 = vmatpush1.bf16.xpose.msra.mxu0 0
        %1648 = vmatprep.subr.bf16.mxu0 0
        %1649 = vmatpush1.bf16.xpose.msra.mxu0 0
        %1650 = vmatprep.subr.bf16.mxu0 0
        %1651 = vmatpush1.bf16.xpose.msra.mxu0 0
        %1652 = vmatprep.subr.bf16.mxu0 0
        %1653 = vmatpush1.bf16.xpose.msra.mxu0 0
        %1654 = vmatprep.subr.bf16.mxu0 0
        %1655 = vmatpush1.bf16.xpose.msra.mxu0 0
        %1656 = vmatprep.subr.bf16.mxu0 0
        %1657 = vmatpush1.bf16.xpose.msra.mxu0 0
        %1658 = vmatprep.subr.bf16.mxu0 0
        %1659 = vmatpush1.bf16.xpose.msra.mxu0 0
        %1660 = vmatprep.subr.bf16.mxu0 0
        %1661 = vmatpush1.bf16.xpose.msra.mxu0 0
        %1662 = vmatprep.subr.bf16.mxu0 0
        %1663 = vmatpush1.bf16.xpose.msra.mxu0 0
        %1664 = vmatprep.subr.bf16.mxu0 0
        %1665 = vmatpush1.bf16.xpose.msra.mxu0 0
        %1666 = vmatprep.subr.bf16.mxu0 0
        %1667 = vmatpush1.bf16.xpose.msra.mxu0 0
        %1668 = vmatprep.subr.bf16.mxu0 0
        %1669 = vmatpush1.bf16.xpose.msra.mxu0 0
        %1670 = vmatprep.subr.bf16.mxu0 0
        %1671 = vmatpush1.bf16.xpose.msra.mxu0 0
        %1672 = vmatprep.subr.bf16.mxu0 0
        %1673 = vmatpush1.bf16.xpose.msra.mxu0 0
        %1674 = vmatprep.subr.bf16.mxu0 0
        %1675 = vmatpush1.bf16.xpose.msra.mxu0 0
        %1676 = vmatprep.mubr.bf16.mxu0 0
        %1677 = vmatmul.mubr.bf16.gmra.mrb[0].mxu0 %v1639
        %v1678 = vpop.f32.mrb[0].mxu0
        %v1679 = vadd.f32 %v1543, %v1678
        %v1680 = vpop.f32.mrb[0].mxu0
        %v1681 = vpop.f32.mrb[0].mxu0
        %v1682 = vpop.f32.mrb[0].mxu0
        %1683 = vdwg.mxu0
        %v1685 = vsel %vm1545, %v1525, 0
        %v1688 = vsel %vm1545, %v1533, 0
        %1690 = vmatprep.subr.bf16.mxu0 0
        %1691 = vmatpush1.bf16.xpose.msra.mxu0 %v1688
        %1692 = vmatprep.subr.bf16.mxu0 0
        %1693 = vmatpush1.bf16.xpose.msra.mxu0 0
        %1694 = vmatprep.subr.bf16.mxu0 0
        %1695 = vmatpush1.bf16.xpose.msra.mxu0 0
        %1696 = vmatprep.subr.bf16.mxu0 0
        %1697 = vmatpush1.bf16.xpose.msra.mxu0 0
        %1698 = vmatprep.subr.bf16.mxu0 0
        %1699 = vmatpush1.bf16.xpose.msra.mxu0 0
        %1700 = vmatprep.subr.bf16.mxu0 0
        %1701 = vmatpush1.bf16.xpose.msra.mxu0 0
        %1702 = vmatprep.subr.bf16.mxu0 0
        %1703 = vmatpush1.bf16.xpose.msra.mxu0 0
        %1704 = vmatprep.subr.bf16.mxu0 0
        %1705 = vmatpush1.bf16.xpose.msra.mxu0 0
        %1706 = vmatprep.subr.bf16.mxu0 0
        %1707 = vmatpush1.bf16.xpose.msra.mxu0 0
        %1708 = vmatprep.subr.bf16.mxu0 0
        %1709 = vmatpush1.bf16.xpose.msra.mxu0 0
        %1710 = vmatprep.subr.bf16.mxu0 0
        %1711 = vmatpush1.bf16.xpose.msra.mxu0 0
        %1712 = vmatprep.subr.bf16.mxu0 0
        %1713 = vmatpush1.bf16.xpose.msra.mxu0 0
        %1714 = vmatprep.subr.bf16.mxu0 0
        %1715 = vmatpush1.bf16.xpose.msra.mxu0 0
        %1716 = vmatprep.subr.bf16.mxu0 0
        %1717 = vmatpush1.bf16.xpose.msra.mxu0 0
        %1718 = vmatprep.subr.bf16.mxu0 0
        %1719 = vmatpush1.bf16.xpose.msra.mxu0 0
        %1720 = vmatprep.subr.bf16.mxu0 0
        %1721 = vmatpush1.bf16.xpose.msra.mxu0 0
        %1722 = vmatprep.mubr.bf16.mxu0 0
        %1723 = vmatmul.mubr.bf16.gmra.mrb[0].mxu0 %v1685
        %v1724 = vpop.f32.mrb[0].mxu0
        %v1725 = vadd.f32 %v1543, %v1724
        %v1726 = vpop.f32.mrb[0].mxu0
        %v1727 = vpop.f32.mrb[0].mxu0
        %v1728 = vpop.f32.mrb[0].mxu0
        %1729 = vdwg.mxu0
        %v1731 = vsel %vm1545, %v1526, 0
        %v1734 = vsel %vm1545, %v1534, 0
        %1736 = vmatprep.subr.bf16.mxu0 0
        %1737 = vmatpush1.bf16.xpose.msra.mxu0 %v1734
        %1738 = vmatprep.subr.bf16.mxu0 0
        %1739 = vmatpush1.bf16.xpose.msra.mxu0 0
        %1740 = vmatprep.subr.bf16.mxu0 0
        %1741 = vmatpush1.bf16.xpose.msra.mxu0 0
        %1742 = vmatprep.subr.bf16.mxu0 0
        %1743 = vmatpush1.bf16.xpose.msra.mxu0 0
        %1744 = vmatprep.subr.bf16.mxu0 0
        %1745 = vmatpush1.bf16.xpose.msra.mxu0 0
        %1746 = vmatprep.subr.bf16.mxu0 0
        %1747 = vmatpush1.bf16.xpose.msra.mxu0 0
        %1748 = vmatprep.subr.bf16.mxu0 0
        %1749 = vmatpush1.bf16.xpose.msra.mxu0 0
        %1750 = vmatprep.subr.bf16.mxu0 0
        %1751 = vmatpush1.bf16.xpose.msra.mxu0 0
        %1752 = vmatprep.subr.bf16.mxu0 0
        %1753 = vmatpush1.bf16.xpose.msra.mxu0 0
        %1754 = vmatprep.subr.bf16.mxu0 0
        %1755 = vmatpush1.bf16.xpose.msra.mxu0 0
        %1756 = vmatprep.subr.bf16.mxu0 0
        %1757 = vmatpush1.bf16.xpose.msra.mxu0 0
        %1758 = vmatprep.subr.bf16.mxu0 0
        %1759 = vmatpush1.bf16.xpose.msra.mxu0 0
        %1760 = vmatprep.subr.bf16.mxu0 0
        %1761 = vmatpush1.bf16.xpose.msra.mxu0 0
        %1762 = vmatprep.subr.bf16.mxu0 0
        %1763 = vmatpush1.bf16.xpose.msra.mxu0 0
        %1764 = vmatprep.subr.bf16.mxu0 0
        %1765 = vmatpush1.bf16.xpose.msra.mxu0 0
        %1766 = vmatprep.subr.bf16.mxu0 0
        %1767 = vmatpush1.bf16.xpose.msra.mxu0 0
        %1768 = vmatprep.mubr.bf16.mxu0 0
        %1769 = vmatmul.mubr.bf16.gmra.mrb[0].mxu0 %v1731
        %v1770 = vpop.f32.mrb[0].mxu0
        %v1771 = vadd.f32 %v1543, %v1770
        %v1772 = vpop.f32.mrb[0].mxu0
        %v1773 = vpop.f32.mrb[0].mxu0
        %v1774 = vpop.f32.mrb[0].mxu0
        %1775 = vdwg.mxu0
        %v1777 = vsel %vm1545, %v1527, 0
        %v1780 = vsel %vm1545, %v1535, 0
        %1782 = vmatprep.subr.bf16.mxu0 0
        %1783 = vmatpush1.bf16.xpose.msra.mxu0 %v1780
        %1784 = vmatprep.subr.bf16.mxu0 0
        %1785 = vmatpush1.bf16.xpose.msra.mxu0 0
        %1786 = vmatprep.subr.bf16.mxu0 0
        %1787 = vmatpush1.bf16.xpose.msra.mxu0 0
        %1788 = vmatprep.subr.bf16.mxu0 0
        %1789 = vmatpush1.bf16.xpose.msra.mxu0 0
        %1790 = vmatprep.subr.bf16.mxu0 0
        %1791 = vmatpush1.bf16.xpose.msra.mxu0 0
        %1792 = vmatprep.subr.bf16.mxu0 0
        %1793 = vmatpush1.bf16.xpose.msra.mxu0 0
        %1794 = vmatprep.subr.bf16.mxu0 0
        %1795 = vmatpush1.bf16.xpose.msra.mxu0 0
        %1796 = vmatprep.subr.bf16.mxu0 0
        %1797 = vmatpush1.bf16.xpose.msra.mxu0 0
        %1798 = vmatprep.subr.bf16.mxu0 0
        %1799 = vmatpush1.bf16.xpose.msra.mxu0 0
        %1800 = vmatprep.subr.bf16.mxu0 0
        %1801 = vmatpush1.bf16.xpose.msra.mxu0 0
        %1802 = vmatprep.subr.bf16.mxu0 0
        %1803 = vmatpush1.bf16.xpose.msra.mxu0 0
        %1804 = vmatprep.subr.bf16.mxu0 0
        %1805 = vmatpush1.bf16.xpose.msra.mxu0 0
        %1806 = vmatprep.subr.bf16.mxu0 0
        %1807 = vmatpush1.bf16.xpose.msra.mxu0 0
        %1808 = vmatprep.subr.bf16.mxu0 0
        %1809 = vmatpush1.bf16.xpose.msra.mxu0 0
        %1810 = vmatprep.subr.bf16.mxu0 0
        %1811 = vmatpush1.bf16.xpose.msra.mxu0 0
        %1812 = vmatprep.subr.bf16.mxu0 0
        %1813 = vmatpush1.bf16.xpose.msra.mxu0 0
        %1814 = vmatprep.mubr.bf16.mxu0 0
        %1815 = vmatmul.mubr.bf16.gmra.mrb[0].mxu0 %v1777
        %v1816 = vpop.f32.mrb[0].mxu0
        %v1817 = vadd.f32 %v1543, %v1816
        %v1818 = vpop.f32.mrb[0].mxu0
        %v1819 = vpop.f32.mrb[0].mxu0
        %v1820 = vpop.f32.mrb[0].mxu0
        %1821 = vdwg.mxu0
        %v1823 = vsel %vm1545, %v1528, 0
        %v1826 = vsel %vm1545, %v1536, 0
        %1828 = vmatprep.subr.bf16.mxu0 0
        %1829 = vmatpush1.bf16.xpose.msra.mxu0 %v1826
        %1830 = vmatprep.subr.bf16.mxu0 0
        %1831 = vmatpush1.bf16.xpose.msra.mxu0 0
        %1832 = vmatprep.subr.bf16.mxu0 0
        %1833 = vmatpush1.bf16.xpose.msra.mxu0 0
        %1834 = vmatprep.subr.bf16.mxu0 0
        %1835 = vmatpush1.bf16.xpose.msra.mxu0 0
        %1836 = vmatprep.subr.bf16.mxu0 0
        %1837 = vmatpush1.bf16.xpose.msra.mxu0 0
        %1838 = vmatprep.subr.bf16.mxu0 0
        %1839 = vmatpush1.bf16.xpose.msra.mxu0 0
        %1840 = vmatprep.subr.bf16.mxu0 0
        %1841 = vmatpush1.bf16.xpose.msra.mxu0 0
        %1842 = vmatprep.subr.bf16.mxu0 0
        %1843 = vmatpush1.bf16.xpose.msra.mxu0 0
        %1844 = vmatprep.subr.bf16.mxu0 0
        %1845 = vmatpush1.bf16.xpose.msra.mxu0 0
        %1846 = vmatprep.subr.bf16.mxu0 0
        %1847 = vmatpush1.bf16.xpose.msra.mxu0 0
        %1848 = vmatprep.subr.bf16.mxu0 0
        %1849 = vmatpush1.bf16.xpose.msra.mxu0 0
        %1850 = vmatprep.subr.bf16.mxu0 0
        %1851 = vmatpush1.bf16.xpose.msra.mxu0 0
        %1852 = vmatprep.subr.bf16.mxu0 0
        %1853 = vmatpush1.bf16.xpose.msra.mxu0 0
        %1854 = vmatprep.subr.bf16.mxu0 0
        %1855 = vmatpush1.bf16.xpose.msra.mxu0 0
        %1856 = vmatprep.subr.bf16.mxu0 0
        %1857 = vmatpush1.bf16.xpose.msra.mxu0 0
        %1858 = vmatprep.subr.bf16.mxu0 0
        %1859 = vmatpush1.bf16.xpose.msra.mxu0 0
        %1860 = vmatprep.mubr.bf16.mxu0 0
        %1861 = vmatmul.mubr.bf16.gmra.mrb[0].mxu0 %v1823
        %v1862 = vpop.f32.mrb[0].mxu0
        %v1863 = vadd.f32 %v1543, %v1862
        %v1864 = vpop.f32.mrb[0].mxu0
        %v1865 = vpop.f32.mrb[0].mxu0
        %v1866 = vpop.f32.mrb[0].mxu0
        %1867 = vdwg.mxu0
        %v1869 = vsel %vm1545, %v1529, 0
        %v1872 = vsel %vm1545, %v1537, 0
        %1874 = vmatprep.subr.bf16.mxu0 0
        %1875 = vmatpush1.bf16.xpose.msra.mxu0 %v1872
        %1876 = vmatprep.subr.bf16.mxu0 0
        %1877 = vmatpush1.bf16.xpose.msra.mxu0 0
        %1878 = vmatprep.subr.bf16.mxu0 0
        %1879 = vmatpush1.bf16.xpose.msra.mxu0 0
        %1880 = vmatprep.subr.bf16.mxu0 0
        %1881 = vmatpush1.bf16.xpose.msra.mxu0 0
        %1882 = vmatprep.subr.bf16.mxu0 0
        %1883 = vmatpush1.bf16.xpose.msra.mxu0 0
        %1884 = vmatprep.subr.bf16.mxu0 0
        %1885 = vmatpush1.bf16.xpose.msra.mxu0 0
        %1886 = vmatprep.subr.bf16.mxu0 0
        %1887 = vmatpush1.bf16.xpose.msra.mxu0 0
        %1888 = vmatprep.subr.bf16.mxu0 0
        %1889 = vmatpush1.bf16.xpose.msra.mxu0 0
        %1890 = vmatprep.subr.bf16.mxu0 0
        %1891 = vmatpush1.bf16.xpose.msra.mxu0 0
        %1892 = vmatprep.subr.bf16.mxu0 0
        %1893 = vmatpush1.bf16.xpose.msra.mxu0 0
        %1894 = vmatprep.subr.bf16.mxu0 0
        %1895 = vmatpush1.bf16.xpose.msra.mxu0 0
        %1896 = vmatprep.subr.bf16.mxu0 0
        %1897 = vmatpush1.bf16.xpose.msra.mxu0 0
        %1898 = vmatprep.subr.bf16.mxu0 0
        %1899 = vmatpush1.bf16.xpose.msra.mxu0 0
        %1900 = vmatprep.subr.bf16.mxu0 0
        %1901 = vmatpush1.bf16.xpose.msra.mxu0 0
        %1902 = vmatprep.subr.bf16.mxu0 0
        %1903 = vmatpush1.bf16.xpose.msra.mxu0 0
        %1904 = vmatprep.subr.bf16.mxu0 0
        %1905 = vmatpush1.bf16.xpose.msra.mxu0 0
        %1906 = vmatprep.mubr.bf16.mxu0 0
        %1907 = vmatmul.mubr.bf16.gmra.mrb[0].mxu0 %v1869
        %v1908 = vpop.f32.mrb[0].mxu0
        %v1909 = vadd.f32 %v1543, %v1908
        %v1910 = vpop.f32.mrb[0].mxu0
        %v1911 = vpop.f32.mrb[0].mxu0
        %v1912 = vpop.f32.mrb[0].mxu0
        %1913 = vdwg.mxu0
        %vm1914 = vcmask 64512
        %v1915 = vsel %vm1914, %v1587, -inf
        %1916 = vmax.xlane.f32.xlu0 %v1915
        %v1917 = vpop.xlane.xlu0 %1916
        %v1918 = vsel %vm1914, %v1633, -inf
        %1919 = vmax.xlane.f32.xlu0 %v1918
        %v1920 = vpop.xlane.xlu0 %1919
        %v1921 = vsel %vm1914, %v1679, -inf
        %1922 = vmax.xlane.f32.xlu0 %v1921
        %v1923 = vpop.xlane.xlu0 %1922
        %v1924 = vsel %vm1914, %v1725, -inf
        %1925 = vmax.xlane.f32.xlu0 %v1924
        %v1926 = vpop.xlane.xlu0 %1925
        %v1927 = vsel %vm1914, %v1771, -inf
        %1928 = vmax.xlane.f32.xlu0 %v1927
        %v1929 = vpop.xlane.xlu0 %1928
        %v1930 = vsel %vm1914, %v1817, -inf
        %1931 = vmax.xlane.f32.xlu0 %v1930
        %v1932 = vpop.xlane.xlu0 %1931
        %v1933 = vsel %vm1914, %v1863, -inf
        %1934 = vmax.xlane.f32.xlu0 %v1933
        %v1935 = vpop.xlane.xlu0 %1934
        %v1936 = vsel %vm1914, %v1909, -inf
        %1937 = vmax.xlane.f32.xlu0 %v1936
        %v1938 = vpop.xlane.xlu0 %1937
        %v1939 = vsub.f32 %v1587, %v1917
        %v1940 = vsub.f32 %v1633, %v1920
        %v1941 = vsub.f32 %v1679, %v1923
        %v1942 = vsub.f32 %v1725, %v1926
        %v1943 = vsub.f32 %v1771, %v1929
        %v1944 = vsub.f32 %v1817, %v1932
        %v1945 = vsub.f32 %v1863, %v1935
        %v1946 = vsub.f32 %v1909, %v1938
        %v1947 = vmul.f32 %v1939, 1.442695
        %v1948 = vpow.pop %v1947
        %v1949 = vmul.f32 %v1940, 1.442695
        %v1950 = vpow.pop %v1949
        %v1951 = vmul.f32 %v1941, 1.442695
        %v1952 = vpow.pop %v1951
        %v1953 = vmul.f32 %v1942, 1.442695
        %v1954 = vpow.pop %v1953
        %v1955 = vmul.f32 %v1943, 1.442695
        %v1956 = vpow.pop %v1955
        %v1957 = vmul.f32 %v1944, 1.442695
        %v1958 = vpow.pop %v1957
        %v1959 = vmul.f32 %v1945, 1.442695
        %v1960 = vpow.pop %v1959
        %v1961 = vmul.f32 %v1946, 1.442695
        %v1962 = vpow.pop %v1961
        %v1963 = vsel %vm1914, %v1948, 0.0
        %1964 = vadd.xlane.f32.xlu0 %v1963
        %v1965 = vpop.xlane.xlu0 %1964
        %v1966 = vsel %vm1914, %v1950, 0.0
        %1967 = vadd.xlane.f32.xlu0 %v1966
        %v1968 = vpop.xlane.xlu0 %1967
        %v1969 = vsel %vm1914, %v1952, 0.0
        %1970 = vadd.xlane.f32.xlu0 %v1969
        %v1971 = vpop.xlane.xlu0 %1970
        %v1972 = vsel %vm1914, %v1954, 0.0
        %1973 = vadd.xlane.f32.xlu0 %v1972
        %v1974 = vpop.xlane.xlu0 %1973
        %v1975 = vsel %vm1914, %v1956, 0.0
        %1976 = vadd.xlane.f32.xlu0 %v1975
        %v1977 = vpop.xlane.xlu0 %1976
        %v1978 = vsel %vm1914, %v1958, 0.0
        %1979 = vadd.xlane.f32.xlu0 %v1978
        %v1980 = vpop.xlane.xlu0 %1979
        %v1981 = vsel %vm1914, %v1960, 0.0
        %1982 = vadd.xlane.f32.xlu0 %v1981
        %v1983 = vpop.xlane.xlu0 %1982
        %v1984 = vsel %vm1914, %v1962, 0.0
        %1985 = vadd.xlane.f32.xlu0 %v1984
        %v1986 = vpop.xlane.xlu0 %1985
        %v1987 = vrcp.pop %v1965
        %v1988 = vrcp.pop %v1968
        %v1989 = vrcp.pop %v1971
        %v1990 = vrcp.pop %v1974
        %v1991 = vrcp.pop %v1977
        %v1992 = vrcp.pop %v1980
        %v1993 = vrcp.pop %v1983
        %v1994 = vrcp.pop %v1986
        %v1995 = vmul.f32 %v1948, %v1987
        %v1996 = vmul.f32 %v1950, %v1988
        %v1997 = vmul.f32 %v1952, %v1989
        %v1998 = vmul.f32 %v1954, %v1990
        %v1999 = vmul.f32 %v1956, %v1991
        %v2000 = vmul.f32 %v1958, %v1992
        %v2001 = vmul.f32 %v1960, %v1993
        %v2002 = vmul.f32 %v1962, %v1994
        %v2003 = vpack.c.bf16 %v1995, %v1995
        %v2004 = vpack.c.bf16 %v1996, %v1996
        %v2005 = vpack.c.bf16 %v1997, %v1997
        %v2006 = vpack.c.bf16 %v1998, %v1998
        %v2007 = vpack.c.bf16 %v1999, %v1999
        %v2008 = vpack.c.bf16 %v2000, %v2000
        %v2009 = vpack.c.bf16 %v2001, %v2001
        %v2010 = vpack.c.bf16 %v2002, %v2002
        %vm2011 = vcmask 60416
        %2012 = vst.msk [vmem:[%s439] sm:$0xf] %vm2011, %v2003
        %2013 = vst.msk [vmem:[%s439 + $0x4] sm:$0xf] %vm2011, %v2004
        %2014 = vst.msk [vmem:[%s439 + $0x8] sm:$0xf] %vm2011, %v2005
        %2015 = vst.msk [vmem:[%s439 + $0xc] sm:$0xf] %vm2011, %v2006
        %2016 = vst.msk [vmem:[%s439 + $0x10] sm:$0xf] %vm2011, %v2007
        %2017 = vst.msk [vmem:[%s439 + $0x14] sm:$0xf] %vm2011, %v2008
        %2018 = vst.msk [vmem:[%s439 + $0x18] sm:$0xf] %vm2011, %v2009
        %2019 = vst.msk [vmem:[%s439 + $0x1c] sm:$0xf] %vm2011, %v2010
        %v2020 = vld [vmem:[#allocation3] sm:$0xf]
        %v2021 = vld [vmem:[#allocation3 + $0x4] sm:$0xf]
        %v2022 = vld [vmem:[#allocation3 + $0x8] sm:$0xf]
        %v2023 = vld [vmem:[#allocation3 + $0xc] sm:$0xf]
        %v2024 = vld [vmem:[#allocation3 + $0x10] sm:$0xf]
        %v2025 = vld [vmem:[#allocation3 + $0x14] sm:$0xf]
        %v2026 = vld [vmem:[#allocation3 + $0x18] sm:$0xf]
        %v2027 = vld [vmem:[#allocation3 + $0x1c] sm:$0xf]
        %2028 = vxpose.xlu0.c.b16.start [1/8] %v2020, 128
        %2029 = vxpose.xlu0.c.b16.cont [2/8] 0, 128
        %2030 = vxpose.xlu0.c.b16.cont [3/8] 0, 128
        %2031 = vxpose.xlu0.c.b16.cont [4/8] 0, 128
        %2032 = vxpose.xlu0.c.b16.cont [5/8] 0, 128
        %2033 = vxpose.xlu0.c.b16.cont [6/8] 0, 128
        %2034 = vxpose.xlu0.c.b16.cont [7/8] 0, 128
        %2035 = vxpose.xlu0.c.b16.end [8/8] 0, 128
        %v2036 = vpop.trf.xlu0
        %v2037 = vpop.trf.xlu0
        %v2038 = vpop.trf.xlu0
        %v2039 = vpop.trf.xlu0
        %v2040 = vpop.trf.xlu0
        %v2041 = vpop.trf.xlu0
        %v2042 = vpop.trf.xlu0
        %v2043 = vpop.trf.xlu0
        %v2045 = vsel %vm1914, %v2036, 0
        %v2048 = vsel %vm1914, %v2003, 0
        %2050 = vmatprep.subr.bf16.mxu0 0
        %2051 = vmatpush1.bf16.xpose.msra.mxu0 %v2048
        %2052 = vmatprep.subr.bf16.mxu0 0
        %2053 = vmatpush1.bf16.xpose.msra.mxu0 0
        %2054 = vmatprep.subr.bf16.mxu0 0
        %2055 = vmatpush1.bf16.xpose.msra.mxu0 0
        %2056 = vmatprep.subr.bf16.mxu0 0
        %2057 = vmatpush1.bf16.xpose.msra.mxu0 0
        %2058 = vmatprep.subr.bf16.mxu0 0
        %2059 = vmatpush1.bf16.xpose.msra.mxu0 0
        %2060 = vmatprep.subr.bf16.mxu0 0
        %2061 = vmatpush1.bf16.xpose.msra.mxu0 0
        %2062 = vmatprep.subr.bf16.mxu0 0
        %2063 = vmatpush1.bf16.xpose.msra.mxu0 0
        %2064 = vmatprep.subr.bf16.mxu0 0
        %2065 = vmatpush1.bf16.xpose.msra.mxu0 0
        %2066 = vmatprep.subr.bf16.mxu0 0
        %2067 = vmatpush1.bf16.xpose.msra.mxu0 0
        %2068 = vmatprep.subr.bf16.mxu0 0
        %2069 = vmatpush1.bf16.xpose.msra.mxu0 0
        %2070 = vmatprep.subr.bf16.mxu0 0
        %2071 = vmatpush1.bf16.xpose.msra.mxu0 0
        %2072 = vmatprep.subr.bf16.mxu0 0
        %2073 = vmatpush1.bf16.xpose.msra.mxu0 0
        %2074 = vmatprep.subr.bf16.mxu0 0
        %2075 = vmatpush1.bf16.xpose.msra.mxu0 0
        %2076 = vmatprep.subr.bf16.mxu0 0
        %2077 = vmatpush1.bf16.xpose.msra.mxu0 0
        %2078 = vmatprep.subr.bf16.mxu0 0
        %2079 = vmatpush1.bf16.xpose.msra.mxu0 0
        %2080 = vmatprep.subr.bf16.mxu0 0
        %2081 = vmatpush1.bf16.xpose.msra.mxu0 0
        %2082 = vmatprep.mubr.bf16.mxu0 0
        %2083 = vmatmul.mubr.bf16.gmra.mrb[0].mxu0 %v2045
        %v2084 = vpop.f32.mrb[0].mxu0
        %v2085 = vadd.f32 0.0, %v2084
        %v2086 = vpop.f32.mrb[0].mxu0
        %v2087 = vpop.f32.mrb[0].mxu0
        %v2088 = vpop.f32.mrb[0].mxu0
        %2089 = vdwg.mxu0
        %2090 = vxpose.xlu0.c.b16.start [1/8] %v2021, 128
        %2091 = vxpose.xlu0.c.b16.cont [2/8] 0, 128
        %2092 = vxpose.xlu0.c.b16.cont [3/8] 0, 128
        %2093 = vxpose.xlu0.c.b16.cont [4/8] 0, 128
        %2094 = vxpose.xlu0.c.b16.cont [5/8] 0, 128
        %2095 = vxpose.xlu0.c.b16.cont [6/8] 0, 128
        %2096 = vxpose.xlu0.c.b16.cont [7/8] 0, 128
        %2097 = vxpose.xlu0.c.b16.end [8/8] 0, 128
        %v2098 = vpop.trf.xlu0
        %v2099 = vpop.trf.xlu0
        %v2100 = vpop.trf.xlu0
        %v2101 = vpop.trf.xlu0
        %v2102 = vpop.trf.xlu0
        %v2103 = vpop.trf.xlu0
        %v2104 = vpop.trf.xlu0
        %v2105 = vpop.trf.xlu0
        %v2107 = vsel %vm1914, %v2098, 0
        %v2110 = vsel %vm1914, %v2004, 0
        %2112 = vmatprep.subr.bf16.mxu0 0
        %2113 = vmatpush1.bf16.xpose.msra.mxu0 %v2110
        %2114 = vmatprep.subr.bf16.mxu0 0
        %2115 = vmatpush1.bf16.xpose.msra.mxu0 0
        %2116 = vmatprep.subr.bf16.mxu0 0
        %2117 = vmatpush1.bf16.xpose.msra.mxu0 0
        %2118 = vmatprep.subr.bf16.mxu0 0
        %2119 = vmatpush1.bf16.xpose.msra.mxu0 0
        %2120 = vmatprep.subr.bf16.mxu0 0
        %2121 = vmatpush1.bf16.xpose.msra.mxu0 0
        %2122 = vmatprep.subr.bf16.mxu0 0
        %2123 = vmatpush1.bf16.xpose.msra.mxu0 0
        %2124 = vmatprep.subr.bf16.mxu0 0
        %2125 = vmatpush1.bf16.xpose.msra.mxu0 0
        %2126 = vmatprep.subr.bf16.mxu0 0
        %2127 = vmatpush1.bf16.xpose.msra.mxu0 0
        %2128 = vmatprep.subr.bf16.mxu0 0
        %2129 = vmatpush1.bf16.xpose.msra.mxu0 0
        %2130 = vmatprep.subr.bf16.mxu0 0
        %2131 = vmatpush1.bf16.xpose.msra.mxu0 0
        %2132 = vmatprep.subr.bf16.mxu0 0
        %2133 = vmatpush1.bf16.xpose.msra.mxu0 0
        %2134 = vmatprep.subr.bf16.mxu0 0
        %2135 = vmatpush1.bf16.xpose.msra.mxu0 0
        %2136 = vmatprep.subr.bf16.mxu0 0
        %2137 = vmatpush1.bf16.xpose.msra.mxu0 0
        %2138 = vmatprep.subr.bf16.mxu0 0
        %2139 = vmatpush1.bf16.xpose.msra.mxu0 0
        %2140 = vmatprep.subr.bf16.mxu0 0
        %2141 = vmatpush1.bf16.xpose.msra.mxu0 0
        %2142 = vmatprep.subr.bf16.mxu0 0
        %2143 = vmatpush1.bf16.xpose.msra.mxu0 0
        %2144 = vmatprep.mubr.bf16.mxu0 0
        %2145 = vmatmul.mubr.bf16.gmra.mrb[0].mxu0 %v2107
        %v2146 = vpop.f32.mrb[0].mxu0
        %v2147 = vadd.f32 0.0, %v2146
        %v2148 = vpop.f32.mrb[0].mxu0
        %v2149 = vpop.f32.mrb[0].mxu0
        %v2150 = vpop.f32.mrb[0].mxu0
        %2151 = vdwg.mxu0
        %2152 = vxpose.xlu0.c.b16.start [1/8] %v2022, 128
        %2153 = vxpose.xlu0.c.b16.cont [2/8] 0, 128
        %2154 = vxpose.xlu0.c.b16.cont [3/8] 0, 128
        %2155 = vxpose.xlu0.c.b16.cont [4/8] 0, 128
        %2156 = vxpose.xlu0.c.b16.cont [5/8] 0, 128
        %2157 = vxpose.xlu0.c.b16.cont [6/8] 0, 128
        %2158 = vxpose.xlu0.c.b16.cont [7/8] 0, 128
        %2159 = vxpose.xlu0.c.b16.end [8/8] 0, 128
        %v2160 = vpop.trf.xlu0
        %v2161 = vpop.trf.xlu0
        %v2162 = vpop.trf.xlu0
        %v2163 = vpop.trf.xlu0
        %v2164 = vpop.trf.xlu0
        %v2165 = vpop.trf.xlu0
        %v2166 = vpop.trf.xlu0
        %v2167 = vpop.trf.xlu0
        %v2169 = vsel %vm1914, %v2160, 0
        %v2172 = vsel %vm1914, %v2005, 0
        %2174 = vmatprep.subr.bf16.mxu0 0
        %2175 = vmatpush1.bf16.xpose.msra.mxu0 %v2172
        %2176 = vmatprep.subr.bf16.mxu0 0
        %2177 = vmatpush1.bf16.xpose.msra.mxu0 0
        %2178 = vmatprep.subr.bf16.mxu0 0
        %2179 = vmatpush1.bf16.xpose.msra.mxu0 0
        %2180 = vmatprep.subr.bf16.mxu0 0
        %2181 = vmatpush1.bf16.xpose.msra.mxu0 0
        %2182 = vmatprep.subr.bf16.mxu0 0
        %2183 = vmatpush1.bf16.xpose.msra.mxu0 0
        %2184 = vmatprep.subr.bf16.mxu0 0
        %2185 = vmatpush1.bf16.xpose.msra.mxu0 0
        %2186 = vmatprep.subr.bf16.mxu0 0
        %2187 = vmatpush1.bf16.xpose.msra.mxu0 0
        %2188 = vmatprep.subr.bf16.mxu0 0
        %2189 = vmatpush1.bf16.xpose.msra.mxu0 0
        %2190 = vmatprep.subr.bf16.mxu0 0
        %2191 = vmatpush1.bf16.xpose.msra.mxu0 0
        %2192 = vmatprep.subr.bf16.mxu0 0
        %2193 = vmatpush1.bf16.xpose.msra.mxu0 0
        %2194 = vmatprep.subr.bf16.mxu0 0
        %2195 = vmatpush1.bf16.xpose.msra.mxu0 0
        %2196 = vmatprep.subr.bf16.mxu0 0
        %2197 = vmatpush1.bf16.xpose.msra.mxu0 0
        %2198 = vmatprep.subr.bf16.mxu0 0
        %2199 = vmatpush1.bf16.xpose.msra.mxu0 0
        %2200 = vmatprep.subr.bf16.mxu0 0
        %2201 = vmatpush1.bf16.xpose.msra.mxu0 0
        %2202 = vmatprep.subr.bf16.mxu0 0
        %2203 = vmatpush1.bf16.xpose.msra.mxu0 0
        %2204 = vmatprep.subr.bf16.mxu0 0
        %2205 = vmatpush1.bf16.xpose.msra.mxu0 0
        %2206 = vmatprep.mubr.bf16.mxu0 0
        %2207 = vmatmul.mubr.bf16.gmra.mrb[0].mxu0 %v2169
        %v2208 = vpop.f32.mrb[0].mxu0
        %v2209 = vadd.f32 0.0, %v2208
        %v2210 = vpop.f32.mrb[0].mxu0
        %v2211 = vpop.f32.mrb[0].mxu0
        %v2212 = vpop.f32.mrb[0].mxu0
        %2213 = vdwg.mxu0
        %2214 = vxpose.xlu0.c.b16.start [1/8] %v2023, 128
        %2215 = vxpose.xlu0.c.b16.cont [2/8] 0, 128
        %2216 = vxpose.xlu0.c.b16.cont [3/8] 0, 128
        %2217 = vxpose.xlu0.c.b16.cont [4/8] 0, 128
        %2218 = vxpose.xlu0.c.b16.cont [5/8] 0, 128
        %2219 = vxpose.xlu0.c.b16.cont [6/8] 0, 128
        %2220 = vxpose.xlu0.c.b16.cont [7/8] 0, 128
        %2221 = vxpose.xlu0.c.b16.end [8/8] 0, 128
        %v2222 = vpop.trf.xlu0
        %v2223 = vpop.trf.xlu0
        %v2224 = vpop.trf.xlu0
        %v2225 = vpop.trf.xlu0
        %v2226 = vpop.trf.xlu0
        %v2227 = vpop.trf.xlu0
        %v2228 = vpop.trf.xlu0
        %v2229 = vpop.trf.xlu0
        %v2231 = vsel %vm1914, %v2222, 0
        %v2234 = vsel %vm1914, %v2006, 0
        %2236 = vmatprep.subr.bf16.mxu0 0
        %2237 = vmatpush1.bf16.xpose.msra.mxu0 %v2234
        %2238 = vmatprep.subr.bf16.mxu0 0
        %2239 = vmatpush1.bf16.xpose.msra.mxu0 0
        %2240 = vmatprep.subr.bf16.mxu0 0
        %2241 = vmatpush1.bf16.xpose.msra.mxu0 0
        %2242 = vmatprep.subr.bf16.mxu0 0
        %2243 = vmatpush1.bf16.xpose.msra.mxu0 0
        %2244 = vmatprep.subr.bf16.mxu0 0
        %2245 = vmatpush1.bf16.xpose.msra.mxu0 0
        %2246 = vmatprep.subr.bf16.mxu0 0
        %2247 = vmatpush1.bf16.xpose.msra.mxu0 0
        %2248 = vmatprep.subr.bf16.mxu0 0
        %2249 = vmatpush1.bf16.xpose.msra.mxu0 0
        %2250 = vmatprep.subr.bf16.mxu0 0
        %2251 = vmatpush1.bf16.xpose.msra.mxu0 0
        %2252 = vmatprep.subr.bf16.mxu0 0
        %2253 = vmatpush1.bf16.xpose.msra.mxu0 0
        %2254 = vmatprep.subr.bf16.mxu0 0
        %2255 = vmatpush1.bf16.xpose.msra.mxu0 0
        %2256 = vmatprep.subr.bf16.mxu0 0
        %2257 = vmatpush1.bf16.xpose.msra.mxu0 0
        %2258 = vmatprep.subr.bf16.mxu0 0
        %2259 = vmatpush1.bf16.xpose.msra.mxu0 0
        %2260 = vmatprep.subr.bf16.mxu0 0
        %2261 = vmatpush1.bf16.xpose.msra.mxu0 0
        %2262 = vmatprep.subr.bf16.mxu0 0
        %2263 = vmatpush1.bf16.xpose.msra.mxu0 0
        %2264 = vmatprep.subr.bf16.mxu0 0
        %2265 = vmatpush1.bf16.xpose.msra.mxu0 0
        %2266 = vmatprep.subr.bf16.mxu0 0
        %2267 = vmatpush1.bf16.xpose.msra.mxu0 0
        %2268 = vmatprep.mubr.bf16.mxu0 0
        %2269 = vmatmul.mubr.bf16.gmra.mrb[0].mxu0 %v2231
        %v2270 = vpop.f32.mrb[0].mxu0
        %v2271 = vadd.f32 0.0, %v2270
        %v2272 = vpop.f32.mrb[0].mxu0
        %v2273 = vpop.f32.mrb[0].mxu0
        %v2274 = vpop.f32.mrb[0].mxu0
        %2275 = vdwg.mxu0
        %2276 = vxpose.xlu0.c.b16.start [1/8] %v2024, 128
        %2277 = vxpose.xlu0.c.b16.cont [2/8] 0, 128
        %2278 = vxpose.xlu0.c.b16.cont [3/8] 0, 128
        %2279 = vxpose.xlu0.c.b16.cont [4/8] 0, 128
        %2280 = vxpose.xlu0.c.b16.cont [5/8] 0, 128
        %2281 = vxpose.xlu0.c.b16.cont [6/8] 0, 128
        %2282 = vxpose.xlu0.c.b16.cont [7/8] 0, 128
        %2283 = vxpose.xlu0.c.b16.end [8/8] 0, 128
        %v2284 = vpop.trf.xlu0
        %v2285 = vpop.trf.xlu0
        %v2286 = vpop.trf.xlu0
        %v2287 = vpop.trf.xlu0
        %v2288 = vpop.trf.xlu0
        %v2289 = vpop.trf.xlu0
        %v2290 = vpop.trf.xlu0
        %v2291 = vpop.trf.xlu0
        %v2293 = vsel %vm1914, %v2284, 0
        %v2296 = vsel %vm1914, %v2007, 0
        %2298 = vmatprep.subr.bf16.mxu0 0
        %2299 = vmatpush1.bf16.xpose.msra.mxu0 %v2296
        %2300 = vmatprep.subr.bf16.mxu0 0
        %2301 = vmatpush1.bf16.xpose.msra.mxu0 0
        %2302 = vmatprep.subr.bf16.mxu0 0
        %2303 = vmatpush1.bf16.xpose.msra.mxu0 0
        %2304 = vmatprep.subr.bf16.mxu0 0
        %2305 = vmatpush1.bf16.xpose.msra.mxu0 0
        %2306 = vmatprep.subr.bf16.mxu0 0
        %2307 = vmatpush1.bf16.xpose.msra.mxu0 0
        %2308 = vmatprep.subr.bf16.mxu0 0
        %2309 = vmatpush1.bf16.xpose.msra.mxu0 0
        %2310 = vmatprep.subr.bf16.mxu0 0
        %2311 = vmatpush1.bf16.xpose.msra.mxu0 0
        %2312 = vmatprep.subr.bf16.mxu0 0
        %2313 = vmatpush1.bf16.xpose.msra.mxu0 0
        %2314 = vmatprep.subr.bf16.mxu0 0
        %2315 = vmatpush1.bf16.xpose.msra.mxu0 0
        %2316 = vmatprep.subr.bf16.mxu0 0
        %2317 = vmatpush1.bf16.xpose.msra.mxu0 0
        %2318 = vmatprep.subr.bf16.mxu0 0
        %2319 = vmatpush1.bf16.xpose.msra.mxu0 0
        %2320 = vmatprep.subr.bf16.mxu0 0
        %2321 = vmatpush1.bf16.xpose.msra.mxu0 0
        %2322 = vmatprep.subr.bf16.mxu0 0
        %2323 = vmatpush1.bf16.xpose.msra.mxu0 0
        %2324 = vmatprep.subr.bf16.mxu0 0
        %2325 = vmatpush1.bf16.xpose.msra.mxu0 0
        %2326 = vmatprep.subr.bf16.mxu0 0
        %2327 = vmatpush1.bf16.xpose.msra.mxu0 0
        %2328 = vmatprep.subr.bf16.mxu0 0
        %2329 = vmatpush1.bf16.xpose.msra.mxu0 0
        %2330 = vmatprep.mubr.bf16.mxu0 0
        %2331 = vmatmul.mubr.bf16.gmra.mrb[0].mxu0 %v2293
        %v2332 = vpop.f32.mrb[0].mxu0
        %v2333 = vadd.f32 0.0, %v2332
        %v2334 = vpop.f32.mrb[0].mxu0
        %v2335 = vpop.f32.mrb[0].mxu0
        %v2336 = vpop.f32.mrb[0].mxu0
        %2337 = vdwg.mxu0
        %2338 = vxpose.xlu0.c.b16.start [1/8] %v2025, 128
        %2339 = vxpose.xlu0.c.b16.cont [2/8] 0, 128
        %2340 = vxpose.xlu0.c.b16.cont [3/8] 0, 128
        %2341 = vxpose.xlu0.c.b16.cont [4/8] 0, 128
        %2342 = vxpose.xlu0.c.b16.cont [5/8] 0, 128
        %2343 = vxpose.xlu0.c.b16.cont [6/8] 0, 128
        %2344 = vxpose.xlu0.c.b16.cont [7/8] 0, 128
        %2345 = vxpose.xlu0.c.b16.end [8/8] 0, 128
        %v2346 = vpop.trf.xlu0
        %v2347 = vpop.trf.xlu0
        %v2348 = vpop.trf.xlu0
        %v2349 = vpop.trf.xlu0
        %v2350 = vpop.trf.xlu0
        %v2351 = vpop.trf.xlu0
        %v2352 = vpop.trf.xlu0
        %v2353 = vpop.trf.xlu0
        %v2355 = vsel %vm1914, %v2346, 0
        %v2358 = vsel %vm1914, %v2008, 0
        %2360 = vmatprep.subr.bf16.mxu0 0
        %2361 = vmatpush1.bf16.xpose.msra.mxu0 %v2358
        %2362 = vmatprep.subr.bf16.mxu0 0
        %2363 = vmatpush1.bf16.xpose.msra.mxu0 0
        %2364 = vmatprep.subr.bf16.mxu0 0
        %2365 = vmatpush1.bf16.xpose.msra.mxu0 0
        %2366 = vmatprep.subr.bf16.mxu0 0
        %2367 = vmatpush1.bf16.xpose.msra.mxu0 0
        %2368 = vmatprep.subr.bf16.mxu0 0
        %2369 = vmatpush1.bf16.xpose.msra.mxu0 0
        %2370 = vmatprep.subr.bf16.mxu0 0
        %2371 = vmatpush1.bf16.xpose.msra.mxu0 0
        %2372 = vmatprep.subr.bf16.mxu0 0
        %2373 = vmatpush1.bf16.xpose.msra.mxu0 0
        %2374 = vmatprep.subr.bf16.mxu0 0
        %2375 = vmatpush1.bf16.xpose.msra.mxu0 0
        %2376 = vmatprep.subr.bf16.mxu0 0
        %2377 = vmatpush1.bf16.xpose.msra.mxu0 0
        %2378 = vmatprep.subr.bf16.mxu0 0
        %2379 = vmatpush1.bf16.xpose.msra.mxu0 0
        %2380 = vmatprep.subr.bf16.mxu0 0
        %2381 = vmatpush1.bf16.xpose.msra.mxu0 0
        %2382 = vmatprep.subr.bf16.mxu0 0
        %2383 = vmatpush1.bf16.xpose.msra.mxu0 0
        %2384 = vmatprep.subr.bf16.mxu0 0
        %2385 = vmatpush1.bf16.xpose.msra.mxu0 0
        %2386 = vmatprep.subr.bf16.mxu0 0
        %2387 = vmatpush1.bf16.xpose.msra.mxu0 0
        %2388 = vmatprep.subr.bf16.mxu0 0
        %2389 = vmatpush1.bf16.xpose.msra.mxu0 0
        %2390 = vmatprep.subr.bf16.mxu0 0
        %2391 = vmatpush1.bf16.xpose.msra.mxu0 0
        %2392 = vmatprep.mubr.bf16.mxu0 0
        %2393 = vmatmul.mubr.bf16.gmra.mrb[0].mxu0 %v2355
        %v2394 = vpop.f32.mrb[0].mxu0
        %v2395 = vadd.f32 0.0, %v2394
        %v2396 = vpop.f32.mrb[0].mxu0
        %v2397 = vpop.f32.mrb[0].mxu0
        %v2398 = vpop.f32.mrb[0].mxu0
        %2399 = vdwg.mxu0
        %2400 = vxpose.xlu0.c.b16.start [1/8] %v2026, 128
        %2401 = vxpose.xlu0.c.b16.cont [2/8] 0, 128
        %2402 = vxpose.xlu0.c.b16.cont [3/8] 0, 128
        %2403 = vxpose.xlu0.c.b16.cont [4/8] 0, 128
        %2404 = vxpose.xlu0.c.b16.cont [5/8] 0, 128
        %2405 = vxpose.xlu0.c.b16.cont [6/8] 0, 128
        %2406 = vxpose.xlu0.c.b16.cont [7/8] 0, 128
        %2407 = vxpose.xlu0.c.b16.end [8/8] 0, 128
        %v2408 = vpop.trf.xlu0
        %v2409 = vpop.trf.xlu0
        %v2410 = vpop.trf.xlu0
        %v2411 = vpop.trf.xlu0
        %v2412 = vpop.trf.xlu0
        %v2413 = vpop.trf.xlu0
        %v2414 = vpop.trf.xlu0
        %v2415 = vpop.trf.xlu0
        %v2417 = vsel %vm1914, %v2408, 0
        %v2420 = vsel %vm1914, %v2009, 0
        %2422 = vmatprep.subr.bf16.mxu0 0
        %2423 = vmatpush1.bf16.xpose.msra.mxu0 %v2420
        %2424 = vmatprep.subr.bf16.mxu0 0
        %2425 = vmatpush1.bf16.xpose.msra.mxu0 0
        %2426 = vmatprep.subr.bf16.mxu0 0
        %2427 = vmatpush1.bf16.xpose.msra.mxu0 0
        %2428 = vmatprep.subr.bf16.mxu0 0
        %2429 = vmatpush1.bf16.xpose.msra.mxu0 0
        %2430 = vmatprep.subr.bf16.mxu0 0
        %2431 = vmatpush1.bf16.xpose.msra.mxu0 0
        %2432 = vmatprep.subr.bf16.mxu0 0
        %2433 = vmatpush1.bf16.xpose.msra.mxu0 0
        %2434 = vmatprep.subr.bf16.mxu0 0
        %2435 = vmatpush1.bf16.xpose.msra.mxu0 0
        %2436 = vmatprep.subr.bf16.mxu0 0
        %2437 = vmatpush1.bf16.xpose.msra.mxu0 0
        %2438 = vmatprep.subr.bf16.mxu0 0
        %2439 = vmatpush1.bf16.xpose.msra.mxu0 0
        %2440 = vmatprep.subr.bf16.mxu0 0
        %2441 = vmatpush1.bf16.xpose.msra.mxu0 0
        %2442 = vmatprep.subr.bf16.mxu0 0
        %2443 = vmatpush1.bf16.xpose.msra.mxu0 0
        %2444 = vmatprep.subr.bf16.mxu0 0
        %2445 = vmatpush1.bf16.xpose.msra.mxu0 0
        %2446 = vmatprep.subr.bf16.mxu0 0
        %2447 = vmatpush1.bf16.xpose.msra.mxu0 0
        %2448 = vmatprep.subr.bf16.mxu0 0
        %2449 = vmatpush1.bf16.xpose.msra.mxu0 0
        %2450 = vmatprep.subr.bf16.mxu0 0
        %2451 = vmatpush1.bf16.xpose.msra.mxu0 0
        %2452 = vmatprep.subr.bf16.mxu0 0
        %2453 = vmatpush1.bf16.xpose.msra.mxu0 0
        %2454 = vmatprep.mubr.bf16.mxu0 0
        %2455 = vmatmul.mubr.bf16.gmra.mrb[0].mxu0 %v2417
        %v2456 = vpop.f32.mrb[0].mxu0
        %v2457 = vadd.f32 0.0, %v2456
        %v2458 = vpop.f32.mrb[0].mxu0
        %v2459 = vpop.f32.mrb[0].mxu0
        %v2460 = vpop.f32.mrb[0].mxu0
        %2461 = vdwg.mxu0
        %2462 = vxpose.xlu0.c.b16.start [1/8] %v2027, 128
        %2463 = vxpose.xlu0.c.b16.cont [2/8] 0, 128
        %2464 = vxpose.xlu0.c.b16.cont [3/8] 0, 128
        %2465 = vxpose.xlu0.c.b16.cont [4/8] 0, 128
        %2466 = vxpose.xlu0.c.b16.cont [5/8] 0, 128
        %2467 = vxpose.xlu0.c.b16.cont [6/8] 0, 128
        %2468 = vxpose.xlu0.c.b16.cont [7/8] 0, 128
        %2469 = vxpose.xlu0.c.b16.end [8/8] 0, 128
        %v2470 = vpop.trf.xlu0
        %v2471 = vpop.trf.xlu0
        %v2472 = vpop.trf.xlu0
        %v2473 = vpop.trf.xlu0
        %v2474 = vpop.trf.xlu0
        %v2475 = vpop.trf.xlu0
        %v2476 = vpop.trf.xlu0
        %v2477 = vpop.trf.xlu0
        %v2479 = vsel %vm1914, %v2470, 0
        %v2482 = vsel %vm1914, %v2010, 0
        %2484 = vmatprep.subr.bf16.mxu0 0
        %2485 = vmatpush1.bf16.xpose.msra.mxu0 %v2482
        %2486 = vmatprep.subr.bf16.mxu0 0
        %2487 = vmatpush1.bf16.xpose.msra.mxu0 0
        %2488 = vmatprep.subr.bf16.mxu0 0
        %2489 = vmatpush1.bf16.xpose.msra.mxu0 0
        %2490 = vmatprep.subr.bf16.mxu0 0
        %2491 = vmatpush1.bf16.xpose.msra.mxu0 0
        %2492 = vmatprep.subr.bf16.mxu0 0
        %2493 = vmatpush1.bf16.xpose.msra.mxu0 0
        %2494 = vmatprep.subr.bf16.mxu0 0
        %2495 = vmatpush1.bf16.xpose.msra.mxu0 0
        %2496 = vmatprep.subr.bf16.mxu0 0
        %2497 = vmatpush1.bf16.xpose.msra.mxu0 0
        %2498 = vmatprep.subr.bf16.mxu0 0
        %2499 = vmatpush1.bf16.xpose.msra.mxu0 0
        %2500 = vmatprep.subr.bf16.mxu0 0
        %2501 = vmatpush1.bf16.xpose.msra.mxu0 0
        %2502 = vmatprep.subr.bf16.mxu0 0
        %2503 = vmatpush1.bf16.xpose.msra.mxu0 0
        %2504 = vmatprep.subr.bf16.mxu0 0
        %2505 = vmatpush1.bf16.xpose.msra.mxu0 0
        %2506 = vmatprep.subr.bf16.mxu0 0
        %2507 = vmatpush1.bf16.xpose.msra.mxu0 0
        %2508 = vmatprep.subr.bf16.mxu0 0
        %2509 = vmatpush1.bf16.xpose.msra.mxu0 0
        %2510 = vmatprep.subr.bf16.mxu0 0
        %2511 = vmatpush1.bf16.xpose.msra.mxu0 0
        %2512 = vmatprep.subr.bf16.mxu0 0
        %2513 = vmatpush1.bf16.xpose.msra.mxu0 0
        %2514 = vmatprep.subr.bf16.mxu0 0
        %2515 = vmatpush1.bf16.xpose.msra.mxu0 0
        %2516 = vmatprep.mubr.bf16.mxu0 0
        %2517 = vmatmul.mubr.bf16.gmra.mrb[0].mxu0 %v2479
        %v2518 = vpop.f32.mrb[0].mxu0
        %v2519 = vadd.f32 0.0, %v2518
        %v2520 = vpop.f32.mrb[0].mxu0
        %v2521 = vpop.f32.mrb[0].mxu0
        %v2522 = vpop.f32.mrb[0].mxu0
        %2523 = vdwg.mxu0
        %2524 = vxpose.xlu0.b32.start [1/16] %v2085, 128
        %2525 = vxpose.xlu0.b32.cont [2/16] 0.0, 128
        %2526 = vxpose.xlu0.b32.cont [3/16] 0.0, 128
        %2527 = vxpose.xlu0.b32.cont [4/16] 0.0, 128
        %2528 = vxpose.xlu0.b32.cont [5/16] 0.0, 128
        %2529 = vxpose.xlu0.b32.cont [6/16] 0.0, 128
        %2530 = vxpose.xlu0.b32.cont [7/16] 0.0, 128
        %2531 = vxpose.xlu0.b32.cont [8/16] 0.0, 128
        %2532 = vxpose.xlu0.b32.cont [9/16] 0.0, 128
        %2533 = vxpose.xlu0.b32.cont [10/16] 0.0, 128
        %2534 = vxpose.xlu0.b32.cont [11/16] 0.0, 128
        %2535 = vxpose.xlu0.b32.cont [12/16] 0.0, 128
        %2536 = vxpose.xlu0.b32.cont [13/16] 0.0, 128
        %2537 = vxpose.xlu0.b32.cont [14/16] 0.0, 128
        %2538 = vxpose.xlu0.b32.cont [15/16] 0.0, 128
        %2539 = vxpose.xlu0.b32.end [16/16] 0.0, 128
        %v2540 = vpop.trf.xlu0
        %v2541 = vpop.trf.xlu0
        %v2542 = vpop.trf.xlu0
        %v2543 = vpop.trf.xlu0
        %v2544 = vpop.trf.xlu0
        %v2545 = vpop.trf.xlu0
        %v2546 = vpop.trf.xlu0
        %v2547 = vpop.trf.xlu0
        %v2548 = vpop.trf.xlu0
        %v2549 = vpop.trf.xlu0
        %v2550 = vpop.trf.xlu0
        %v2551 = vpop.trf.xlu0
        %v2552 = vpop.trf.xlu0
        %v2553 = vpop.trf.xlu0
        %v2554 = vpop.trf.xlu0
        %v2555 = vpop.trf.xlu0
        %2556 = vxpose.xlu0.b32.start [1/16] %v2147, 128
        %2557 = vxpose.xlu0.b32.cont [2/16] 0.0, 128
        %2558 = vxpose.xlu0.b32.cont [3/16] 0.0, 128
        %2559 = vxpose.xlu0.b32.cont [4/16] 0.0, 128
        %2560 = vxpose.xlu0.b32.cont [5/16] 0.0, 128
        %2561 = vxpose.xlu0.b32.cont [6/16] 0.0, 128
        %2562 = vxpose.xlu0.b32.cont [7/16] 0.0, 128
        %2563 = vxpose.xlu0.b32.cont [8/16] 0.0, 128
        %2564 = vxpose.xlu0.b32.cont [9/16] 0.0, 128
        %2565 = vxpose.xlu0.b32.cont [10/16] 0.0, 128
        %2566 = vxpose.xlu0.b32.cont [11/16] 0.0, 128
        %2567 = vxpose.xlu0.b32.cont [12/16] 0.0, 128
        %2568 = vxpose.xlu0.b32.cont [13/16] 0.0, 128
        %2569 = vxpose.xlu0.b32.cont [14/16] 0.0, 128
        %2570 = vxpose.xlu0.b32.cont [15/16] 0.0, 128
        %2571 = vxpose.xlu0.b32.end [16/16] 0.0, 128
        %v2572 = vpop.trf.xlu0
        %v2573 = vpop.trf.xlu0
        %v2574 = vpop.trf.xlu0
        %v2575 = vpop.trf.xlu0
        %v2576 = vpop.trf.xlu0
        %v2577 = vpop.trf.xlu0
        %v2578 = vpop.trf.xlu0
        %v2579 = vpop.trf.xlu0
        %v2580 = vpop.trf.xlu0
        %v2581 = vpop.trf.xlu0
        %v2582 = vpop.trf.xlu0
        %v2583 = vpop.trf.xlu0
        %v2584 = vpop.trf.xlu0
        %v2585 = vpop.trf.xlu0
        %v2586 = vpop.trf.xlu0
        %v2587 = vpop.trf.xlu0
        %2588 = vxpose.xlu0.b32.start [1/16] %v2209, 128
        %2589 = vxpose.xlu0.b32.cont [2/16] 0.0, 128
        %2590 = vxpose.xlu0.b32.cont [3/16] 0.0, 128
        %2591 = vxpose.xlu0.b32.cont [4/16] 0.0, 128
        %2592 = vxpose.xlu0.b32.cont [5/16] 0.0, 128
        %2593 = vxpose.xlu0.b32.cont [6/16] 0.0, 128
        %2594 = vxpose.xlu0.b32.cont [7/16] 0.0, 128
        %2595 = vxpose.xlu0.b32.cont [8/16] 0.0, 128
        %2596 = vxpose.xlu0.b32.cont [9/16] 0.0, 128
        %2597 = vxpose.xlu0.b32.cont [10/16] 0.0, 128
        %2598 = vxpose.xlu0.b32.cont [11/16] 0.0, 128
        %2599 = vxpose.xlu0.b32.cont [12/16] 0.0, 128
        %2600 = vxpose.xlu0.b32.cont [13/16] 0.0, 128
        %2601 = vxpose.xlu0.b32.cont [14/16] 0.0, 128
        %2602 = vxpose.xlu0.b32.cont [15/16] 0.0, 128
        %2603 = vxpose.xlu0.b32.end [16/16] 0.0, 128
        %v2604 = vpop.trf.xlu0
        %v2605 = vpop.trf.xlu0
        %v2606 = vpop.trf.xlu0
        %v2607 = vpop.trf.xlu0
        %v2608 = vpop.trf.xlu0
        %v2609 = vpop.trf.xlu0
        %v2610 = vpop.trf.xlu0
        %v2611 = vpop.trf.xlu0
        %v2612 = vpop.trf.xlu0
        %v2613 = vpop.trf.xlu0
        %v2614 = vpop.trf.xlu0
        %v2615 = vpop.trf.xlu0
        %v2616 = vpop.trf.xlu0
        %v2617 = vpop.trf.xlu0
        %v2618 = vpop.trf.xlu0
        %v2619 = vpop.trf.xlu0
        %2620 = vxpose.xlu0.b32.start [1/16] %v2271, 128
        %2621 = vxpose.xlu0.b32.cont [2/16] 0.0, 128
        %2622 = vxpose.xlu0.b32.cont [3/16] 0.0, 128
        %2623 = vxpose.xlu0.b32.cont [4/16] 0.0, 128
        %2624 = vxpose.xlu0.b32.cont [5/16] 0.0, 128
        %2625 = vxpose.xlu0.b32.cont [6/16] 0.0, 128
        %2626 = vxpose.xlu0.b32.cont [7/16] 0.0, 128
        %2627 = vxpose.xlu0.b32.cont [8/16] 0.0, 128
        %2628 = vxpose.xlu0.b32.cont [9/16] 0.0, 128
        %2629 = vxpose.xlu0.b32.cont [10/16] 0.0, 128
        %2630 = vxpose.xlu0.b32.cont [11/16] 0.0, 128
        %2631 = vxpose.xlu0.b32.cont [12/16] 0.0, 128
        %2632 = vxpose.xlu0.b32.cont [13/16] 0.0, 128
        %2633 = vxpose.xlu0.b32.cont [14/16] 0.0, 128
        %2634 = vxpose.xlu0.b32.cont [15/16] 0.0, 128
        %2635 = vxpose.xlu0.b32.end [16/16] 0.0, 128
        %v2636 = vpop.trf.xlu0
        %v2637 = vpop.trf.xlu0
        %v2638 = vpop.trf.xlu0
        %v2639 = vpop.trf.xlu0
        %v2640 = vpop.trf.xlu0
        %v2641 = vpop.trf.xlu0
        %v2642 = vpop.trf.xlu0
        %v2643 = vpop.trf.xlu0
        %v2644 = vpop.trf.xlu0
        %v2645 = vpop.trf.xlu0
        %v2646 = vpop.trf.xlu0
        %v2647 = vpop.trf.xlu0
        %v2648 = vpop.trf.xlu0
        %v2649 = vpop.trf.xlu0
        %v2650 = vpop.trf.xlu0
        %v2651 = vpop.trf.xlu0
        %2652 = vxpose.xlu0.b32.start [1/16] %v2333, 128
        %2653 = vxpose.xlu0.b32.cont [2/16] 0.0, 128
        %2654 = vxpose.xlu0.b32.cont [3/16] 0.0, 128
        %2655 = vxpose.xlu0.b32.cont [4/16] 0.0, 128
        %2656 = vxpose.xlu0.b32.cont [5/16] 0.0, 128
        %2657 = vxpose.xlu0.b32.cont [6/16] 0.0, 128
        %2658 = vxpose.xlu0.b32.cont [7/16] 0.0, 128
        %2659 = vxpose.xlu0.b32.cont [8/16] 0.0, 128
        %2660 = vxpose.xlu0.b32.cont [9/16] 0.0, 128
        %2661 = vxpose.xlu0.b32.cont [10/16] 0.0, 128
        %2662 = vxpose.xlu0.b32.cont [11/16] 0.0, 128
        %2663 = vxpose.xlu0.b32.cont [12/16] 0.0, 128
        %2664 = vxpose.xlu0.b32.cont [13/16] 0.0, 128
        %2665 = vxpose.xlu0.b32.cont [14/16] 0.0, 128
        %2666 = vxpose.xlu0.b32.cont [15/16] 0.0, 128
        %2667 = vxpose.xlu0.b32.end [16/16] 0.0, 128
        %v2668 = vpop.trf.xlu0
        %v2669 = vpop.trf.xlu0
        %v2670 = vpop.trf.xlu0
        %v2671 = vpop.trf.xlu0
        %v2672 = vpop.trf.xlu0
        %v2673 = vpop.trf.xlu0
        %v2674 = vpop.trf.xlu0
        %v2675 = vpop.trf.xlu0
        %v2676 = vpop.trf.xlu0
        %v2677 = vpop.trf.xlu0
        %v2678 = vpop.trf.xlu0
        %v2679 = vpop.trf.xlu0
        %v2680 = vpop.trf.xlu0
        %v2681 = vpop.trf.xlu0
        %v2682 = vpop.trf.xlu0
        %v2683 = vpop.trf.xlu0
        %2684 = vxpose.xlu0.b32.start [1/16] %v2395, 128
        %2685 = vxpose.xlu0.b32.cont [2/16] 0.0, 128
        %2686 = vxpose.xlu0.b32.cont [3/16] 0.0, 128
        %2687 = vxpose.xlu0.b32.cont [4/16] 0.0, 128
        %2688 = vxpose.xlu0.b32.cont [5/16] 0.0, 128
        %2689 = vxpose.xlu0.b32.cont [6/16] 0.0, 128
        %2690 = vxpose.xlu0.b32.cont [7/16] 0.0, 128
        %2691 = vxpose.xlu0.b32.cont [8/16] 0.0, 128
        %2692 = vxpose.xlu0.b32.cont [9/16] 0.0, 128
        %2693 = vxpose.xlu0.b32.cont [10/16] 0.0, 128
        %2694 = vxpose.xlu0.b32.cont [11/16] 0.0, 128
        %2695 = vxpose.xlu0.b32.cont [12/16] 0.0, 128
        %2696 = vxpose.xlu0.b32.cont [13/16] 0.0, 128
        %2697 = vxpose.xlu0.b32.cont [14/16] 0.0, 128
        %2698 = vxpose.xlu0.b32.cont [15/16] 0.0, 128
        %2699 = vxpose.xlu0.b32.end [16/16] 0.0, 128
        %v2700 = vpop.trf.xlu0
        %v2701 = vpop.trf.xlu0
        %v2702 = vpop.trf.xlu0
        %v2703 = vpop.trf.xlu0
        %v2704 = vpop.trf.xlu0
        %v2705 = vpop.trf.xlu0
        %v2706 = vpop.trf.xlu0
        %v2707 = vpop.trf.xlu0
        %v2708 = vpop.trf.xlu0
        %v2709 = vpop.trf.xlu0
        %v2710 = vpop.trf.xlu0
        %v2711 = vpop.trf.xlu0
        %v2712 = vpop.trf.xlu0
        %v2713 = vpop.trf.xlu0
        %v2714 = vpop.trf.xlu0
        %v2715 = vpop.trf.xlu0
        %2716 = vxpose.xlu0.b32.start [1/16] %v2457, 128
        %2717 = vxpose.xlu0.b32.cont [2/16] 0.0, 128
        %2718 = vxpose.xlu0.b32.cont [3/16] 0.0, 128
        %2719 = vxpose.xlu0.b32.cont [4/16] 0.0, 128
        %2720 = vxpose.xlu0.b32.cont [5/16] 0.0, 128
        %2721 = vxpose.xlu0.b32.cont [6/16] 0.0, 128
        %2722 = vxpose.xlu0.b32.cont [7/16] 0.0, 128
        %2723 = vxpose.xlu0.b32.cont [8/16] 0.0, 128
        %2724 = vxpose.xlu0.b32.cont [9/16] 0.0, 128
        %2725 = vxpose.xlu0.b32.cont [10/16] 0.0, 128
        %2726 = vxpose.xlu0.b32.cont [11/16] 0.0, 128
        %2727 = vxpose.xlu0.b32.cont [12/16] 0.0, 128
        %2728 = vxpose.xlu0.b32.cont [13/16] 0.0, 128
        %2729 = vxpose.xlu0.b32.cont [14/16] 0.0, 128
        %2730 = vxpose.xlu0.b32.cont [15/16] 0.0, 128
        %2731 = vxpose.xlu0.b32.end [16/16] 0.0, 128
        %v2732 = vpop.trf.xlu0
        %v2733 = vpop.trf.xlu0
        %v2734 = vpop.trf.xlu0
        %v2735 = vpop.trf.xlu0
        %v2736 = vpop.trf.xlu0
        %v2737 = vpop.trf.xlu0
        %v2738 = vpop.trf.xlu0
        %v2739 = vpop.trf.xlu0
        %v2740 = vpop.trf.xlu0
        %v2741 = vpop.trf.xlu0
        %v2742 = vpop.trf.xlu0
        %v2743 = vpop.trf.xlu0
        %v2744 = vpop.trf.xlu0
        %v2745 = vpop.trf.xlu0
        %v2746 = vpop.trf.xlu0
        %v2747 = vpop.trf.xlu0
        %2748 = vxpose.xlu0.b32.start [1/16] %v2519, 128
        %2749 = vxpose.xlu0.b32.cont [2/16] 0.0, 128
        %2750 = vxpose.xlu0.b32.cont [3/16] 0.0, 128
        %2751 = vxpose.xlu0.b32.cont [4/16] 0.0, 128
        %2752 = vxpose.xlu0.b32.cont [5/16] 0.0, 128
        %2753 = vxpose.xlu0.b32.cont [6/16] 0.0, 128
        %2754 = vxpose.xlu0.b32.cont [7/16] 0.0, 128
        %2755 = vxpose.xlu0.b32.cont [8/16] 0.0, 128
        %2756 = vxpose.xlu0.b32.cont [9/16] 0.0, 128
        %2757 = vxpose.xlu0.b32.cont [10/16] 0.0, 128
        %2758 = vxpose.xlu0.b32.cont [11/16] 0.0, 128
        %2759 = vxpose.xlu0.b32.cont [12/16] 0.0, 128
        %2760 = vxpose.xlu0.b32.cont [13/16] 0.0, 128
        %2761 = vxpose.xlu0.b32.cont [14/16] 0.0, 128
        %2762 = vxpose.xlu0.b32.cont [15/16] 0.0, 128
        %2763 = vxpose.xlu0.b32.end [16/16] 0.0, 128
        %v2764 = vpop.trf.xlu0
        %v2765 = vpop.trf.xlu0
        %v2766 = vpop.trf.xlu0
        %v2767 = vpop.trf.xlu0
        %v2768 = vpop.trf.xlu0
        %v2769 = vpop.trf.xlu0
        %v2770 = vpop.trf.xlu0
        %v2771 = vpop.trf.xlu0
        %v2772 = vpop.trf.xlu0
        %v2773 = vpop.trf.xlu0
        %v2774 = vpop.trf.xlu0
        %v2775 = vpop.trf.xlu0
        %v2776 = vpop.trf.xlu0
        %v2777 = vpop.trf.xlu0
        %v2778 = vpop.trf.xlu0
        %v2779 = vpop.trf.xlu0
        %v2780 = vcombine.low %v2540, %v2604
        %v2781 = vcombine.high %v2540, %v2604
        %v2783 = vunpack.c.l.s4 1983009808
        %v2784 = vunpack.c.0.s8 %v2783
        %v2785 = vlaneseq
        %v2786 = vshrl.u32 %v2785, 7
        %v2787 = vsub.s32 %v2784, %v2786
        %v2788 = vrot.slane %v2780, %v2787
        %v2790 = vunpack.c.l.s4 1983009808
        %v2791 = vunpack.c.0.s8 %v2790
        %v2792 = vlaneseq
        %v2793 = vshrl.u32 %v2792, 7
        %v2794 = vsub.s32 %v2791, %v2793
        %v2795 = vrot.slane %v2781, %v2794
        %v2796 = vcombine.low %v2572, %v2636
        %v2797 = vcombine.high %v2572, %v2636
        %v2799 = vunpack.c.l.s4 1983009808
        %v2800 = vunpack.c.0.s8 %v2799
        %v2801 = vlaneseq
        %v2802 = vshrl.u32 %v2801, 7
        %v2803 = vsub.s32 %v2800, %v2802
        %v2804 = vrot.slane %v2796, %v2803
        %v2806 = vunpack.c.l.s4 1983009808
        %v2807 = vunpack.c.0.s8 %v2806
        %v2808 = vlaneseq
        %v2809 = vshrl.u32 %v2808, 7
        %v2810 = vsub.s32 %v2807, %v2809
        %v2811 = vrot.slane %v2797, %v2810
        %v2812 = vcombine.low %v2668, %v2732
        %v2813 = vcombine.high %v2668, %v2732
        %v2815 = vunpack.c.l.s4 1983009808
        %v2816 = vunpack.c.0.s8 %v2815
        %v2817 = vlaneseq
        %v2818 = vshrl.u32 %v2817, 7
        %v2819 = vsub.s32 %v2816, %v2818
        %v2820 = vrot.slane %v2812, %v2819
        %v2822 = vunpack.c.l.s4 1983009808
        %v2823 = vunpack.c.0.s8 %v2822
        %v2824 = vlaneseq
        %v2825 = vshrl.u32 %v2824, 7
        %v2826 = vsub.s32 %v2823, %v2825
        %v2827 = vrot.slane %v2813, %v2826
        %v2828 = vcombine.low %v2700, %v2764
        %v2829 = vcombine.high %v2700, %v2764
        %v2831 = vunpack.c.l.s4 1983009808
        %v2832 = vunpack.c.0.s8 %v2831
        %v2833 = vlaneseq
        %v2834 = vshrl.u32 %v2833, 7
        %v2835 = vsub.s32 %v2832, %v2834
        %v2836 = vrot.slane %v2828, %v2835
        %v2838 = vunpack.c.l.s4 1983009808
        %v2839 = vunpack.c.0.s8 %v2838
        %v2840 = vlaneseq
        %v2841 = vshrl.u32 %v2840, 7
        %v2842 = vsub.s32 %v2839, %v2841
        %v2843 = vrot.slane %v2829, %v2842
        %v2844 = vcombine.low %v2788, %v2804
        %v2845 = vcombine.high %v2788, %v2804
        %v2847 = vunpack.c.l.s4 1934713408
        %v2848 = vunpack.c.0.s8 %v2847
        %v2849 = vlaneseq
        %v2850 = vshrl.u32 %v2849, 7
        %v2851 = vsub.s32 %v2848, %v2850
        %v2852 = vrot.slane %v2844, %v2851
        %v2854 = vunpack.c.l.s4 1934713408
        %v2855 = vunpack.c.0.s8 %v2854
        %v2856 = vlaneseq
        %v2857 = vshrl.u32 %v2856, 7
        %v2858 = vsub.s32 %v2855, %v2857
        %v2859 = vrot.slane %v2845, %v2858
        %v2860 = vcombine.low %v2795, %v2811
        %v2861 = vcombine.high %v2795, %v2811
        %v2863 = vunpack.c.l.s4 1934713408
        %v2864 = vunpack.c.0.s8 %v2863
        %v2865 = vlaneseq
        %v2866 = vshrl.u32 %v2865, 7
        %v2867 = vsub.s32 %v2864, %v2866
        %v2868 = vrot.slane %v2860, %v2867
        %v2870 = vunpack.c.l.s4 1934713408
        %v2871 = vunpack.c.0.s8 %v2870
        %v2872 = vlaneseq
        %v2873 = vshrl.u32 %v2872, 7
        %v2874 = vsub.s32 %v2871, %v2873
        %v2875 = vrot.slane %v2861, %v2874
        %v2876 = vcombine.low %v2820, %v2836
        %v2877 = vcombine.high %v2820, %v2836
        %v2879 = vunpack.c.l.s4 1934713408
        %v2880 = vunpack.c.0.s8 %v2879
        %v2881 = vlaneseq
        %v2882 = vshrl.u32 %v2881, 7
        %v2883 = vsub.s32 %v2880, %v2882
        %v2884 = vrot.slane %v2876, %v2883
        %v2886 = vunpack.c.l.s4 1934713408
        %v2887 = vunpack.c.0.s8 %v2886
        %v2888 = vlaneseq
        %v2889 = vshrl.u32 %v2888, 7
        %v2890 = vsub.s32 %v2887, %v2889
        %v2891 = vrot.slane %v2877, %v2890
        %v2892 = vcombine.low %v2827, %v2843
        %v2893 = vcombine.high %v2827, %v2843
        %v2895 = vunpack.c.l.s4 1934713408
        %v2896 = vunpack.c.0.s8 %v2895
        %v2897 = vlaneseq
        %v2898 = vshrl.u32 %v2897, 7
        %v2899 = vsub.s32 %v2896, %v2898
        %v2900 = vrot.slane %v2892, %v2899
        %v2902 = vunpack.c.l.s4 1934713408
        %v2903 = vunpack.c.0.s8 %v2902
        %v2904 = vlaneseq
        %v2905 = vshrl.u32 %v2904, 7
        %v2906 = vsub.s32 %v2903, %v2905
        %v2907 = vrot.slane %v2893, %v2906
        %v2908 = vcombine.low %v2852, %v2884
        %v2909 = vcombine.high %v2852, %v2884
        %v2910 = vcombine.low %v2859, %v2891
        %v2911 = vcombine.high %v2859, %v2891
        %v2912 = vcombine.low %v2868, %v2900
        %v2913 = vcombine.high %v2868, %v2900
        %v2914 = vcombine.low %v2875, %v2907
        %v2915 = vcombine.high %v2875, %v2907
        %v2916 = vcombine.low %v2908, %v2910
        %v2917 = vcombine.high %v2908, %v2910
        %v2919 = vunpack.c.l.s4 1983009808
        %v2920 = vunpack.c.0.s8 %v2919
        %v2921 = vlaneseq
        %v2922 = vshrl.u32 %v2921, 7
        %v2923 = vsub.s32 %v2920, %v2922
        %v2924 = vrot.slane %v2916, %v2923
        %v2926 = vunpack.c.l.s4 1983009808
        %v2927 = vunpack.c.0.s8 %v2926
        %v2928 = vlaneseq
        %v2929 = vshrl.u32 %v2928, 7
        %v2930 = vsub.s32 %v2927, %v2929
        %v2931 = vrot.slane %v2917, %v2930
        %v2932 = vcombine.low %v2909, %v2911
        %v2933 = vcombine.high %v2909, %v2911
        %v2935 = vunpack.c.l.s4 1983009808
        %v2936 = vunpack.c.0.s8 %v2935
        %v2937 = vlaneseq
        %v2938 = vshrl.u32 %v2937, 7
        %v2939 = vsub.s32 %v2936, %v2938
        %v2940 = vrot.slane %v2932, %v2939
        %v2942 = vunpack.c.l.s4 1983009808
        %v2943 = vunpack.c.0.s8 %v2942
        %v2944 = vlaneseq
        %v2945 = vshrl.u32 %v2944, 7
        %v2946 = vsub.s32 %v2943, %v2945
        %v2947 = vrot.slane %v2933, %v2946
        %v2948 = vcombine.low %v2912, %v2914
        %v2949 = vcombine.high %v2912, %v2914
        %v2951 = vunpack.c.l.s4 1983009808
        %v2952 = vunpack.c.0.s8 %v2951
        %v2953 = vlaneseq
        %v2954 = vshrl.u32 %v2953, 7
        %v2955 = vsub.s32 %v2952, %v2954
        %v2956 = vrot.slane %v2948, %v2955
        %v2958 = vunpack.c.l.s4 1983009808
        %v2959 = vunpack.c.0.s8 %v2958
        %v2960 = vlaneseq
        %v2961 = vshrl.u32 %v2960, 7
        %v2962 = vsub.s32 %v2959, %v2961
        %v2963 = vrot.slane %v2949, %v2962
        %v2964 = vcombine.low %v2913, %v2915
        %v2965 = vcombine.high %v2913, %v2915
        %v2967 = vunpack.c.l.s4 1983009808
        %v2968 = vunpack.c.0.s8 %v2967
        %v2969 = vlaneseq
        %v2970 = vshrl.u32 %v2969, 7
        %v2971 = vsub.s32 %v2968, %v2970
        %v2972 = vrot.slane %v2964, %v2971
        %v2974 = vunpack.c.l.s4 1983009808
        %v2975 = vunpack.c.0.s8 %v2974
        %v2976 = vlaneseq
        %v2977 = vshrl.u32 %v2976, 7
        %v2978 = vsub.s32 %v2975, %v2977
        %v2979 = vrot.slane %v2965, %v2978
        %v2980 = vcombine.low %v2924, %v2940
        %v2981 = vcombine.high %v2924, %v2940
        %v2983 = vunpack.c.l.s4 1934713408
        %v2984 = vunpack.c.0.s8 %v2983
        %v2985 = vlaneseq
        %v2986 = vshrl.u32 %v2985, 7
        %v2987 = vsub.s32 %v2984, %v2986
        %v2988 = vrot.slane %v2980, %v2987
        %v2990 = vunpack.c.l.s4 1934713408
        %v2991 = vunpack.c.0.s8 %v2990
        %v2992 = vlaneseq
        %v2993 = vshrl.u32 %v2992, 7
        %v2994 = vsub.s32 %v2991, %v2993
        %v2995 = vrot.slane %v2981, %v2994
        %v2996 = vcombine.low %v2931, %v2947
        %v2997 = vcombine.high %v2931, %v2947
        %v2999 = vunpack.c.l.s4 1934713408
        %v3000 = vunpack.c.0.s8 %v2999
        %v3001 = vlaneseq
        %v3002 = vshrl.u32 %v3001, 7
        %v3003 = vsub.s32 %v3000, %v3002
        %v3004 = vrot.slane %v2996, %v3003
        %v3006 = vunpack.c.l.s4 1934713408
        %v3007 = vunpack.c.0.s8 %v3006
        %v3008 = vlaneseq
        %v3009 = vshrl.u32 %v3008, 7
        %v3010 = vsub.s32 %v3007, %v3009
        %v3011 = vrot.slane %v2997, %v3010
        %v3012 = vcombine.low %v2956, %v2972
        %v3013 = vcombine.high %v2956, %v2972
        %v3015 = vunpack.c.l.s4 1934713408
        %v3016 = vunpack.c.0.s8 %v3015
        %v3017 = vlaneseq
        %v3018 = vshrl.u32 %v3017, 7
        %v3019 = vsub.s32 %v3016, %v3018
        %v3020 = vrot.slane %v3012, %v3019
        %v3022 = vunpack.c.l.s4 1934713408
        %v3023 = vunpack.c.0.s8 %v3022
        %v3024 = vlaneseq
        %v3025 = vshrl.u32 %v3024, 7
        %v3026 = vsub.s32 %v3023, %v3025
        %v3027 = vrot.slane %v3013, %v3026
        %v3028 = vcombine.low %v2963, %v2979
        %v3029 = vcombine.high %v2963, %v2979
        %v3031 = vunpack.c.l.s4 1934713408
        %v3032 = vunpack.c.0.s8 %v3031
        %v3033 = vlaneseq
        %v3034 = vshrl.u32 %v3033, 7
        %v3035 = vsub.s32 %v3032, %v3034
        %v3036 = vrot.slane %v3028, %v3035
        %v3038 = vunpack.c.l.s4 1934713408
        %v3039 = vunpack.c.0.s8 %v3038
        %v3040 = vlaneseq
        %v3041 = vshrl.u32 %v3040, 7
        %v3042 = vsub.s32 %v3039, %v3041
        %v3043 = vrot.slane %v3029, %v3042
        %v3044 = vcombine.low %v2988, %v3020
        %v3045 = vcombine.high %v2988, %v3020
        %v3046 = vcombine.low %v2995, %v3027
        %v3047 = vcombine.high %v2995, %v3027
        %v3048 = vcombine.low %v3004, %v3036
        %v3049 = vcombine.high %v3004, %v3036
        %v3050 = vcombine.low %v3011, %v3043
        %v3051 = vcombine.high %v3011, %v3043
        %3053 = vrot.lane.b32.xlu0 %v3045, 4
        %v3054 = vpop.permute.xlu0 %3053
        %3057 = vrot.lane.b32.xlu0 %v3046, 8
        %v3058 = vpop.permute.xlu0 %3057
        %3061 = vrot.lane.b32.xlu0 %v3047, 12
        %v3062 = vpop.permute.xlu0 %3061
        %3065 = vrot.lane.b32.xlu0 %v3048, 16
        %v3066 = vpop.permute.xlu0 %3065
        %3069 = vrot.lane.b32.xlu0 %v3049, 20
        %v3070 = vpop.permute.xlu0 %3069
        %3073 = vrot.lane.b32.xlu0 %v3050, 24
        %v3074 = vpop.permute.xlu0 %3073
        %3077 = vrot.lane.b32.xlu0 %v3051, 28
        %v3078 = vpop.permute.xlu0 %3077
        %v3080 = vsel %vm1545, %v3044, %v3054
        %v3081 = vsel %vm1914, %v3080, %v3058
        %vm3082 = vcmask 97280
        %v3083 = vsel %vm3082, %v3081, %v3062
        %vm3084 = vcmask 130048
        %v3085 = vsel %vm3084, %v3083, %v3066
        %vm3086 = vcmask 162816
        %v3087 = vsel %vm3086, %v3085, %v3070
        %vm3088 = vcmask 195584
        %v3089 = vsel %vm3088, %v3087, %v3074
        %vm3090 = vcmask 228352
        %v3091 = vsel %vm3090, %v3089, %v3078
        %v3092 = vpack.c.bf16 %v3091, %v3091
        %v3093 = vld [vmem:[%s5] sm:$0xf]
        %v3094 = vld [vmem:[%s5 + $0x4] sm:$0xf]
        %v3095 = vld [vmem:[%s5 + $0x8] sm:$0xf]
        %v3096 = vld [vmem:[%s5 + $0xc] sm:$0xf]
        %v3097 = vlaneseq
        %v3098 = vshrl.u32 %v3097, 7
        %v3099 = vsub.s32 3, %v3098
        %v3100 = vrot.slane %v444, %v3099
        %v3105 = vunpack.c.l.b16 %v3093
        %v3106 = vunpack.c.l.b16 %v3094
        %v3107 = vunpack.c.l.b16 %v3095
        %v3108 = vunpack.c.l.b16 %v3096
        %v3109 = vpack.c.b16 %v3106, %v3105
        %v3110 = vpack.c.b16 %v3108, %v3107
        %v3114 = vsel %vm1184, %v3092, 0
        %3116 = vmatprep.subr.bf16.mxu0 0
        %3117 = vmatpush1.bf16.msra.mxu0 %v3109
        %3118 = vmatprep.subr.bf16.mxu0 0
        %3119 = vmatpush1.bf16.msra.mxu0 %v3110
        %3120 = vmatprep.subr.bf16.mxu0 0
        %3121 = vmatpush1.bf16.msra.mxu0 0
        %3122 = vmatprep.subr.bf16.mxu0 0
        %3123 = vmatpush1.bf16.msra.mxu0 0
        %3124 = vmatprep.subr.bf16.mxu0 0
        %3125 = vmatpush1.bf16.msra.mxu0 0
        %3126 = vmatprep.subr.bf16.mxu0 0
        %3127 = vmatpush1.bf16.msra.mxu0 0
        %3128 = vmatprep.subr.bf16.mxu0 0
        %3129 = vmatpush1.bf16.msra.mxu0 0
        %3130 = vmatprep.subr.bf16.mxu0 0
        %3131 = vmatpush1.bf16.msra.mxu0 0
        %3132 = vmatprep.subr.bf16.mxu0 0
        %3133 = vmatpush1.bf16.msra.mxu0 0
        %3134 = vmatprep.subr.bf16.mxu0 0
        %3135 = vmatpush1.bf16.msra.mxu0 0
        %3136 = vmatprep.subr.bf16.mxu0 0
        %3137 = vmatpush1.bf16.msra.mxu0 0
        %3138 = vmatprep.subr.bf16.mxu0 0
        %3139 = vmatpush1.bf16.msra.mxu0 0
        %3140 = vmatprep.subr.bf16.mxu0 0
        %3141 = vmatpush1.bf16.msra.mxu0 0
        %3142 = vmatprep.subr.bf16.mxu0 0
        %3143 = vmatpush1.bf16.msra.mxu0 0
        %3144 = vmatprep.subr.bf16.mxu0 0
        %3145 = vmatpush1.bf16.msra.mxu0 0
        %3146 = vmatprep.subr.bf16.mxu0 0
        %3147 = vmatpush1.bf16.msra.mxu0 0
        %3148 = vmatprep.mubr.bf16.mxu0 0
        %3149 = vmatmul.mubr.bf16.gmra.mrb[0].mxu0 %v3114
        %v3150 = vpop.f32.mrb[0].mxu0
        %v3151 = vadd.f32 %v3100, %v3150
        %v3152 = vpop.f32.mrb[0].mxu0
        %v3153 = vpop.f32.mrb[0].mxu0
        %v3154 = vpop.f32.mrb[0].mxu0
        %3155 = vdwg.mxu0
        %v3156 = vadd.f32 %v1162, %v3151
        %v3157 = vsel %vm1184, %v3156, 0.0
        %3158 = vadd.xlane.f32.xlu0 %v3157
        %v3159 = vpop.xlane.xlu0 %3158
        %v3160 = vrcp.pop 32.0
        %v3161 = vmul.f32 %v3159, %v3160
        %v3162 = vsub.f32 %v3156, %v3161
        %v3163 = vmul.f32 %v3162, %v3162
        %v3164 = vsel %vm1184, %v3163, 0.0
        %3165 = vadd.xlane.f32.xlu0 %v3164
        %v3166 = vpop.xlane.xlu0 %3165
        %v3167 = vmul.f32 %v3166, %v3160
        %v3168 = vadd.f32 %v3167, 1e-05
        %v3169 = vrsqrt.pop %v3168
        %v3170 = vmul.f32 %v3162, %v3169
        %v3171 = vlaneseq
        %v3172 = vshrl.u32 %v3171, 7
        %v3173 = vsub.s32 4, %v3172
        %v3174 = vrot.slane %v444, %v3173
        %v3175 = vmul.f32 %v3170, %v3174
        %v3176 = vlaneseq
        %v3177 = vshrl.u32 %v3176, 7
        %v3178 = vsub.s32 5, %v3177
        %v3179 = vrot.slane %v444, %v3178
        %v3180 = vadd.f32 %v3175, %v3179
        %3181 = vst.msk [vmem:[%s432] sm:$0xff] %vm1184, %v3180
        %s3182 = sand.u32 %s219, 1
        %s3183 = scalar_lea.sflag [#allocation6], %s3182
        %s3184 = sand.u32 %s219, 1
        %s3185 = smul.addr %s3184, 8
        %s3186 = scalar_lea.vmem [#allocation13], %s3185
        %s3187 = sand.u32 %s247, 1
        %s3188 = scalar_lea.sflag [#allocation15], %s3187
        %s3189 = sand.u32 %s247, 1
        %s3190 = smul.addr %s3189, 32
        %s3191 = scalar_lea.vmem [#allocation14], %s3190
        // Predicated region
        $region73: #{tpu_custom_call.1} parent=47 // pred_check
          %p3192 = pneg %p229
        $region74: #{tpu_custom_call.1} parent=47 // pred_check_branch
          %3194 = sbr.rel (%p3192) target = $region76
        $region75: #{tpu_custom_call.1} parent=47 // pred_region
          %s3196 = ssub.s32 128, 128
          %3197 = vsyncadd %s3183, %s3196
          %s3198 = sadd.s32 %s38, %s37
          %s3199 = smul.addr %s3198, 128
          %s3200 = scalar_lea.hbm %s7, %s3199
          %s3202 = sshll.u32 %s3186, 4
          %s3203 = int_to_ptr.vmem [resolvable:$true] %s3202
          %3205 = dma.vmem_to_hbm [thread:$0]  %s3203, 128, %s3200, %s3183
        $region76: #{tpu_custom_call.1} parent=47 // pred_fallthru
          _
        // Predicated region
        $region77: #{tpu_custom_call.1} parent=47 // pred_check
          %p3206 = pneg %p257
        $region78: #{tpu_custom_call.1} parent=47 // pred_check_branch
          %3208 = sbr.rel (%p3206) target = $region80
        $region79: #{tpu_custom_call.1} parent=47 // pred_region
          %s3210 = ssub.s32 512, 512
          %3211 = vsyncadd %s3188, %s3210
          %s3212 = smul.addr %s37, 8
          %s3213 = sadd.s32 %s38, %s3212
          %s3214 = smul.addr %s3213, 64
          %s3215 = scalar_lea.hbm %s8, %s3214
          %s3216 = sshll.u32 %s3191, 4
          %s3217 = int_to_ptr.vmem [resolvable:$true] %s3216
          %3222 = dma.vmem_to_hbm [thread:$0]  %s3217, 512, %s3215, %s3188, 64, 64, 4
        $region80: #{tpu_custom_call.1} parent=47 // pred_fallthru
          _
      $region48: #{tpu_custom_call.1} parent=5 // pred_fallthru
        _
      %p3223 = scmp.le.s32.totalorder 2, %s28
      // Predicated region
      $region81: #{tpu_custom_call.1} parent=5 // pred_check
        %p3224 = pneg %p3223
      $region82: #{tpu_custom_call.1} parent=5 // pred_check_branch
        %3226 = sbr.rel (%p3224) target = $region84
      $region83: #{tpu_custom_call.1} parent=5 // pred_region
        %s3227 = ssub.s32 %s28, 2
        // Predicated region
        $region85: #{tpu_custom_call.1} parent=83 // pred_check
          %p3228 = pneg %p235
        $region86: #{tpu_custom_call.1} parent=83 // pred_check_branch
          %3230 = sbr.rel (%p3228) target = $region88
        $region87: #{tpu_custom_call.1} parent=83 // pred_region
          %s3231 = sand.u32 %s220, 1
          %s3232 = scalar_lea.sflag [#allocation6], %s3231
          %s3233 = sand.u32 %s220, 1
          %s3234 = smul.addr %s3233, 8
          %s3235 = scalar_lea.vmem [#allocation13], %s3234
          %3236 = dma.done %s3232, 128
        $region88: #{tpu_custom_call.1} parent=83 // pred_fallthru
          _
        // Predicated region
        $region89: #{tpu_custom_call.1} parent=83 // pred_check
          %p3237 = pneg %p263
        $region90: #{tpu_custom_call.1} parent=83 // pred_check_branch
          %3239 = sbr.rel (%p3237) target = $region92
        $region91: #{tpu_custom_call.1} parent=83 // pred_region
          %s3240 = sand.u32 %s248, 1
          %s3241 = scalar_lea.sflag [#allocation15], %s3240
          %s3242 = sand.u32 %s248, 1
          %s3243 = smul.addr %s3242, 32
          %s3244 = scalar_lea.vmem [#allocation14], %s3243
          %3245 = dma.done %s3241, 512
        $region92: #{tpu_custom_call.1} parent=83 // pred_fallthru
          _
      $region84: #{tpu_custom_call.1} parent=5 // pred_fallthru
        _
    $region6: #{tpu_custom_call.1} parent=1 // loop_footer
      %s32 = sadd.s32 1, %s28
    $region7: #{tpu_custom_call.1} parent=1 // loop_footer_branch
      %27 = sbr.rel target = $region3
    $region8: #{tpu_custom_call.1} parent=1 // loop_exit
      _
    %3246 = vsyncpa [#allocation5], 1
    %s3247 = scalar_lea.sflag [#allocation5], 1
    %3248 = vsyncpa %s3247, 1
    %3249 = vsyncpa [#allocation8], 1
    %s3250 = scalar_lea.sflag [#allocation8], 1
    %3251 = vsyncpa %s3250, 1
    %3252 = vsyncpa [#allocation11], 1
    %3253 = vsyncpa [#allocation6], 1
    %s3254 = scalar_lea.sflag [#allocation6], 1
    %3255 = vsyncpa %s3254, 1
    %3256 = vsyncpa [#allocation15], 1
    %s3257 = scalar_lea.sflag [#allocation15], 1
    %3258 = vsyncpa %s3257, 1

</llo_original>
